<compile_context>
chip_gen: v7x
topology: tpu7x:2x2x1
jax: 0.10.0
libtpu: 0.0.40
codegen_flags: <defaults>
</compile_context>

<pallas_src>
import numpy as np
import jax
import jax.numpy as jnp
from jax.experimental import pallas as pl
from jax.experimental.pallas import tpu as pltpu

CLAMP_MIN = -123.68
CLAMP_MAX = 151.061


def _round_up(x, m):
    return (x + m - 1) // m * m


def _make_kernel(layer_meta, lane_tile):
    """layer_meta: static tuple of (Hi, Wi, HWi_pad) per hierarchy level."""

    def kernel(tex_ref, g_ref, out_ref):
        # tex_ref: (C_pad, K_total)   f32  -- clamped, ragged-flattened layers (resident)
        # g_ref  : (2, lane_tile)     f32  -- row 0 = gx, row 1 = gy for this lane tile
        # out_ref: (C_pad, lane_tile) f32
        gx = g_ref[0:1, :]                           # (1, T), in [-1, 1] (± overshoot)
        gy = g_ref[1:2, :]                           # (1, T)

        blocks = []
        for (Hi, Wi, HWi_pad) in layer_meta:         # static loop over levels
            # align_corners=True unnormalization + border padding (clip coords).
            # (x + 1) * 0.5 * (W-1)  folded into one fused multiply-add per axis.
            sx = 0.5 * (Wi - 1)
            sy = 0.5 * (Hi - 1)
            xc = jnp.clip(gx * sx + sx, 0.0, float(Wi - 1))
            yc = jnp.clip(gy * sy + sy, 0.0, float(Hi - 1))
            x0 = jnp.floor(xc)
            y0 = jnp.floor(yc)
            wx1 = xc - x0
            wy1 = yc - y0
            wx0 = 1.0 - wx1
            wy0 = 1.0 - wy1
            x0i = x0.astype(jnp.int32)
            y0i = y0.astype(jnp.int32)
            x1i = jnp.minimum(x0i + 1, Wi - 1)       # border padding on the +1 taps
            y1i = jnp.minimum(y0i + 1, Hi - 1)

            # Flat texel indices of the 4 bilinear taps, (1, T) int math (cheap).
            i00 = y0i * Wi + x0i
            i01 = y0i * Wi + x1i
            i10 = y1i * Wi + x0i
            i11 = y1i * Wi + x1i

            # One-hot bilinear weight block at the layer's own size.  Padding rows
            # in [Hi*Wi, HWi_pad) never match any tap index and stay exactly zero.
            # Degenerate taps (x0==x1 or y0==y1 at the border) land on the same
            # row and their weights simply add, which is the correct result.
            q = jax.lax.broadcasted_iota(jnp.int32, (HWi_pad, lane_tile), 0)
            G = (jnp.where(q == i00, wy0 * wx0, 0.0)
                 + jnp.where(q == i01, wy0 * wx1, 0.0)
                 + jnp.where(q == i10, wy1 * wx0, 0.0)
                 + jnp.where(q == i11, wy1 * wx1, 0.0))
            blocks.append(G)

        # Fuse all levels into a single MXU contraction along K (cross-layer sum
        # happens inside the accumulator).
        G_all = jnp.concatenate(blocks, axis=0)      # (K_total, T)
        out_ref[...] = jnp.dot(tex_ref[...], G_all,
                               preferred_element_type=jnp.float32)

    return kernel


def hierarchical_neural_texture_forward(textures, grid, *, lane_tile=None):
    """textures: list of (C, Hi, Wi) f32 (Hi = H // 2**i, Wi = W // 2**i)
       grid    : (N, Hout, Wout, 2) f32, last dim (x, y) in [-1, 1]
       returns : (N, C, Hout, Wout) f32  (NCHW, like the PyTorch module)"""
    C = int(textures[0].shape[0])
    N, Hout, Wout, _ = grid.shape
    P = Hout * Wout
    NP = N * P

    layer_meta = tuple(
        (int(t.shape[1]), int(t.shape[2]),
         _round_up(int(t.shape[1]) * int(t.shape[2]), 8))
        for t in textures)
    K_total = sum(m[2] for m in layer_meta)
    C_pad = _round_up(C, 8)

    if lane_tile is None:
        # Fat lane slabs per grid step (amortize per-step overhead), multiple of
        # 128, capped so the in-kernel one-hot slab (K_total x T f32) stays within
        # a comfortable VMEM budget.
        budget_lanes = max(128, (8 * 1024 * 1024) // (4 * max(K_total, 1)) // 128 * 128)
        lane_tile = min(2048, budget_lanes, _round_up(NP, 128))
    NP_pad = _round_up(NP, lane_tile)

    # Pack textures: clamp (== normalize) ONCE here, ragged-flatten each level,
    # pad its texel count to a multiple of 8, and concatenate along K.
    tex_blocks = []
    for t, (Hi, Wi, HWi_pad) in zip(textures, layer_meta):
        tf = jnp.clip(t.astype(jnp.float32), CLAMP_MIN, CLAMP_MAX).reshape(C, Hi * Wi)
        tf = jnp.pad(tf, ((0, C_pad - C), (0, HWi_pad - Hi * Wi)))
        tex_blocks.append(tf)
    tex_packed = jnp.concatenate(tex_blocks, axis=1)          # (C_pad, K_total)

    # Sampling grid packed lane-dense: (2, NP_pad), row 0 = gx, row 1 = gy.
    g = grid.reshape(NP, 2).astype(jnp.float32).T             # (2, NP)
    g = jnp.pad(g, ((0, 0), (0, NP_pad - NP)))

    kernel = _make_kernel(layer_meta, lane_tile)

    out = pl.pallas_call(
        kernel,
        out_shape=jax.ShapeDtypeStruct((C_pad, NP_pad), jnp.float32),
        grid_spec=pltpu.PrefetchScalarGridSpec(
            num_scalar_prefetch=0,
            grid=(NP_pad // lane_tile,),
            in_specs=[
                pl.BlockSpec((C_pad, K_total), lambda t: (0, 0)),  # textures resident
                pl.BlockSpec((2, lane_tile), lambda t: (0, t)),    # lane tile of coords
            ],
            out_specs=pl.BlockSpec((C_pad, lane_tile), lambda t: (0, t)),
        ),
        compiler_params=pltpu.CompilerParams(
            dimension_semantics=("parallel",)),
    )(tex_packed, g)

    # (C_pad, NP_pad) -> (N, C, Hout, Wout)
    out = out[:C, :NP].reshape(C, N, Hout, Wout).transpose(1, 0, 2, 3)
    return out


def _reference_forward(textures, grid):
    """Plain-JAX reference of the same semantics (sanity check)."""
    N, Hout, Wout, _ = grid.shape
    C = textures[0].shape[0]
    gx = grid[..., 0].reshape(N, -1)
    gy = grid[..., 1].reshape(N, -1)
    out = jnp.zeros((N, C, Hout * Wout), jnp.float32)
    for t in textures:
        _, Hi, Wi = t.shape
        t = jnp.clip(t, CLAMP_MIN, CLAMP_MAX)
        xc = jnp.clip((gx + 1.0) * 0.5 * (Wi - 1), 0.0, Wi - 1.0)
        yc = jnp.clip((gy + 1.0) * 0.5 * (Hi - 1), 0.0, Hi - 1.0)
        x0 = jnp.floor(xc)
        y0 = jnp.floor(yc)
        wx1 = xc - x0
        wy1 = yc - y0
        x0i = x0.astype(jnp.int32)
        y0i = y0.astype(jnp.int32)
        x1i = jnp.minimum(x0i + 1, Wi - 1)
        y1i = jnp.minimum(y0i + 1, Hi - 1)

        def gather(yi, xi):
            return t[:, yi, xi].transpose(1, 0, 2)  # (N, C, P)

        out = out + (gather(y0i, x0i) * ((1 - wy1) * (1 - wx1))[:, None, :]
                     + gather(y0i, x1i) * ((1 - wy1) * wx1)[:, None, :]
                     + gather(y1i, x0i) * (wy1 * (1 - wx1))[:, None, :]
                     + gather(y1i, x1i) * (wy1 * wx1)[:, None, :])
    return out.reshape(N, C, Hout, Wout)


if __name__ == "__main__":
    # Module config (small): W = H = 16, C = 8, num_layers = 4, random_init=True
    W, H, C, num_layers = 16, 16, 8, 4
    N, Hout, Wout = 2, 16, 16

    key = jax.random.PRNGKey(0)
    tex_keys = jax.random.split(key, num_layers + 1)

    # Deterministic parameter init (torch.rand equivalent, uniform [0, 1)).
    textures = [
        jax.random.uniform(tex_keys[i], (C, H // 2 ** i, W // 2 ** i), jnp.float32)
        for i in range(num_layers)
    ]
    # Sampling grid x (N, Hout, Wout, 2); go slightly outside [-1, 1] to exercise border mode.
    x = jax.random.uniform(tex_keys[-1], (N, Hout, Wout, 2), jnp.float32,
                           minval=-1.1, maxval=1.1)

    y = hierarchical_neural_texture_forward(textures, x)
    y = jax.block_until_ready(y)

    y_ref = jax.block_until_ready(_reference_forward(textures, x))
    assert y.shape == (N, C, Hout, Wout)
    assert np.allclose(np.asarray(y), np.asarray(y_ref), atol=1e-4, rtol=1e-4)

    print("KERNEL_OK")
</pallas_src>

<mosaic_0001>
module attributes {stable_mosaic.version = 11 : i64} {
  func.func @kernel(%arg0: i32, %arg1: memref<8x344xf32, #tpu.memory_space<vmem>>, %arg2: memref<2x512xf32, #tpu.memory_space<vmem>>, %arg3: memref<8x512xf32, #tpu.memory_space<vmem>>) attributes {dimension_semantics = [#tpu.dimension_semantics<parallel>], iteration_bounds = array<i64: 1>, scalar_prefetch = 0 : i64, scratch_operands = 0 : i64, tpu.core_type = #tpu.core_type<tc>, window_params = [{pipeline_mode = #tpu.pipeline_mode<synchronous>, transform_indices = @transform_0, window_bounds = array<i64: 8, 344>}, {transform_indices = @transform_1, window_bounds = array<i64: 2, 512>}, {transform_indices = @transform_2, window_bounds = array<i64: 8, 512>}]} {
    %c0 = arith.constant 0 : index
    %c0_0 = arith.constant 0 : index
    %0 = vector.load %arg2[%c0, %c0_0] : memref<2x512xf32, #tpu.memory_space<vmem>>, vector<1x512xf32>
    %c1 = arith.constant 1 : index
    %c0_1 = arith.constant 0 : index
    %1 = vector.load %arg2[%c1, %c0_1] : memref<2x512xf32, #tpu.memory_space<vmem>>, vector<1x512xf32>
    %cst = arith.constant 7.500000e+00 : f32
    %2 = vector.broadcast %cst : f32 to vector<1x512xf32>
    %3 = arith.mulf %0, %2 : vector<1x512xf32>
    %cst_2 = arith.constant 7.500000e+00 : f32
    %4 = vector.broadcast %cst_2 : f32 to vector<1x512xf32>
    %5 = arith.addf %3, %4 : vector<1x512xf32>
    %cst_3 = arith.constant 0.000000e+00 : f32
    %cst_4 = arith.constant 1.500000e+01 : f32
    %6 = vector.broadcast %cst_3 : f32 to vector<1x512xf32>
    %7 = arith.maximumf %6, %5 : vector<1x512xf32>
    %8 = vector.broadcast %cst_4 : f32 to vector<1x512xf32>
    %9 = arith.minimumf %8, %7 : vector<1x512xf32>
    %cst_5 = arith.constant 7.500000e+00 : f32
    %10 = vector.broadcast %cst_5 : f32 to vector<1x512xf32>
    %11 = arith.mulf %1, %10 : vector<1x512xf32>
    %cst_6 = arith.constant 7.500000e+00 : f32
    %12 = vector.broadcast %cst_6 : f32 to vector<1x512xf32>
    %13 = arith.addf %11, %12 : vector<1x512xf32>
    %cst_7 = arith.constant 0.000000e+00 : f32
    %cst_8 = arith.constant 1.500000e+01 : f32
    %14 = vector.broadcast %cst_7 : f32 to vector<1x512xf32>
    %15 = arith.maximumf %14, %13 : vector<1x512xf32>
    %16 = vector.broadcast %cst_8 : f32 to vector<1x512xf32>
    %17 = arith.minimumf %16, %15 : vector<1x512xf32>
    %18 = math.floor %9 : vector<1x512xf32>
    %19 = math.floor %17 : vector<1x512xf32>
    %20 = arith.subf %9, %18 : vector<1x512xf32>
    %21 = arith.subf %17, %19 : vector<1x512xf32>
    %cst_9 = arith.constant 1.000000e+00 : f32
    %22 = vector.broadcast %cst_9 : f32 to vector<1x512xf32>
    %23 = arith.subf %22, %20 : vector<1x512xf32>
    %cst_10 = arith.constant 1.000000e+00 : f32
    %24 = vector.broadcast %cst_10 : f32 to vector<1x512xf32>
    %25 = arith.subf %24, %21 : vector<1x512xf32>
    %26 = arith.fptosi %18 : vector<1x512xf32> to vector<1x512xi32>
    %27 = arith.fptosi %19 : vector<1x512xf32> to vector<1x512xi32>
    %c1_i32 = arith.constant 1 : i32
    %28 = vector.broadcast %c1_i32 : i32 to vector<1x512xi32>
    %29 = arith.addi %26, %28 : vector<1x512xi32>
    %c15_i32 = arith.constant 15 : i32
    %30 = vector.broadcast %c15_i32 : i32 to vector<1x512xi32>
    %31 = arith.minsi %29, %30 : vector<1x512xi32>
    %c1_i32_11 = arith.constant 1 : i32
    %32 = vector.broadcast %c1_i32_11 : i32 to vector<1x512xi32>
    %33 = arith.addi %27, %32 : vector<1x512xi32>
    %c15_i32_12 = arith.constant 15 : i32
    %34 = vector.broadcast %c15_i32_12 : i32 to vector<1x512xi32>
    %35 = arith.minsi %33, %34 : vector<1x512xi32>
    %c16_i32 = arith.constant 16 : i32
    %36 = vector.broadcast %c16_i32 : i32 to vector<1x512xi32>
    %37 = arith.muli %27, %36 : vector<1x512xi32>
    %38 = arith.addi %37, %26 : vector<1x512xi32>
    %c16_i32_13 = arith.constant 16 : i32
    %39 = vector.broadcast %c16_i32_13 : i32 to vector<1x512xi32>
    %40 = arith.muli %27, %39 : vector<1x512xi32>
    %41 = arith.addi %40, %31 : vector<1x512xi32>
    %c16_i32_14 = arith.constant 16 : i32
    %42 = vector.broadcast %c16_i32_14 : i32 to vector<1x512xi32>
    %43 = arith.muli %35, %42 : vector<1x512xi32>
    %44 = arith.addi %43, %26 : vector<1x512xi32>
    %c16_i32_15 = arith.constant 16 : i32
    %45 = vector.broadcast %c16_i32_15 : i32 to vector<1x512xi32>
    %46 = arith.muli %35, %45 : vector<1x512xi32>
    %47 = arith.addi %46, %31 : vector<1x512xi32>
    %48 = tpu.iota {dimensions = array<i32: 0>} : vector<256x512xi32>
    %49 = vector.broadcast %38 : vector<1x512xi32> to vector<256x512xi32>
    %50 = arith.cmpi eq, %48, %49 : vector<256x512xi32>
    %51 = arith.mulf %25, %23 : vector<1x512xf32>
    %cst_16 = arith.constant 0.000000e+00 : f32
    %52 = vector.shape_cast %51 : vector<1x512xf32> to vector<1x512xf32>
    %53 = vector.broadcast %52 : vector<1x512xf32> to vector<256x512xf32>
    %54 = vector.broadcast %cst_16 : f32 to vector<256x512xf32>
    %55 = arith.select %50, %53, %54 : vector<256x512xi1>, vector<256x512xf32>
    %56 = vector.broadcast %41 : vector<1x512xi32> to vector<256x512xi32>
    %57 = arith.cmpi eq, %48, %56 : vector<256x512xi32>
    %58 = arith.mulf %25, %20 : vector<1x512xf32>
    %cst_17 = arith.constant 0.000000e+00 : f32
    %59 = vector.shape_cast %58 : vector<1x512xf32> to vector<1x512xf32>
    %60 = vector.broadcast %59 : vector<1x512xf32> to vector<256x512xf32>
    %61 = vector.broadcast %cst_17 : f32 to vector<256x512xf32>
    %62 = arith.select %57, %60, %61 : vector<256x512xi1>, vector<256x512xf32>
    %63 = arith.addf %55, %62 : vector<256x512xf32>
    %64 = vector.broadcast %44 : vector<1x512xi32> to vector<256x512xi32>
    %65 = arith.cmpi eq, %48, %64 : vector<256x512xi32>
    %66 = arith.mulf %21, %23 : vector<1x512xf32>
    %cst_18 = arith.constant 0.000000e+00 : f32
    %67 = vector.shape_cast %66 : vector<1x512xf32> to vector<1x512xf32>
    %68 = vector.broadcast %67 : vector<1x512xf32> to vector<256x512xf32>
    %69 = vector.broadcast %cst_18 : f32 to vector<256x512xf32>
    %70 = arith.select %65, %68, %69 : vector<256x512xi1>, vector<256x512xf32>
    %71 = arith.addf %63, %70 : vector<256x512xf32>
    %72 = vector.broadcast %47 : vector<1x512xi32> to vector<256x512xi32>
    %73 = arith.cmpi eq, %48, %72 : vector<256x512xi32>
    %74 = arith.mulf %21, %20 : vector<1x512xf32>
    %cst_19 = arith.constant 0.000000e+00 : f32
    %75 = vector.shape_cast %74 : vector<1x512xf32> to vector<1x512xf32>
    %76 = vector.broadcast %75 : vector<1x512xf32> to vector<256x512xf32>
    %77 = vector.broadcast %cst_19 : f32 to vector<256x512xf32>
    %78 = arith.select %73, %76, %77 : vector<256x512xi1>, vector<256x512xf32>
    %79 = arith.addf %71, %78 : vector<256x512xf32>
    %cst_20 = arith.constant 3.500000e+00 : f32
    %80 = vector.broadcast %cst_20 : f32 to vector<1x512xf32>
    %81 = arith.mulf %0, %80 : vector<1x512xf32>
    %cst_21 = arith.constant 3.500000e+00 : f32
    %82 = vector.broadcast %cst_21 : f32 to vector<1x512xf32>
    %83 = arith.addf %81, %82 : vector<1x512xf32>
    %cst_22 = arith.constant 0.000000e+00 : f32
    %cst_23 = arith.constant 7.000000e+00 : f32
    %84 = vector.broadcast %cst_22 : f32 to vector<1x512xf32>
    %85 = arith.maximumf %84, %83 : vector<1x512xf32>
    %86 = vector.broadcast %cst_23 : f32 to vector<1x512xf32>
    %87 = arith.minimumf %86, %85 : vector<1x512xf32>
    %cst_24 = arith.constant 3.500000e+00 : f32
    %88 = vector.broadcast %cst_24 : f32 to vector<1x512xf32>
    %89 = arith.mulf %1, %88 : vector<1x512xf32>
    %cst_25 = arith.constant 3.500000e+00 : f32
    %90 = vector.broadcast %cst_25 : f32 to vector<1x512xf32>
    %91 = arith.addf %89, %90 : vector<1x512xf32>
    %cst_26 = arith.constant 0.000000e+00 : f32
    %cst_27 = arith.constant 7.000000e+00 : f32
    %92 = vector.broadcast %cst_26 : f32 to vector<1x512xf32>
    %93 = arith.maximumf %92, %91 : vector<1x512xf32>
    %94 = vector.broadcast %cst_27 : f32 to vector<1x512xf32>
    %95 = arith.minimumf %94, %93 : vector<1x512xf32>
    %96 = math.floor %87 : vector<1x512xf32>
    %97 = math.floor %95 : vector<1x512xf32>
    %98 = arith.subf %87, %96 : vector<1x512xf32>
    %99 = arith.subf %95, %97 : vector<1x512xf32>
    %cst_28 = arith.constant 1.000000e+00 : f32
    %100 = vector.broadcast %cst_28 : f32 to vector<1x512xf32>
    %101 = arith.subf %100, %98 : vector<1x512xf32>
    %cst_29 = arith.constant 1.000000e+00 : f32
    %102 = vector.broadcast %cst_29 : f32 to vector<1x512xf32>
    %103 = arith.subf %102, %99 : vector<1x512xf32>
    %104 = arith.fptosi %96 : vector<1x512xf32> to vector<1x512xi32>
    %105 = arith.fptosi %97 : vector<1x512xf32> to vector<1x512xi32>
    %c1_i32_30 = arith.constant 1 : i32
    %106 = vector.broadcast %c1_i32_30 : i32 to vector<1x512xi32>
    %107 = arith.addi %104, %106 : vector<1x512xi32>
    %c7_i32 = arith.constant 7 : i32
    %108 = vector.broadcast %c7_i32 : i32 to vector<1x512xi32>
    %109 = arith.minsi %107, %108 : vector<1x512xi32>
    %c1_i32_31 = arith.constant 1 : i32
    %110 = vector.broadcast %c1_i32_31 : i32 to vector<1x512xi32>
    %111 = arith.addi %105, %110 : vector<1x512xi32>
    %c7_i32_32 = arith.constant 7 : i32
    %112 = vector.broadcast %c7_i32_32 : i32 to vector<1x512xi32>
    %113 = arith.minsi %111, %112 : vector<1x512xi32>
    %c8_i32 = arith.constant 8 : i32
    %114 = vector.broadcast %c8_i32 : i32 to vector<1x512xi32>
    %115 = arith.muli %105, %114 : vector<1x512xi32>
    %116 = arith.addi %115, %104 : vector<1x512xi32>
    %c8_i32_33 = arith.constant 8 : i32
    %117 = vector.broadcast %c8_i32_33 : i32 to vector<1x512xi32>
    %118 = arith.muli %105, %117 : vector<1x512xi32>
    %119 = arith.addi %118, %109 : vector<1x512xi32>
    %c8_i32_34 = arith.constant 8 : i32
    %120 = vector.broadcast %c8_i32_34 : i32 to vector<1x512xi32>
    %121 = arith.muli %113, %120 : vector<1x512xi32>
    %122 = arith.addi %121, %104 : vector<1x512xi32>
    %c8_i32_35 = arith.constant 8 : i32
    %123 = vector.broadcast %c8_i32_35 : i32 to vector<1x512xi32>
    %124 = arith.muli %113, %123 : vector<1x512xi32>
    %125 = arith.addi %124, %109 : vector<1x512xi32>
    %126 = tpu.iota {dimensions = array<i32: 0>} : vector<64x512xi32>
    %127 = vector.broadcast %116 : vector<1x512xi32> to vector<64x512xi32>
    %128 = arith.cmpi eq, %126, %127 : vector<64x512xi32>
    %129 = arith.mulf %103, %101 : vector<1x512xf32>
    %cst_36 = arith.constant 0.000000e+00 : f32
    %130 = vector.shape_cast %129 : vector<1x512xf32> to vector<1x512xf32>
    %131 = vector.broadcast %130 : vector<1x512xf32> to vector<64x512xf32>
    %132 = vector.broadcast %cst_36 : f32 to vector<64x512xf32>
    %133 = arith.select %128, %131, %132 : vector<64x512xi1>, vector<64x512xf32>
    %134 = vector.broadcast %119 : vector<1x512xi32> to vector<64x512xi32>
    %135 = arith.cmpi eq, %126, %134 : vector<64x512xi32>
    %136 = arith.mulf %103, %98 : vector<1x512xf32>
    %cst_37 = arith.constant 0.000000e+00 : f32
    %137 = vector.shape_cast %136 : vector<1x512xf32> to vector<1x512xf32>
    %138 = vector.broadcast %137 : vector<1x512xf32> to vector<64x512xf32>
    %139 = vector.broadcast %cst_37 : f32 to vector<64x512xf32>
    %140 = arith.select %135, %138, %139 : vector<64x512xi1>, vector<64x512xf32>
    %141 = arith.addf %133, %140 : vector<64x512xf32>
    %142 = vector.broadcast %122 : vector<1x512xi32> to vector<64x512xi32>
    %143 = arith.cmpi eq, %126, %142 : vector<64x512xi32>
    %144 = arith.mulf %99, %101 : vector<1x512xf32>
    %cst_38 = arith.constant 0.000000e+00 : f32
    %145 = vector.shape_cast %144 : vector<1x512xf32> to vector<1x512xf32>
    %146 = vector.broadcast %145 : vector<1x512xf32> to vector<64x512xf32>
    %147 = vector.broadcast %cst_38 : f32 to vector<64x512xf32>
    %148 = arith.select %143, %146, %147 : vector<64x512xi1>, vector<64x512xf32>
    %149 = arith.addf %141, %148 : vector<64x512xf32>
    %150 = vector.broadcast %125 : vector<1x512xi32> to vector<64x512xi32>
    %151 = arith.cmpi eq, %126, %150 : vector<64x512xi32>
    %152 = arith.mulf %99, %98 : vector<1x512xf32>
    %cst_39 = arith.constant 0.000000e+00 : f32
    %153 = vector.shape_cast %152 : vector<1x512xf32> to vector<1x512xf32>
    %154 = vector.broadcast %153 : vector<1x512xf32> to vector<64x512xf32>
    %155 = vector.broadcast %cst_39 : f32 to vector<64x512xf32>
    %156 = arith.select %151, %154, %155 : vector<64x512xi1>, vector<64x512xf32>
    %157 = arith.addf %149, %156 : vector<64x512xf32>
    %cst_40 = arith.constant 1.500000e+00 : f32
    %158 = vector.broadcast %cst_40 : f32 to vector<1x512xf32>
    %159 = arith.mulf %0, %158 : vector<1x512xf32>
    %cst_41 = arith.constant 1.500000e+00 : f32
    %160 = vector.broadcast %cst_41 : f32 to vector<1x512xf32>
    %161 = arith.addf %159, %160 : vector<1x512xf32>
    %cst_42 = arith.constant 0.000000e+00 : f32
    %cst_43 = arith.constant 3.000000e+00 : f32
    %162 = vector.broadcast %cst_42 : f32 to vector<1x512xf32>
    %163 = arith.maximumf %162, %161 : vector<1x512xf32>
    %164 = vector.broadcast %cst_43 : f32 to vector<1x512xf32>
    %165 = arith.minimumf %164, %163 : vector<1x512xf32>
    %cst_44 = arith.constant 1.500000e+00 : f32
    %166 = vector.broadcast %cst_44 : f32 to vector<1x512xf32>
    %167 = arith.mulf %1, %166 : vector<1x512xf32>
    %cst_45 = arith.constant 1.500000e+00 : f32
    %168 = vector.broadcast %cst_45 : f32 to vector<1x512xf32>
    %169 = arith.addf %167, %168 : vector<1x512xf32>
    %cst_46 = arith.constant 0.000000e+00 : f32
    %cst_47 = arith.constant 3.000000e+00 : f32
    %170 = vector.broadcast %cst_46 : f32 to vector<1x512xf32>
    %171 = arith.maximumf %170, %169 : vector<1x512xf32>
    %172 = vector.broadcast %cst_47 : f32 to vector<1x512xf32>
    %173 = arith.minimumf %172, %171 : vector<1x512xf32>
    %174 = math.floor %165 : vector<1x512xf32>
    %175 = math.floor %173 : vector<1x512xf32>
    %176 = arith.subf %165, %174 : vector<1x512xf32>
    %177 = arith.subf %173, %175 : vector<1x512xf32>
    %cst_48 = arith.constant 1.000000e+00 : f32
    %178 = vector.broadcast %cst_48 : f32 to vector<1x512xf32>
    %179 = arith.subf %178, %176 : vector<1x512xf32>
    %cst_49 = arith.constant 1.000000e+00 : f32
    %180 = vector.broadcast %cst_49 : f32 to vector<1x512xf32>
    %181 = arith.subf %180, %177 : vector<1x512xf32>
    %182 = arith.fptosi %174 : vector<1x512xf32> to vector<1x512xi32>
    %183 = arith.fptosi %175 : vector<1x512xf32> to vector<1x512xi32>
    %c1_i32_50 = arith.constant 1 : i32
    %184 = vector.broadcast %c1_i32_50 : i32 to vector<1x512xi32>
    %185 = arith.addi %182, %184 : vector<1x512xi32>
    %c3_i32 = arith.constant 3 : i32
    %186 = vector.broadcast %c3_i32 : i32 to vector<1x512xi32>
    %187 = arith.minsi %185, %186 : vector<1x512xi32>
    %c1_i32_51 = arith.constant 1 : i32
    %188 = vector.broadcast %c1_i32_51 : i32 to vector<1x512xi32>
    %189 = arith.addi %183, %188 : vector<1x512xi32>
    %c3_i32_52 = arith.constant 3 : i32
    %190 = vector.broadcast %c3_i32_52 : i32 to vector<1x512xi32>
    %191 = arith.minsi %189, %190 : vector<1x512xi32>
    %c4_i32 = arith.constant 4 : i32
    %192 = vector.broadcast %c4_i32 : i32 to vector<1x512xi32>
    %193 = arith.muli %183, %192 : vector<1x512xi32>
    %194 = arith.addi %193, %182 : vector<1x512xi32>
    %c4_i32_53 = arith.constant 4 : i32
    %195 = vector.broadcast %c4_i32_53 : i32 to vector<1x512xi32>
    %196 = arith.muli %183, %195 : vector<1x512xi32>
    %197 = arith.addi %196, %187 : vector<1x512xi32>
    %c4_i32_54 = arith.constant 4 : i32
    %198 = vector.broadcast %c4_i32_54 : i32 to vector<1x512xi32>
    %199 = arith.muli %191, %198 : vector<1x512xi32>
    %200 = arith.addi %199, %182 : vector<1x512xi32>
    %c4_i32_55 = arith.constant 4 : i32
    %201 = vector.broadcast %c4_i32_55 : i32 to vector<1x512xi32>
    %202 = arith.muli %191, %201 : vector<1x512xi32>
    %203 = arith.addi %202, %187 : vector<1x512xi32>
    %204 = tpu.iota {dimensions = array<i32: 0>} : vector<16x512xi32>
    %205 = vector.broadcast %194 : vector<1x512xi32> to vector<16x512xi32>
    %206 = arith.cmpi eq, %204, %205 : vector<16x512xi32>
    %207 = arith.mulf %181, %179 : vector<1x512xf32>
    %cst_56 = arith.constant 0.000000e+00 : f32
    %208 = vector.shape_cast %207 : vector<1x512xf32> to vector<1x512xf32>
    %209 = vector.broadcast %208 : vector<1x512xf32> to vector<16x512xf32>
    %210 = vector.broadcast %cst_56 : f32 to vector<16x512xf32>
    %211 = arith.select %206, %209, %210 : vector<16x512xi1>, vector<16x512xf32>
    %212 = vector.broadcast %197 : vector<1x512xi32> to vector<16x512xi32>
    %213 = arith.cmpi eq, %204, %212 : vector<16x512xi32>
    %214 = arith.mulf %181, %176 : vector<1x512xf32>
    %cst_57 = arith.constant 0.000000e+00 : f32
    %215 = vector.shape_cast %214 : vector<1x512xf32> to vector<1x512xf32>
    %216 = vector.broadcast %215 : vector<1x512xf32> to vector<16x512xf32>
    %217 = vector.broadcast %cst_57 : f32 to vector<16x512xf32>
    %218 = arith.select %213, %216, %217 : vector<16x512xi1>, vector<16x512xf32>
    %219 = arith.addf %211, %218 : vector<16x512xf32>
    %220 = vector.broadcast %200 : vector<1x512xi32> to vector<16x512xi32>
    %221 = arith.cmpi eq, %204, %220 : vector<16x512xi32>
    %222 = arith.mulf %177, %179 : vector<1x512xf32>
    %cst_58 = arith.constant 0.000000e+00 : f32
    %223 = vector.shape_cast %222 : vector<1x512xf32> to vector<1x512xf32>
    %224 = vector.broadcast %223 : vector<1x512xf32> to vector<16x512xf32>
    %225 = vector.broadcast %cst_58 : f32 to vector<16x512xf32>
    %226 = arith.select %221, %224, %225 : vector<16x512xi1>, vector<16x512xf32>
    %227 = arith.addf %219, %226 : vector<16x512xf32>
    %228 = vector.broadcast %203 : vector<1x512xi32> to vector<16x512xi32>
    %229 = arith.cmpi eq, %204, %228 : vector<16x512xi32>
    %230 = arith.mulf %177, %176 : vector<1x512xf32>
    %cst_59 = arith.constant 0.000000e+00 : f32
    %231 = vector.shape_cast %230 : vector<1x512xf32> to vector<1x512xf32>
    %232 = vector.broadcast %231 : vector<1x512xf32> to vector<16x512xf32>
    %233 = vector.broadcast %cst_59 : f32 to vector<16x512xf32>
    %234 = arith.select %229, %232, %233 : vector<16x512xi1>, vector<16x512xf32>
    %235 = arith.addf %227, %234 : vector<16x512xf32>
    %cst_60 = arith.constant 5.000000e-01 : f32
    %236 = vector.broadcast %cst_60 : f32 to vector<1x512xf32>
    %237 = arith.mulf %0, %236 : vector<1x512xf32>
    %cst_61 = arith.constant 5.000000e-01 : f32
    %238 = vector.broadcast %cst_61 : f32 to vector<1x512xf32>
    %239 = arith.addf %237, %238 : vector<1x512xf32>
    %cst_62 = arith.constant 0.000000e+00 : f32
    %cst_63 = arith.constant 1.000000e+00 : f32
    %240 = vector.broadcast %cst_62 : f32 to vector<1x512xf32>
    %241 = arith.maximumf %240, %239 : vector<1x512xf32>
    %242 = vector.broadcast %cst_63 : f32 to vector<1x512xf32>
    %243 = arith.minimumf %242, %241 : vector<1x512xf32>
    %cst_64 = arith.constant 5.000000e-01 : f32
    %244 = vector.broadcast %cst_64 : f32 to vector<1x512xf32>
    %245 = arith.mulf %1, %244 : vector<1x512xf32>
    %cst_65 = arith.constant 5.000000e-01 : f32
    %246 = vector.broadcast %cst_65 : f32 to vector<1x512xf32>
    %247 = arith.addf %245, %246 : vector<1x512xf32>
    %cst_66 = arith.constant 0.000000e+00 : f32
    %cst_67 = arith.constant 1.000000e+00 : f32
    %248 = vector.broadcast %cst_66 : f32 to vector<1x512xf32>
    %249 = arith.maximumf %248, %247 : vector<1x512xf32>
    %250 = vector.broadcast %cst_67 : f32 to vector<1x512xf32>
    %251 = arith.minimumf %250, %249 : vector<1x512xf32>
    %252 = math.floor %243 : vector<1x512xf32>
    %253 = math.floor %251 : vector<1x512xf32>
    %254 = arith.subf %243, %252 : vector<1x512xf32>
    %255 = arith.subf %251, %253 : vector<1x512xf32>
    %cst_68 = arith.constant 1.000000e+00 : f32
    %256 = vector.broadcast %cst_68 : f32 to vector<1x512xf32>
    %257 = arith.subf %256, %254 : vector<1x512xf32>
    %cst_69 = arith.constant 1.000000e+00 : f32
    %258 = vector.broadcast %cst_69 : f32 to vector<1x512xf32>
    %259 = arith.subf %258, %255 : vector<1x512xf32>
    %260 = arith.fptosi %252 : vector<1x512xf32> to vector<1x512xi32>
    %261 = arith.fptosi %253 : vector<1x512xf32> to vector<1x512xi32>
    %c1_i32_70 = arith.constant 1 : i32
    %262 = vector.broadcast %c1_i32_70 : i32 to vector<1x512xi32>
    %263 = arith.addi %260, %262 : vector<1x512xi32>
    %c1_i32_71 = arith.constant 1 : i32
    %264 = vector.broadcast %c1_i32_71 : i32 to vector<1x512xi32>
    %265 = arith.minsi %263, %264 : vector<1x512xi32>
    %c1_i32_72 = arith.constant 1 : i32
    %266 = vector.broadcast %c1_i32_72 : i32 to vector<1x512xi32>
    %267 = arith.addi %261, %266 : vector<1x512xi32>
    %c1_i32_73 = arith.constant 1 : i32
    %268 = vector.broadcast %c1_i32_73 : i32 to vector<1x512xi32>
    %269 = arith.minsi %267, %268 : vector<1x512xi32>
    %c2_i32 = arith.constant 2 : i32
    %270 = vector.broadcast %c2_i32 : i32 to vector<1x512xi32>
    %271 = arith.muli %261, %270 : vector<1x512xi32>
    %272 = arith.addi %271, %260 : vector<1x512xi32>
    %c2_i32_74 = arith.constant 2 : i32
    %273 = vector.broadcast %c2_i32_74 : i32 to vector<1x512xi32>
    %274 = arith.muli %261, %273 : vector<1x512xi32>
    %275 = arith.addi %274, %265 : vector<1x512xi32>
    %c2_i32_75 = arith.constant 2 : i32
    %276 = vector.broadcast %c2_i32_75 : i32 to vector<1x512xi32>
    %277 = arith.muli %269, %276 : vector<1x512xi32>
    %278 = arith.addi %277, %260 : vector<1x512xi32>
    %c2_i32_76 = arith.constant 2 : i32
    %279 = vector.broadcast %c2_i32_76 : i32 to vector<1x512xi32>
    %280 = arith.muli %269, %279 : vector<1x512xi32>
    %281 = arith.addi %280, %265 : vector<1x512xi32>
    %282 = tpu.iota {dimensions = array<i32: 0>} : vector<8x512xi32>
    %283 = vector.broadcast %272 : vector<1x512xi32> to vector<8x512xi32>
    %284 = arith.cmpi eq, %282, %283 : vector<8x512xi32>
    %285 = arith.mulf %259, %257 : vector<1x512xf32>
    %cst_77 = arith.constant 0.000000e+00 : f32
    %286 = vector.shape_cast %285 : vector<1x512xf32> to vector<1x512xf32>
    %287 = vector.broadcast %286 : vector<1x512xf32> to vector<8x512xf32>
    %288 = vector.broadcast %cst_77 : f32 to vector<8x512xf32>
    %289 = arith.select %284, %287, %288 : vector<8x512xi1>, vector<8x512xf32>
    %290 = vector.broadcast %275 : vector<1x512xi32> to vector<8x512xi32>
    %291 = arith.cmpi eq, %282, %290 : vector<8x512xi32>
    %292 = arith.mulf %259, %254 : vector<1x512xf32>
    %cst_78 = arith.constant 0.000000e+00 : f32
    %293 = vector.shape_cast %292 : vector<1x512xf32> to vector<1x512xf32>
    %294 = vector.broadcast %293 : vector<1x512xf32> to vector<8x512xf32>
    %295 = vector.broadcast %cst_78 : f32 to vector<8x512xf32>
    %296 = arith.select %291, %294, %295 : vector<8x512xi1>, vector<8x512xf32>
    %297 = arith.addf %289, %296 : vector<8x512xf32>
    %298 = vector.broadcast %278 : vector<1x512xi32> to vector<8x512xi32>
    %299 = arith.cmpi eq, %282, %298 : vector<8x512xi32>
    %300 = arith.mulf %255, %257 : vector<1x512xf32>
    %cst_79 = arith.constant 0.000000e+00 : f32
    %301 = vector.shape_cast %300 : vector<1x512xf32> to vector<1x512xf32>
    %302 = vector.broadcast %301 : vector<1x512xf32> to vector<8x512xf32>
    %303 = vector.broadcast %cst_79 : f32 to vector<8x512xf32>
    %304 = arith.select %299, %302, %303 : vector<8x512xi1>, vector<8x512xf32>
    %305 = arith.addf %297, %304 : vector<8x512xf32>
    %306 = vector.broadcast %281 : vector<1x512xi32> to vector<8x512xi32>
    %307 = arith.cmpi eq, %282, %306 : vector<8x512xi32>
    %308 = arith.mulf %255, %254 : vector<1x512xf32>
    %cst_80 = arith.constant 0.000000e+00 : f32
    %309 = vector.shape_cast %308 : vector<1x512xf32> to vector<1x512xf32>
    %310 = vector.broadcast %309 : vector<1x512xf32> to vector<8x512xf32>
    %311 = vector.broadcast %cst_80 : f32 to vector<8x512xf32>
    %312 = arith.select %307, %310, %311 : vector<8x512xi1>, vector<8x512xf32>
    %313 = arith.addf %305, %312 : vector<8x512xf32>
    %314 = tpu.concatenate %79, %157, %235, %313 in 0 : vector<256x512xf32>, vector<64x512xf32>, vector<16x512xf32>, vector<8x512xf32> -> vector<344x512xf32>
    %c0_81 = arith.constant 0 : index
    %c0_82 = arith.constant 0 : index
    %315 = vector.load %arg1[%c0_81, %c0_82] : memref<8x344xf32, #tpu.memory_space<vmem>>, vector<8x344xf32>
    %cst_83 = arith.constant dense<0.000000e+00> : vector<8x512xf32>
    %316 = tpu.matmul %315, %314, %cst_83 {dimension_numbers = #tpu.dot_dimension_numbers<[1], [0], [0], [1], [0, 0, 1, 1], [], []>} : vector<8x344xf32>, vector<344x512xf32>, vector<8x512xf32> -> vector<8x512xf32>
    %c0_84 = arith.constant 0 : index
    %c0_85 = arith.constant 0 : index
    %317 = vector.load %arg3[%c0_84, %c0_85] : memref<8x512xf32, #tpu.memory_space<vmem>>, vector<8x512xf32>
    tpu.vector_store %arg3[%c0_84, %c0_85], %316 {strides = array<i32>} : memref<8x512xf32, #tpu.memory_space<vmem>>, vector<8x512xf32>,
    return
  }
  func.func @transform_0(%arg0: i32) -> (i32, i32) {
    %c0_i32 = arith.constant 0 : i32
    %c0_i32_0 = arith.constant 0 : i32
    %c0_i32_1 = arith.constant 0 : i32
    return %c0_i32, %c0_i32_0 : i32, i32
  }
  func.func @transform_1(%arg0: i32) -> (i32, i32) {
    %c0_i32 = arith.constant 0 : i32
    %c0_i32_0 = arith.constant 0 : i32
    return %c0_i32, %arg0 : i32, i32
  }
  func.func @transform_2(%arg0: i32) -> (i32, i32) {
    %c0_i32 = arith.constant 0 : i32
    %c0_i32_0 = arith.constant 0 : i32
    return %c0_i32, %arg0 : i32, i32
  }
}

</mosaic_0001>

<llo_original>
// kernel: tpu_custom_call.1
$region0: #{tpu_custom_call.1}
  #allocation0 [shape = 'u32[]', space=smem, size = 0x4, offset = 0x4, fixed_abs, tag = 'smem constant byte address 0x4 - core index']
  #allocation1 [shape = 'u32[144,128]{1,0:T(1,128)}', space=vmem, size = 0x12000, scoped, tag = 'internal scratch']
  %s0 = inlined_call_operand.hbm [shape: f32[8,344], index: 0, kind: input, shape index: {}]
  %s1 = inlined_call_operand.hbm [shape: f32[2,512], index: 1, kind: input, shape index: {}]
  %s2 = inlined_call_operand.hbm [shape: f32[8,512], index: 2, kind: output, shape index: {}]
  %s3 = sld [smem:[#allocation0]]
  $region26: #{tpu_custom_call.1} parent=0
    _
  %s5 = ssub.s32 1, %s3
  %s6 = scalar_select 0, %s5, %s3
  $region1: #{tpu_custom_call.1} parent=0
    #allocation2 [shape = 'u8[12288]{0}', space=vmem, size = 0x3000, scoped, tag = 'input window, operand 0, single buffered']
    #allocation3 [shape = 's32[1]{0}', space=sflag, size = 0x4, scoped, tag = 'scoped memory for tpu_custom_call.1']
    #allocation4 [shape = 's32[1]{0}', space=sflag, size = 0x4, scoped, tag = 'scoped memory for tpu_custom_call.1']
    #allocation5 [shape = 'u8[4096]{0}', space=vmem, size = 0x1000, scoped, tag = 'input window, operand 1, single buffered']
    #allocation6 [shape = 's32[1]{0}', space=sflag, size = 0x4, scoped, tag = 'scoped memory for tpu_custom_call.1']
    #allocation7 [shape = 'u8[16384]{0}', space=vmem, size = 0x4000, scoped, tag = 'output window, operand 0, single buffered']
    %7 = vsyncpa [#allocation3], 0
    %8 = vsyncpa [#allocation6], 0
    %9 = vsyncpa [#allocation4], 0
    // Predicated region
    $region2: #{tpu_custom_call.1} parent=1 // pred_check
      _
    $region3: #{tpu_custom_call.1} parent=1 // pred_check_branch
      %11 = sbr.rel (0) target = $region5
    $region4: #{tpu_custom_call.1} parent=1 // pred_region
      %s13 = ssub.s32 384, 384
      %14 = vsyncadd [#allocation3], %s13
      %s16 = sshll.u32 [#allocation2], 4
      %s17 = int_to_ptr.vmem [resolvable:$true] %s16
      %19 = dma.hbm_to_vmem [thread:$0]  %s0, 384, %s17, [#allocation3]
    $region5: #{tpu_custom_call.1} parent=1 // pred_fallthru
      _
    // Predicated region
    $region6: #{tpu_custom_call.1} parent=1 // pred_check
      _
    $region7: #{tpu_custom_call.1} parent=1 // pred_check_branch
      %21 = sbr.rel (0) target = $region9
    $region8: #{tpu_custom_call.1} parent=1 // pred_region
      %s23 = ssub.s32 128, 128
      %24 = vsyncadd [#allocation6], %s23
      %s26 = sshll.u32 [#allocation5], 4
      %s27 = int_to_ptr.vmem [resolvable:$true] %s26
      %29 = dma.hbm_to_vmem [thread:$0]  %s1, 128, %s27, [#allocation6]
    $region9: #{tpu_custom_call.1} parent=1 // pred_fallthru
      _
    // Predicated region
    $region10: #{tpu_custom_call.1} parent=1 // pred_check
      _
    $region11: #{tpu_custom_call.1} parent=1 // pred_check_branch
      %31 = sbr.rel (0) target = $region13
    $region12: #{tpu_custom_call.1} parent=1 // pred_region
      %32 = dma.done [#allocation3], 384
    $region13: #{tpu_custom_call.1} parent=1 // pred_fallthru
      _
    // Predicated region
    $region14: #{tpu_custom_call.1} parent=1 // pred_check
      _
    $region15: #{tpu_custom_call.1} parent=1 // pred_check_branch
      %34 = sbr.rel (0) target = $region17
    $region16: #{tpu_custom_call.1} parent=1 // pred_region
      %35 = dma.done [#allocation6], 128
    $region17: #{tpu_custom_call.1} parent=1 // pred_fallthru
      _
    %v36 = vld [vmem:[#allocation5] ss:$2 sm:$0xf]
    %s37 = scalar_lea.vmem [#allocation5], 1
    %v38 = vld [vmem:[%s37] ss:$2 sm:$0xf]
    %v39 = vmul.f32 %v36, 7.5
    %v40 = vadd.f32 %v39, 7.5
    %v41 = vmax.f32 %v40, 0.0
    %v42 = vmin.f32 %v41, 15.0
    %v43 = vmul.f32 %v38, 7.5
    %v44 = vadd.f32 %v43, 7.5
    %v45 = vmax.f32 %v44, 0.0
    %v46 = vmin.f32 %v45, 15.0
    %v47 = vfloor.f32 %v42
    %v48 = vfloor.f32 %v46
    %v49 = vsub.f32 %v42, %v47
    %v50 = vsub.f32 %v46, %v48
    %v51 = vsub.f32 1.0, %v49
    %v52 = vsub.f32 1.0, %v50
    %v53 = vcvt.f32.s32.to.zero.pseudo %v47
    %v54 = vcvt.f32.s32.to.zero.pseudo %v48
    %v55 = vadd.s32 %v53, 1
    %vm56 = vcmp.lt.s32.totalorder %v55, 15
    %v57 = vsel %vm56, %v55, 15
    %v58 = vadd.s32 %v54, 1
    %vm59 = vcmp.lt.s32.totalorder %v58, 15
    %v60 = vsel %vm59, %v58, 15
    %v61 = vmul.u32 %v54, 16
    %v62 = vadd.s32 %v61, %v53
    %v63 = vadd.s32 %v61, %v57
    %v64 = vmul.u32 %v60, 16
    %v65 = vadd.s32 %v64, %v53
    %v66 = vadd.s32 %v64, %v57
    %v67 = vlaneseq
    %v68 = vshrl.u32 %v67, 7
    %v69 = vadd.s32 %v68, 8
    %v70 = vadd.s32 %v68, 16
    %v71 = vadd.s32 %v68, 24
    %v72 = vadd.s32 %v68, 32
    %v73 = vadd.s32 %v68, 40
    %v74 = vadd.s32 %v68, 48
    %v75 = vadd.s32 %v68, 56
    %v76 = vadd.s32 %v68, 64
    %v77 = vadd.s32 %v68, 72
    %v78 = vadd.s32 %v68, 80
    %v79 = vadd.s32 %v68, 88
    %v80 = vadd.s32 %v68, 96
    %v81 = vadd.s32 %v68, 104
    %v82 = vadd.s32 %v68, 112
    %v83 = vadd.s32 %v68, 120
    %v84 = vadd.s32 %v68, 128
    %v85 = vadd.s32 %v68, 136
    %v86 = vadd.s32 %v68, 144
    %v87 = vadd.s32 %v68, 152
    %v88 = vadd.s32 %v68, 160
    %v89 = vadd.s32 %v68, 168
    %v90 = vadd.s32 %v68, 176
    %v91 = vadd.s32 %v68, 184
    %v92 = vadd.s32 %v68, 192
    %v93 = vadd.s32 %v68, 200
    %v94 = vadd.s32 %v68, 208
    %v95 = vadd.s32 %v68, 216
    %v96 = vadd.s32 %v68, 224
    %v97 = vadd.s32 %v68, 232
    %v98 = vadd.s32 %v68, 240
    %v99 = vadd.s32 %v68, 248
    %v100 = vlaneseq
    %v101 = vshrl.u32 %v100, 7
    %v102 = vsub.s32 0, %v101
    %v103 = vrot.slane %v62, %v102
    %v104 = vlaneseq
    %v105 = vshrl.u32 %v104, 7
    %v106 = vsub.s32 1, %v105
    %v107 = vrot.slane %v62, %v106
    %v108 = vlaneseq
    %v109 = vshrl.u32 %v108, 7
    %v110 = vsub.s32 2, %v109
    %v111 = vrot.slane %v62, %v110
    %v112 = vlaneseq
    %v113 = vshrl.u32 %v112, 7
    %v114 = vsub.s32 3, %v113
    %v115 = vrot.slane %v62, %v114
    %vm116 = vcmp.eq.s32.totalorder %v68, %v103
    %vm117 = vcmp.eq.s32.totalorder %v68, %v107
    %vm118 = vcmp.eq.s32.totalorder %v68, %v111
    %vm119 = vcmp.eq.s32.totalorder %v68, %v115
    %vm120 = vcmp.eq.s32.totalorder %v69, %v103
    %vm121 = vcmp.eq.s32.totalorder %v69, %v107
    %vm122 = vcmp.eq.s32.totalorder %v69, %v111
    %vm123 = vcmp.eq.s32.totalorder %v69, %v115
    %vm124 = vcmp.eq.s32.totalorder %v70, %v103
    %vm125 = vcmp.eq.s32.totalorder %v70, %v107
    %vm126 = vcmp.eq.s32.totalorder %v70, %v111
    %vm127 = vcmp.eq.s32.totalorder %v70, %v115
    %vm128 = vcmp.eq.s32.totalorder %v71, %v103
    %vm129 = vcmp.eq.s32.totalorder %v71, %v107
    %vm130 = vcmp.eq.s32.totalorder %v71, %v111
    %vm131 = vcmp.eq.s32.totalorder %v71, %v115
    %vm132 = vcmp.eq.s32.totalorder %v72, %v103
    %vm133 = vcmp.eq.s32.totalorder %v72, %v107
    %vm134 = vcmp.eq.s32.totalorder %v72, %v111
    %vm135 = vcmp.eq.s32.totalorder %v72, %v115
    %vm136 = vcmp.eq.s32.totalorder %v73, %v103
    %vm137 = vcmp.eq.s32.totalorder %v73, %v107
    %vm138 = vcmp.eq.s32.totalorder %v73, %v111
    %vm139 = vcmp.eq.s32.totalorder %v73, %v115
    %vm140 = vcmp.eq.s32.totalorder %v74, %v103
    %vm141 = vcmp.eq.s32.totalorder %v74, %v107
    %vm142 = vcmp.eq.s32.totalorder %v74, %v111
    %vm143 = vcmp.eq.s32.totalorder %v74, %v115
    %vm144 = vcmp.eq.s32.totalorder %v75, %v103
    %vm145 = vcmp.eq.s32.totalorder %v75, %v107
    %vm146 = vcmp.eq.s32.totalorder %v75, %v111
    %vm147 = vcmp.eq.s32.totalorder %v75, %v115
    %vm148 = vcmp.eq.s32.totalorder %v76, %v103
    %vm149 = vcmp.eq.s32.totalorder %v76, %v107
    %vm150 = vcmp.eq.s32.totalorder %v76, %v111
    %vm151 = vcmp.eq.s32.totalorder %v76, %v115
    %vm152 = vcmp.eq.s32.totalorder %v77, %v103
    %vm153 = vcmp.eq.s32.totalorder %v77, %v107
    %vm154 = vcmp.eq.s32.totalorder %v77, %v111
    %vm155 = vcmp.eq.s32.totalorder %v77, %v115
    %vm156 = vcmp.eq.s32.totalorder %v78, %v103
    %vm157 = vcmp.eq.s32.totalorder %v78, %v107
    %vm158 = vcmp.eq.s32.totalorder %v78, %v111
    %vm159 = vcmp.eq.s32.totalorder %v78, %v115
    %vm160 = vcmp.eq.s32.totalorder %v79, %v103
    %vm161 = vcmp.eq.s32.totalorder %v79, %v107
    %vm162 = vcmp.eq.s32.totalorder %v79, %v111
    %vm163 = vcmp.eq.s32.totalorder %v79, %v115
    %vm164 = vcmp.eq.s32.totalorder %v80, %v103
    %vm165 = vcmp.eq.s32.totalorder %v80, %v107
    %vm166 = vcmp.eq.s32.totalorder %v80, %v111
    %vm167 = vcmp.eq.s32.totalorder %v80, %v115
    %vm168 = vcmp.eq.s32.totalorder %v81, %v103
    %vm169 = vcmp.eq.s32.totalorder %v81, %v107
    %vm170 = vcmp.eq.s32.totalorder %v81, %v111
    %vm171 = vcmp.eq.s32.totalorder %v81, %v115
    %vm172 = vcmp.eq.s32.totalorder %v82, %v103
    %vm173 = vcmp.eq.s32.totalorder %v82, %v107
    %vm174 = vcmp.eq.s32.totalorder %v82, %v111
    %vm175 = vcmp.eq.s32.totalorder %v82, %v115
    %vm176 = vcmp.eq.s32.totalorder %v83, %v103
    %vm177 = vcmp.eq.s32.totalorder %v83, %v107
    %vm178 = vcmp.eq.s32.totalorder %v83, %v111
    %vm179 = vcmp.eq.s32.totalorder %v83, %v115
    %vm180 = vcmp.eq.s32.totalorder %v84, %v103
    %vm181 = vcmp.eq.s32.totalorder %v84, %v107
    %vm182 = vcmp.eq.s32.totalorder %v84, %v111
    %vm183 = vcmp.eq.s32.totalorder %v84, %v115
    %vm184 = vcmp.eq.s32.totalorder %v85, %v103
    %vm185 = vcmp.eq.s32.totalorder %v85, %v107
    %vm186 = vcmp.eq.s32.totalorder %v85, %v111
    %vm187 = vcmp.eq.s32.totalorder %v85, %v115
    %vm188 = vcmp.eq.s32.totalorder %v86, %v103
    %vm189 = vcmp.eq.s32.totalorder %v86, %v107
    %vm190 = vcmp.eq.s32.totalorder %v86, %v111
    %vm191 = vcmp.eq.s32.totalorder %v86, %v115
    %vm192 = vcmp.eq.s32.totalorder %v87, %v103
    %vm193 = vcmp.eq.s32.totalorder %v87, %v107
    %vm194 = vcmp.eq.s32.totalorder %v87, %v111
    %vm195 = vcmp.eq.s32.totalorder %v87, %v115
    %vm196 = vcmp.eq.s32.totalorder %v88, %v103
    %vm197 = vcmp.eq.s32.totalorder %v88, %v107
    %vm198 = vcmp.eq.s32.totalorder %v88, %v111
    %vm199 = vcmp.eq.s32.totalorder %v88, %v115
    %vm200 = vcmp.eq.s32.totalorder %v89, %v103
    %vm201 = vcmp.eq.s32.totalorder %v89, %v107
    %vm202 = vcmp.eq.s32.totalorder %v89, %v111
    %vm203 = vcmp.eq.s32.totalorder %v89, %v115
    %vm204 = vcmp.eq.s32.totalorder %v90, %v103
    %vm205 = vcmp.eq.s32.totalorder %v90, %v107
    %vm206 = vcmp.eq.s32.totalorder %v90, %v111
    %vm207 = vcmp.eq.s32.totalorder %v90, %v115
    %vm208 = vcmp.eq.s32.totalorder %v91, %v103
    %vm209 = vcmp.eq.s32.totalorder %v91, %v107
    %vm210 = vcmp.eq.s32.totalorder %v91, %v111
    %vm211 = vcmp.eq.s32.totalorder %v91, %v115
    %vm212 = vcmp.eq.s32.totalorder %v92, %v103
    %vm213 = vcmp.eq.s32.totalorder %v92, %v107
    %vm214 = vcmp.eq.s32.totalorder %v92, %v111
    %vm215 = vcmp.eq.s32.totalorder %v92, %v115
    %vm216 = vcmp.eq.s32.totalorder %v93, %v103
    %vm217 = vcmp.eq.s32.totalorder %v93, %v107
    %vm218 = vcmp.eq.s32.totalorder %v93, %v111
    %vm219 = vcmp.eq.s32.totalorder %v93, %v115
    %vm220 = vcmp.eq.s32.totalorder %v94, %v103
    %vm221 = vcmp.eq.s32.totalorder %v94, %v107
    %vm222 = vcmp.eq.s32.totalorder %v94, %v111
    %vm223 = vcmp.eq.s32.totalorder %v94, %v115
    %vm224 = vcmp.eq.s32.totalorder %v95, %v103
    %vm225 = vcmp.eq.s32.totalorder %v95, %v107
    %vm226 = vcmp.eq.s32.totalorder %v95, %v111
    %vm227 = vcmp.eq.s32.totalorder %v95, %v115
    %vm228 = vcmp.eq.s32.totalorder %v96, %v103
    %vm229 = vcmp.eq.s32.totalorder %v96, %v107
    %vm230 = vcmp.eq.s32.totalorder %v96, %v111
    %vm231 = vcmp.eq.s32.totalorder %v96, %v115
    %vm232 = vcmp.eq.s32.totalorder %v97, %v103
    %vm233 = vcmp.eq.s32.totalorder %v97, %v107
    %vm234 = vcmp.eq.s32.totalorder %v97, %v111
    %vm235 = vcmp.eq.s32.totalorder %v97, %v115
    %vm236 = vcmp.eq.s32.totalorder %v98, %v103
    %vm237 = vcmp.eq.s32.totalorder %v98, %v107
    %vm238 = vcmp.eq.s32.totalorder %v98, %v111
    %vm239 = vcmp.eq.s32.totalorder %v98, %v115
    %vm240 = vcmp.eq.s32.totalorder %v99, %v103
    %vm241 = vcmp.eq.s32.totalorder %v99, %v107
    %vm242 = vcmp.eq.s32.totalorder %v99, %v111
    %vm243 = vcmp.eq.s32.totalorder %v99, %v115
    %v244 = vmul.f32 %v52, %v51
    %v246 = vlaneseq
    %v247 = vshrl.u32 %v246, 7
    %v248 = vsub.s32 0, %v247
    %v249 = vrot.slane %v244, %v248
    %v250 = vlaneseq
    %v251 = vshrl.u32 %v250, 7
    %v252 = vsub.s32 1, %v251
    %v253 = vrot.slane %v244, %v252
    %v254 = vlaneseq
    %v255 = vshrl.u32 %v254, 7
    %v256 = vsub.s32 2, %v255
    %v257 = vrot.slane %v244, %v256
    %v258 = vlaneseq
    %v259 = vshrl.u32 %v258, 7
    %v260 = vsub.s32 3, %v259
    %v261 = vrot.slane %v244, %v260
    %v266 = vsel %vm116, %v249, 0.0
    %v267 = vsel %vm117, %v253, 0.0
    %v268 = vsel %vm118, %v257, 0.0
    %v269 = vsel %vm119, %v261, 0.0
    %v270 = vsel %vm120, %v249, 0.0
    %v271 = vsel %vm121, %v253, 0.0
    %v272 = vsel %vm122, %v257, 0.0
    %v273 = vsel %vm123, %v261, 0.0
    %v274 = vsel %vm124, %v249, 0.0
    %v275 = vsel %vm125, %v253, 0.0
    %v276 = vsel %vm126, %v257, 0.0
    %v277 = vsel %vm127, %v261, 0.0
    %v278 = vsel %vm128, %v249, 0.0
    %v279 = vsel %vm129, %v253, 0.0
    %v280 = vsel %vm130, %v257, 0.0
    %v281 = vsel %vm131, %v261, 0.0
    %v282 = vsel %vm132, %v249, 0.0
    %v283 = vsel %vm133, %v253, 0.0
    %v284 = vsel %vm134, %v257, 0.0
    %v285 = vsel %vm135, %v261, 0.0
    %v286 = vsel %vm136, %v249, 0.0
    %v287 = vsel %vm137, %v253, 0.0
    %v288 = vsel %vm138, %v257, 0.0
    %v289 = vsel %vm139, %v261, 0.0
    %v290 = vsel %vm140, %v249, 0.0
    %v291 = vsel %vm141, %v253, 0.0
    %v292 = vsel %vm142, %v257, 0.0
    %v293 = vsel %vm143, %v261, 0.0
    %v294 = vsel %vm144, %v249, 0.0
    %v295 = vsel %vm145, %v253, 0.0
    %v296 = vsel %vm146, %v257, 0.0
    %v297 = vsel %vm147, %v261, 0.0
    %v298 = vsel %vm148, %v249, 0.0
    %v299 = vsel %vm149, %v253, 0.0
    %v300 = vsel %vm150, %v257, 0.0
    %v301 = vsel %vm151, %v261, 0.0
    %v302 = vsel %vm152, %v249, 0.0
    %v303 = vsel %vm153, %v253, 0.0
    %v304 = vsel %vm154, %v257, 0.0
    %v305 = vsel %vm155, %v261, 0.0
    %v306 = vsel %vm156, %v249, 0.0
    %v307 = vsel %vm157, %v253, 0.0
    %v308 = vsel %vm158, %v257, 0.0
    %v309 = vsel %vm159, %v261, 0.0
    %v310 = vsel %vm160, %v249, 0.0
    %v311 = vsel %vm161, %v253, 0.0
    %v312 = vsel %vm162, %v257, 0.0
    %v313 = vsel %vm163, %v261, 0.0
    %v314 = vsel %vm164, %v249, 0.0
    %v315 = vsel %vm165, %v253, 0.0
    %v316 = vsel %vm166, %v257, 0.0
    %v317 = vsel %vm167, %v261, 0.0
    %v318 = vsel %vm168, %v249, 0.0
    %v319 = vsel %vm169, %v253, 0.0
    %v320 = vsel %vm170, %v257, 0.0
    %v321 = vsel %vm171, %v261, 0.0
    %v322 = vsel %vm172, %v249, 0.0
    %v323 = vsel %vm173, %v253, 0.0
    %v324 = vsel %vm174, %v257, 0.0
    %v325 = vsel %vm175, %v261, 0.0
    %v326 = vsel %vm176, %v249, 0.0
    %v327 = vsel %vm177, %v253, 0.0
    %v328 = vsel %vm178, %v257, 0.0
    %v329 = vsel %vm179, %v261, 0.0
    %v330 = vsel %vm180, %v249, 0.0
    %v331 = vsel %vm181, %v253, 0.0
    %v332 = vsel %vm182, %v257, 0.0
    %v333 = vsel %vm183, %v261, 0.0
    %v334 = vsel %vm184, %v249, 0.0
    %v335 = vsel %vm185, %v253, 0.0
    %v336 = vsel %vm186, %v257, 0.0
    %v337 = vsel %vm187, %v261, 0.0
    %v338 = vsel %vm188, %v249, 0.0
    %v339 = vsel %vm189, %v253, 0.0
    %v340 = vsel %vm190, %v257, 0.0
    %v341 = vsel %vm191, %v261, 0.0
    %v342 = vsel %vm192, %v249, 0.0
    %v343 = vsel %vm193, %v253, 0.0
    %v344 = vsel %vm194, %v257, 0.0
    %v345 = vsel %vm195, %v261, 0.0
    %v346 = vsel %vm196, %v249, 0.0
    %v347 = vsel %vm197, %v253, 0.0
    %v348 = vsel %vm198, %v257, 0.0
    %v349 = vsel %vm199, %v261, 0.0
    %v350 = vsel %vm200, %v249, 0.0
    %v351 = vsel %vm201, %v253, 0.0
    %v352 = vsel %vm202, %v257, 0.0
    %v353 = vsel %vm203, %v261, 0.0
    %v354 = vsel %vm204, %v249, 0.0
    %v355 = vsel %vm205, %v253, 0.0
    %v356 = vsel %vm206, %v257, 0.0
    %v357 = vsel %vm207, %v261, 0.0
    %v358 = vsel %vm208, %v249, 0.0
    %v359 = vsel %vm209, %v253, 0.0
    %v360 = vsel %vm210, %v257, 0.0
    %v361 = vsel %vm211, %v261, 0.0
    %v362 = vsel %vm212, %v249, 0.0
    %v363 = vsel %vm213, %v253, 0.0
    %v364 = vsel %vm214, %v257, 0.0
    %v365 = vsel %vm215, %v261, 0.0
    %v366 = vsel %vm216, %v249, 0.0
    %v367 = vsel %vm217, %v253, 0.0
    %v368 = vsel %vm218, %v257, 0.0
    %v369 = vsel %vm219, %v261, 0.0
    %v370 = vsel %vm220, %v249, 0.0
    %v371 = vsel %vm221, %v253, 0.0
    %v372 = vsel %vm222, %v257, 0.0
    %v373 = vsel %vm223, %v261, 0.0
    %v374 = vsel %vm224, %v249, 0.0
    %v375 = vsel %vm225, %v253, 0.0
    %v376 = vsel %vm226, %v257, 0.0
    %v377 = vsel %vm227, %v261, 0.0
    %v378 = vsel %vm228, %v249, 0.0
    %v379 = vsel %vm229, %v253, 0.0
    %v380 = vsel %vm230, %v257, 0.0
    %v381 = vsel %vm231, %v261, 0.0
    %v382 = vsel %vm232, %v249, 0.0
    %v383 = vsel %vm233, %v253, 0.0
    %v384 = vsel %vm234, %v257, 0.0
    %v385 = vsel %vm235, %v261, 0.0
    %v386 = vsel %vm236, %v249, 0.0
    %v387 = vsel %vm237, %v253, 0.0
    %v388 = vsel %vm238, %v257, 0.0
    %v389 = vsel %vm239, %v261, 0.0
    %v390 = vsel %vm240, %v249, 0.0
    %v391 = vsel %vm241, %v253, 0.0
    %v392 = vsel %vm242, %v257, 0.0
    %v393 = vsel %vm243, %v261, 0.0
    %v394 = vlaneseq
    %v395 = vshrl.u32 %v394, 7
    %v396 = vsub.s32 0, %v395
    %v397 = vrot.slane %v63, %v396
    %v398 = vlaneseq
    %v399 = vshrl.u32 %v398, 7
    %v400 = vsub.s32 1, %v399
    %v401 = vrot.slane %v63, %v400
    %v402 = vlaneseq
    %v403 = vshrl.u32 %v402, 7
    %v404 = vsub.s32 2, %v403
    %v405 = vrot.slane %v63, %v404
    %v406 = vlaneseq
    %v407 = vshrl.u32 %v406, 7
    %v408 = vsub.s32 3, %v407
    %v409 = vrot.slane %v63, %v408
    %vm410 = vcmp.eq.s32.totalorder %v68, %v397
    %vm411 = vcmp.eq.s32.totalorder %v68, %v401
    %vm412 = vcmp.eq.s32.totalorder %v68, %v405
    %vm413 = vcmp.eq.s32.totalorder %v68, %v409
    %vm414 = vcmp.eq.s32.totalorder %v69, %v397
    %vm415 = vcmp.eq.s32.totalorder %v69, %v401
    %vm416 = vcmp.eq.s32.totalorder %v69, %v405
    %vm417 = vcmp.eq.s32.totalorder %v69, %v409
    %vm418 = vcmp.eq.s32.totalorder %v70, %v397
    %vm419 = vcmp.eq.s32.totalorder %v70, %v401
    %vm420 = vcmp.eq.s32.totalorder %v70, %v405
    %vm421 = vcmp.eq.s32.totalorder %v70, %v409
    %vm422 = vcmp.eq.s32.totalorder %v71, %v397
    %vm423 = vcmp.eq.s32.totalorder %v71, %v401
    %vm424 = vcmp.eq.s32.totalorder %v71, %v405
    %vm425 = vcmp.eq.s32.totalorder %v71, %v409
    %vm426 = vcmp.eq.s32.totalorder %v72, %v397
    %vm427 = vcmp.eq.s32.totalorder %v72, %v401
    %vm428 = vcmp.eq.s32.totalorder %v72, %v405
    %vm429 = vcmp.eq.s32.totalorder %v72, %v409
    %vm430 = vcmp.eq.s32.totalorder %v73, %v397
    %vm431 = vcmp.eq.s32.totalorder %v73, %v401
    %vm432 = vcmp.eq.s32.totalorder %v73, %v405
    %vm433 = vcmp.eq.s32.totalorder %v73, %v409
    %vm434 = vcmp.eq.s32.totalorder %v74, %v397
    %vm435 = vcmp.eq.s32.totalorder %v74, %v401
    %vm436 = vcmp.eq.s32.totalorder %v74, %v405
    %vm437 = vcmp.eq.s32.totalorder %v74, %v409
    %vm438 = vcmp.eq.s32.totalorder %v75, %v397
    %vm439 = vcmp.eq.s32.totalorder %v75, %v401
    %vm440 = vcmp.eq.s32.totalorder %v75, %v405
    %vm441 = vcmp.eq.s32.totalorder %v75, %v409
    %vm442 = vcmp.eq.s32.totalorder %v76, %v397
    %vm443 = vcmp.eq.s32.totalorder %v76, %v401
    %vm444 = vcmp.eq.s32.totalorder %v76, %v405
    %vm445 = vcmp.eq.s32.totalorder %v76, %v409
    %vm446 = vcmp.eq.s32.totalorder %v77, %v397
    %vm447 = vcmp.eq.s32.totalorder %v77, %v401
    %vm448 = vcmp.eq.s32.totalorder %v77, %v405
    %vm449 = vcmp.eq.s32.totalorder %v77, %v409
    %vm450 = vcmp.eq.s32.totalorder %v78, %v397
    %vm451 = vcmp.eq.s32.totalorder %v78, %v401
    %vm452 = vcmp.eq.s32.totalorder %v78, %v405
    %vm453 = vcmp.eq.s32.totalorder %v78, %v409
    %vm454 = vcmp.eq.s32.totalorder %v79, %v397
    %vm455 = vcmp.eq.s32.totalorder %v79, %v401
    %vm456 = vcmp.eq.s32.totalorder %v79, %v405
    %vm457 = vcmp.eq.s32.totalorder %v79, %v409
    %vm458 = vcmp.eq.s32.totalorder %v80, %v397
    %vm459 = vcmp.eq.s32.totalorder %v80, %v401
    %vm460 = vcmp.eq.s32.totalorder %v80, %v405
    %vm461 = vcmp.eq.s32.totalorder %v80, %v409
    %vm462 = vcmp.eq.s32.totalorder %v81, %v397
    %vm463 = vcmp.eq.s32.totalorder %v81, %v401
    %vm464 = vcmp.eq.s32.totalorder %v81, %v405
    %vm465 = vcmp.eq.s32.totalorder %v81, %v409
    %vm466 = vcmp.eq.s32.totalorder %v82, %v397
    %vm467 = vcmp.eq.s32.totalorder %v82, %v401
    %vm468 = vcmp.eq.s32.totalorder %v82, %v405
    %vm469 = vcmp.eq.s32.totalorder %v82, %v409
    %vm470 = vcmp.eq.s32.totalorder %v83, %v397
    %vm471 = vcmp.eq.s32.totalorder %v83, %v401
    %vm472 = vcmp.eq.s32.totalorder %v83, %v405
    %vm473 = vcmp.eq.s32.totalorder %v83, %v409
    %vm474 = vcmp.eq.s32.totalorder %v84, %v397
    %vm475 = vcmp.eq.s32.totalorder %v84, %v401
    %vm476 = vcmp.eq.s32.totalorder %v84, %v405
    %vm477 = vcmp.eq.s32.totalorder %v84, %v409
    %vm478 = vcmp.eq.s32.totalorder %v85, %v397
    %vm479 = vcmp.eq.s32.totalorder %v85, %v401
    %vm480 = vcmp.eq.s32.totalorder %v85, %v405
    %vm481 = vcmp.eq.s32.totalorder %v85, %v409
    %vm482 = vcmp.eq.s32.totalorder %v86, %v397
    %vm483 = vcmp.eq.s32.totalorder %v86, %v401
    %vm484 = vcmp.eq.s32.totalorder %v86, %v405
    %vm485 = vcmp.eq.s32.totalorder %v86, %v409
    %vm486 = vcmp.eq.s32.totalorder %v87, %v397
    %vm487 = vcmp.eq.s32.totalorder %v87, %v401
    %vm488 = vcmp.eq.s32.totalorder %v87, %v405
    %vm489 = vcmp.eq.s32.totalorder %v87, %v409
    %vm490 = vcmp.eq.s32.totalorder %v88, %v397
    %vm491 = vcmp.eq.s32.totalorder %v88, %v401
    %vm492 = vcmp.eq.s32.totalorder %v88, %v405
    %vm493 = vcmp.eq.s32.totalorder %v88, %v409
    %vm494 = vcmp.eq.s32.totalorder %v89, %v397
    %vm495 = vcmp.eq.s32.totalorder %v89, %v401
    %vm496 = vcmp.eq.s32.totalorder %v89, %v405
    %vm497 = vcmp.eq.s32.totalorder %v89, %v409
    %vm498 = vcmp.eq.s32.totalorder %v90, %v397
    %vm499 = vcmp.eq.s32.totalorder %v90, %v401
    %vm500 = vcmp.eq.s32.totalorder %v90, %v405
    %vm501 = vcmp.eq.s32.totalorder %v90, %v409
    %vm502 = vcmp.eq.s32.totalorder %v91, %v397
    %vm503 = vcmp.eq.s32.totalorder %v91, %v401
    %vm504 = vcmp.eq.s32.totalorder %v91, %v405
    %vm505 = vcmp.eq.s32.totalorder %v91, %v409
    %vm506 = vcmp.eq.s32.totalorder %v92, %v397
    %vm507 = vcmp.eq.s32.totalorder %v92, %v401
    %vm508 = vcmp.eq.s32.totalorder %v92, %v405
    %vm509 = vcmp.eq.s32.totalorder %v92, %v409
    %vm510 = vcmp.eq.s32.totalorder %v93, %v397
    %vm511 = vcmp.eq.s32.totalorder %v93, %v401
    %vm512 = vcmp.eq.s32.totalorder %v93, %v405
    %vm513 = vcmp.eq.s32.totalorder %v93, %v409
    %vm514 = vcmp.eq.s32.totalorder %v94, %v397
    %vm515 = vcmp.eq.s32.totalorder %v94, %v401
    %vm516 = vcmp.eq.s32.totalorder %v94, %v405
    %vm517 = vcmp.eq.s32.totalorder %v94, %v409
    %vm518 = vcmp.eq.s32.totalorder %v95, %v397
    %vm519 = vcmp.eq.s32.totalorder %v95, %v401
    %vm520 = vcmp.eq.s32.totalorder %v95, %v405
    %vm521 = vcmp.eq.s32.totalorder %v95, %v409
    %vm522 = vcmp.eq.s32.totalorder %v96, %v397
    %vm523 = vcmp.eq.s32.totalorder %v96, %v401
    %vm524 = vcmp.eq.s32.totalorder %v96, %v405
    %vm525 = vcmp.eq.s32.totalorder %v96, %v409
    %vm526 = vcmp.eq.s32.totalorder %v97, %v397
    %vm527 = vcmp.eq.s32.totalorder %v97, %v401
    %vm528 = vcmp.eq.s32.totalorder %v97, %v405
    %vm529 = vcmp.eq.s32.totalorder %v97, %v409
    %vm530 = vcmp.eq.s32.totalorder %v98, %v397
    %vm531 = vcmp.eq.s32.totalorder %v98, %v401
    %vm532 = vcmp.eq.s32.totalorder %v98, %v405
    %vm533 = vcmp.eq.s32.totalorder %v98, %v409
    %vm534 = vcmp.eq.s32.totalorder %v99, %v397
    %vm535 = vcmp.eq.s32.totalorder %v99, %v401
    %vm536 = vcmp.eq.s32.totalorder %v99, %v405
    %vm537 = vcmp.eq.s32.totalorder %v99, %v409
    %v538 = vmul.f32 %v52, %v49
    %v540 = vlaneseq
    %v541 = vshrl.u32 %v540, 7
    %v542 = vsub.s32 0, %v541
    %v543 = vrot.slane %v538, %v542
    %v544 = vlaneseq
    %v545 = vshrl.u32 %v544, 7
    %v546 = vsub.s32 1, %v545
    %v547 = vrot.slane %v538, %v546
    %v548 = vlaneseq
    %v549 = vshrl.u32 %v548, 7
    %v550 = vsub.s32 2, %v549
    %v551 = vrot.slane %v538, %v550
    %v552 = vlaneseq
    %v553 = vshrl.u32 %v552, 7
    %v554 = vsub.s32 3, %v553
    %v555 = vrot.slane %v538, %v554
    %v560 = vsel %vm410, %v543, 0.0
    %v561 = vsel %vm411, %v547, 0.0
    %v562 = vsel %vm412, %v551, 0.0
    %v563 = vsel %vm413, %v555, 0.0
    %v564 = vsel %vm414, %v543, 0.0
    %v565 = vsel %vm415, %v547, 0.0
    %v566 = vsel %vm416, %v551, 0.0
    %v567 = vsel %vm417, %v555, 0.0
    %v568 = vsel %vm418, %v543, 0.0
    %v569 = vsel %vm419, %v547, 0.0
    %v570 = vsel %vm420, %v551, 0.0
    %v571 = vsel %vm421, %v555, 0.0
    %v572 = vsel %vm422, %v543, 0.0
    %v573 = vsel %vm423, %v547, 0.0
    %v574 = vsel %vm424, %v551, 0.0
    %v575 = vsel %vm425, %v555, 0.0
    %v576 = vsel %vm426, %v543, 0.0
    %v577 = vsel %vm427, %v547, 0.0
    %v578 = vsel %vm428, %v551, 0.0
    %v579 = vsel %vm429, %v555, 0.0
    %v580 = vsel %vm430, %v543, 0.0
    %v581 = vsel %vm431, %v547, 0.0
    %v582 = vsel %vm432, %v551, 0.0
    %v583 = vsel %vm433, %v555, 0.0
    %v584 = vsel %vm434, %v543, 0.0
    %v585 = vsel %vm435, %v547, 0.0
    %v586 = vsel %vm436, %v551, 0.0
    %v587 = vsel %vm437, %v555, 0.0
    %v588 = vsel %vm438, %v543, 0.0
    %v589 = vsel %vm439, %v547, 0.0
    %v590 = vsel %vm440, %v551, 0.0
    %v591 = vsel %vm441, %v555, 0.0
    %v592 = vsel %vm442, %v543, 0.0
    %v593 = vsel %vm443, %v547, 0.0
    %v594 = vsel %vm444, %v551, 0.0
    %v595 = vsel %vm445, %v555, 0.0
    %v596 = vsel %vm446, %v543, 0.0
    %v597 = vsel %vm447, %v547, 0.0
    %v598 = vsel %vm448, %v551, 0.0
    %v599 = vsel %vm449, %v555, 0.0
    %v600 = vsel %vm450, %v543, 0.0
    %v601 = vsel %vm451, %v547, 0.0
    %v602 = vsel %vm452, %v551, 0.0
    %v603 = vsel %vm453, %v555, 0.0
    %v604 = vsel %vm454, %v543, 0.0
    %v605 = vsel %vm455, %v547, 0.0
    %v606 = vsel %vm456, %v551, 0.0
    %v607 = vsel %vm457, %v555, 0.0
    %v608 = vsel %vm458, %v543, 0.0
    %v609 = vsel %vm459, %v547, 0.0
    %v610 = vsel %vm460, %v551, 0.0
    %v611 = vsel %vm461, %v555, 0.0
    %v612 = vsel %vm462, %v543, 0.0
    %v613 = vsel %vm463, %v547, 0.0
    %v614 = vsel %vm464, %v551, 0.0
    %v615 = vsel %vm465, %v555, 0.0
    %v616 = vsel %vm466, %v543, 0.0
    %v617 = vsel %vm467, %v547, 0.0
    %v618 = vsel %vm468, %v551, 0.0
    %v619 = vsel %vm469, %v555, 0.0
    %v620 = vsel %vm470, %v543, 0.0
    %v621 = vsel %vm471, %v547, 0.0
    %v622 = vsel %vm472, %v551, 0.0
    %v623 = vsel %vm473, %v555, 0.0
    %v624 = vsel %vm474, %v543, 0.0
    %v625 = vsel %vm475, %v547, 0.0
    %v626 = vsel %vm476, %v551, 0.0
    %v627 = vsel %vm477, %v555, 0.0
    %v628 = vsel %vm478, %v543, 0.0
    %v629 = vsel %vm479, %v547, 0.0
    %v630 = vsel %vm480, %v551, 0.0
    %v631 = vsel %vm481, %v555, 0.0
    %v632 = vsel %vm482, %v543, 0.0
    %v633 = vsel %vm483, %v547, 0.0
    %v634 = vsel %vm484, %v551, 0.0
    %v635 = vsel %vm485, %v555, 0.0
    %v636 = vsel %vm486, %v543, 0.0
    %v637 = vsel %vm487, %v547, 0.0
    %v638 = vsel %vm488, %v551, 0.0
    %v639 = vsel %vm489, %v555, 0.0
    %v640 = vsel %vm490, %v543, 0.0
    %v641 = vsel %vm491, %v547, 0.0
    %v642 = vsel %vm492, %v551, 0.0
    %v643 = vsel %vm493, %v555, 0.0
    %v644 = vsel %vm494, %v543, 0.0
    %v645 = vsel %vm495, %v547, 0.0
    %v646 = vsel %vm496, %v551, 0.0
    %v647 = vsel %vm497, %v555, 0.0
    %v648 = vsel %vm498, %v543, 0.0
    %v649 = vsel %vm499, %v547, 0.0
    %v650 = vsel %vm500, %v551, 0.0
    %v651 = vsel %vm501, %v555, 0.0
    %v652 = vsel %vm502, %v543, 0.0
    %v653 = vsel %vm503, %v547, 0.0
    %v654 = vsel %vm504, %v551, 0.0
    %v655 = vsel %vm505, %v555, 0.0
    %v656 = vsel %vm506, %v543, 0.0
    %v657 = vsel %vm507, %v547, 0.0
    %v658 = vsel %vm508, %v551, 0.0
    %v659 = vsel %vm509, %v555, 0.0
    %v660 = vsel %vm510, %v543, 0.0
    %v661 = vsel %vm511, %v547, 0.0
    %v662 = vsel %vm512, %v551, 0.0
    %v663 = vsel %vm513, %v555, 0.0
    %v664 = vsel %vm514, %v543, 0.0
    %v665 = vsel %vm515, %v547, 0.0
    %v666 = vsel %vm516, %v551, 0.0
    %v667 = vsel %vm517, %v555, 0.0
    %v668 = vsel %vm518, %v543, 0.0
    %v669 = vsel %vm519, %v547, 0.0
    %v670 = vsel %vm520, %v551, 0.0
    %v671 = vsel %vm521, %v555, 0.0
    %v672 = vsel %vm522, %v543, 0.0
    %v673 = vsel %vm523, %v547, 0.0
    %v674 = vsel %vm524, %v551, 0.0
    %v675 = vsel %vm525, %v555, 0.0
    %v676 = vsel %vm526, %v543, 0.0
    %v677 = vsel %vm527, %v547, 0.0
    %v678 = vsel %vm528, %v551, 0.0
    %v679 = vsel %vm529, %v555, 0.0
    %v680 = vsel %vm530, %v543, 0.0
    %v681 = vsel %vm531, %v547, 0.0
    %v682 = vsel %vm532, %v551, 0.0
    %v683 = vsel %vm533, %v555, 0.0
    %v684 = vsel %vm534, %v543, 0.0
    %v685 = vsel %vm535, %v547, 0.0
    %v686 = vsel %vm536, %v551, 0.0
    %v687 = vsel %vm537, %v555, 0.0
    %v688 = vadd.f32 %v266, %v560
    %v689 = vadd.f32 %v267, %v561
    %v690 = vadd.f32 %v268, %v562
    %v691 = vadd.f32 %v269, %v563
    %v692 = vadd.f32 %v270, %v564
    %v693 = vadd.f32 %v271, %v565
    %v694 = vadd.f32 %v272, %v566
    %v695 = vadd.f32 %v273, %v567
    %v696 = vadd.f32 %v274, %v568
    %v697 = vadd.f32 %v275, %v569
    %v698 = vadd.f32 %v276, %v570
    %v699 = vadd.f32 %v277, %v571
    %v700 = vadd.f32 %v278, %v572
    %v701 = vadd.f32 %v279, %v573
    %v702 = vadd.f32 %v280, %v574
    %v703 = vadd.f32 %v281, %v575
    %v704 = vadd.f32 %v282, %v576
    %v705 = vadd.f32 %v283, %v577
    %v706 = vadd.f32 %v284, %v578
    %v707 = vadd.f32 %v285, %v579
    %v708 = vadd.f32 %v286, %v580
    %v709 = vadd.f32 %v287, %v581
    %v710 = vadd.f32 %v288, %v582
    %v711 = vadd.f32 %v289, %v583
    %v712 = vadd.f32 %v290, %v584
    %v713 = vadd.f32 %v291, %v585
    %v714 = vadd.f32 %v292, %v586
    %v715 = vadd.f32 %v293, %v587
    %v716 = vadd.f32 %v294, %v588
    %v717 = vadd.f32 %v295, %v589
    %v718 = vadd.f32 %v296, %v590
    %v719 = vadd.f32 %v297, %v591
    %v720 = vadd.f32 %v298, %v592
    %v721 = vadd.f32 %v299, %v593
    %v722 = vadd.f32 %v300, %v594
    %v723 = vadd.f32 %v301, %v595
    %v724 = vadd.f32 %v302, %v596
    %v725 = vadd.f32 %v303, %v597
    %v726 = vadd.f32 %v304, %v598
    %v727 = vadd.f32 %v305, %v599
    %v728 = vadd.f32 %v306, %v600
    %v729 = vadd.f32 %v307, %v601
    %v730 = vadd.f32 %v308, %v602
    %v731 = vadd.f32 %v309, %v603
    %v732 = vadd.f32 %v310, %v604
    %v733 = vadd.f32 %v311, %v605
    %v734 = vadd.f32 %v312, %v606
    %v735 = vadd.f32 %v313, %v607
    %v736 = vadd.f32 %v314, %v608
    %v737 = vadd.f32 %v315, %v609
    %v738 = vadd.f32 %v316, %v610
    %v739 = vadd.f32 %v317, %v611
    %v740 = vadd.f32 %v318, %v612
    %v741 = vadd.f32 %v319, %v613
    %v742 = vadd.f32 %v320, %v614
    %v743 = vadd.f32 %v321, %v615
    %v744 = vadd.f32 %v322, %v616
    %v745 = vadd.f32 %v323, %v617
    %v746 = vadd.f32 %v324, %v618
    %v747 = vadd.f32 %v325, %v619
    %v748 = vadd.f32 %v326, %v620
    %v749 = vadd.f32 %v327, %v621
    %v750 = vadd.f32 %v328, %v622
    %v751 = vadd.f32 %v329, %v623
    %v752 = vadd.f32 %v330, %v624
    %v753 = vadd.f32 %v331, %v625
    %v754 = vadd.f32 %v332, %v626
    %v755 = vadd.f32 %v333, %v627
    %v756 = vadd.f32 %v334, %v628
    %v757 = vadd.f32 %v335, %v629
    %v758 = vadd.f32 %v336, %v630
    %v759 = vadd.f32 %v337, %v631
    %v760 = vadd.f32 %v338, %v632
    %v761 = vadd.f32 %v339, %v633
    %v762 = vadd.f32 %v340, %v634
    %v763 = vadd.f32 %v341, %v635
    %v764 = vadd.f32 %v342, %v636
    %v765 = vadd.f32 %v343, %v637
    %v766 = vadd.f32 %v344, %v638
    %v767 = vadd.f32 %v345, %v639
    %v768 = vadd.f32 %v346, %v640
    %v769 = vadd.f32 %v347, %v641
    %v770 = vadd.f32 %v348, %v642
    %v771 = vadd.f32 %v349, %v643
    %v772 = vadd.f32 %v350, %v644
    %v773 = vadd.f32 %v351, %v645
    %v774 = vadd.f32 %v352, %v646
    %v775 = vadd.f32 %v353, %v647
    %v776 = vadd.f32 %v354, %v648
    %v777 = vadd.f32 %v355, %v649
    %v778 = vadd.f32 %v356, %v650
    %v779 = vadd.f32 %v357, %v651
    %v780 = vadd.f32 %v358, %v652
    %v781 = vadd.f32 %v359, %v653
    %v782 = vadd.f32 %v360, %v654
    %v783 = vadd.f32 %v361, %v655
    %v784 = vadd.f32 %v362, %v656
    %v785 = vadd.f32 %v363, %v657
    %v786 = vadd.f32 %v364, %v658
    %v787 = vadd.f32 %v365, %v659
    %v788 = vadd.f32 %v366, %v660
    %v789 = vadd.f32 %v367, %v661
    %v790 = vadd.f32 %v368, %v662
    %v791 = vadd.f32 %v369, %v663
    %v792 = vadd.f32 %v370, %v664
    %v793 = vadd.f32 %v371, %v665
    %v794 = vadd.f32 %v372, %v666
    %v795 = vadd.f32 %v373, %v667
    %v796 = vadd.f32 %v374, %v668
    %v797 = vadd.f32 %v375, %v669
    %v798 = vadd.f32 %v376, %v670
    %v799 = vadd.f32 %v377, %v671
    %v800 = vadd.f32 %v378, %v672
    %v801 = vadd.f32 %v379, %v673
    %v802 = vadd.f32 %v380, %v674
    %v803 = vadd.f32 %v381, %v675
    %v804 = vadd.f32 %v382, %v676
    %v805 = vadd.f32 %v383, %v677
    %v806 = vadd.f32 %v384, %v678
    %v807 = vadd.f32 %v385, %v679
    %v808 = vadd.f32 %v386, %v680
    %v809 = vadd.f32 %v387, %v681
    %v810 = vadd.f32 %v388, %v682
    %v811 = vadd.f32 %v389, %v683
    %v812 = vadd.f32 %v390, %v684
    %v813 = vadd.f32 %v391, %v685
    %v814 = vadd.f32 %v392, %v686
    %v815 = vadd.f32 %v393, %v687
    %v816 = vlaneseq
    %v817 = vshrl.u32 %v816, 7
    %v818 = vsub.s32 0, %v817
    %v819 = vrot.slane %v65, %v818
    %v820 = vlaneseq
    %v821 = vshrl.u32 %v820, 7
    %v822 = vsub.s32 1, %v821
    %v823 = vrot.slane %v65, %v822
    %v824 = vlaneseq
    %v825 = vshrl.u32 %v824, 7
    %v826 = vsub.s32 2, %v825
    %v827 = vrot.slane %v65, %v826
    %v828 = vlaneseq
    %v829 = vshrl.u32 %v828, 7
    %v830 = vsub.s32 3, %v829
    %v831 = vrot.slane %v65, %v830
    %vm832 = vcmp.eq.s32.totalorder %v68, %v819
    %vm833 = vcmp.eq.s32.totalorder %v68, %v823
    %vm834 = vcmp.eq.s32.totalorder %v68, %v827
    %vm835 = vcmp.eq.s32.totalorder %v68, %v831
    %vm836 = vcmp.eq.s32.totalorder %v69, %v819
    %vm837 = vcmp.eq.s32.totalorder %v69, %v823
    %vm838 = vcmp.eq.s32.totalorder %v69, %v827
    %vm839 = vcmp.eq.s32.totalorder %v69, %v831
    %vm840 = vcmp.eq.s32.totalorder %v70, %v819
    %vm841 = vcmp.eq.s32.totalorder %v70, %v823
    %vm842 = vcmp.eq.s32.totalorder %v70, %v827
    %vm843 = vcmp.eq.s32.totalorder %v70, %v831
    %vm844 = vcmp.eq.s32.totalorder %v71, %v819
    %vm845 = vcmp.eq.s32.totalorder %v71, %v823
    %vm846 = vcmp.eq.s32.totalorder %v71, %v827
    %vm847 = vcmp.eq.s32.totalorder %v71, %v831
    %vm848 = vcmp.eq.s32.totalorder %v72, %v819
    %vm849 = vcmp.eq.s32.totalorder %v72, %v823
    %vm850 = vcmp.eq.s32.totalorder %v72, %v827
    %vm851 = vcmp.eq.s32.totalorder %v72, %v831
    %vm852 = vcmp.eq.s32.totalorder %v73, %v819
    %vm853 = vcmp.eq.s32.totalorder %v73, %v823
    %vm854 = vcmp.eq.s32.totalorder %v73, %v827
    %vm855 = vcmp.eq.s32.totalorder %v73, %v831
    %vm856 = vcmp.eq.s32.totalorder %v74, %v819
    %vm857 = vcmp.eq.s32.totalorder %v74, %v823
    %vm858 = vcmp.eq.s32.totalorder %v74, %v827
    %vm859 = vcmp.eq.s32.totalorder %v74, %v831
    %vm860 = vcmp.eq.s32.totalorder %v75, %v819
    %vm861 = vcmp.eq.s32.totalorder %v75, %v823
    %vm862 = vcmp.eq.s32.totalorder %v75, %v827
    %vm863 = vcmp.eq.s32.totalorder %v75, %v831
    %vm864 = vcmp.eq.s32.totalorder %v76, %v819
    %vm865 = vcmp.eq.s32.totalorder %v76, %v823
    %vm866 = vcmp.eq.s32.totalorder %v76, %v827
    %vm867 = vcmp.eq.s32.totalorder %v76, %v831
    %vm868 = vcmp.eq.s32.totalorder %v77, %v819
    %vm869 = vcmp.eq.s32.totalorder %v77, %v823
    %vm870 = vcmp.eq.s32.totalorder %v77, %v827
    %vm871 = vcmp.eq.s32.totalorder %v77, %v831
    %vm872 = vcmp.eq.s32.totalorder %v78, %v819
    %vm873 = vcmp.eq.s32.totalorder %v78, %v823
    %vm874 = vcmp.eq.s32.totalorder %v78, %v827
    %vm875 = vcmp.eq.s32.totalorder %v78, %v831
    %vm876 = vcmp.eq.s32.totalorder %v79, %v819
    %vm877 = vcmp.eq.s32.totalorder %v79, %v823
    %vm878 = vcmp.eq.s32.totalorder %v79, %v827
    %vm879 = vcmp.eq.s32.totalorder %v79, %v831
    %vm880 = vcmp.eq.s32.totalorder %v80, %v819
    %vm881 = vcmp.eq.s32.totalorder %v80, %v823
    %vm882 = vcmp.eq.s32.totalorder %v80, %v827
    %vm883 = vcmp.eq.s32.totalorder %v80, %v831
    %vm884 = vcmp.eq.s32.totalorder %v81, %v819
    %vm885 = vcmp.eq.s32.totalorder %v81, %v823
    %vm886 = vcmp.eq.s32.totalorder %v81, %v827
    %vm887 = vcmp.eq.s32.totalorder %v81, %v831
    %vm888 = vcmp.eq.s32.totalorder %v82, %v819
    %vm889 = vcmp.eq.s32.totalorder %v82, %v823
    %vm890 = vcmp.eq.s32.totalorder %v82, %v827
    %vm891 = vcmp.eq.s32.totalorder %v82, %v831
    %vm892 = vcmp.eq.s32.totalorder %v83, %v819
    %vm893 = vcmp.eq.s32.totalorder %v83, %v823
    %vm894 = vcmp.eq.s32.totalorder %v83, %v827
    %vm895 = vcmp.eq.s32.totalorder %v83, %v831
    %vm896 = vcmp.eq.s32.totalorder %v84, %v819
    %vm897 = vcmp.eq.s32.totalorder %v84, %v823
    %vm898 = vcmp.eq.s32.totalorder %v84, %v827
    %vm899 = vcmp.eq.s32.totalorder %v84, %v831
    %vm900 = vcmp.eq.s32.totalorder %v85, %v819
    %vm901 = vcmp.eq.s32.totalorder %v85, %v823
    %vm902 = vcmp.eq.s32.totalorder %v85, %v827
    %vm903 = vcmp.eq.s32.totalorder %v85, %v831
    %vm904 = vcmp.eq.s32.totalorder %v86, %v819
    %vm905 = vcmp.eq.s32.totalorder %v86, %v823
    %vm906 = vcmp.eq.s32.totalorder %v86, %v827
    %vm907 = vcmp.eq.s32.totalorder %v86, %v831
    %vm908 = vcmp.eq.s32.totalorder %v87, %v819
    %vm909 = vcmp.eq.s32.totalorder %v87, %v823
    %vm910 = vcmp.eq.s32.totalorder %v87, %v827
    %vm911 = vcmp.eq.s32.totalorder %v87, %v831
    %vm912 = vcmp.eq.s32.totalorder %v88, %v819
    %vm913 = vcmp.eq.s32.totalorder %v88, %v823
    %vm914 = vcmp.eq.s32.totalorder %v88, %v827
    %vm915 = vcmp.eq.s32.totalorder %v88, %v831
    %vm916 = vcmp.eq.s32.totalorder %v89, %v819
    %vm917 = vcmp.eq.s32.totalorder %v89, %v823
    %vm918 = vcmp.eq.s32.totalorder %v89, %v827
    %vm919 = vcmp.eq.s32.totalorder %v89, %v831
    %vm920 = vcmp.eq.s32.totalorder %v90, %v819
    %vm921 = vcmp.eq.s32.totalorder %v90, %v823
    %vm922 = vcmp.eq.s32.totalorder %v90, %v827
    %vm923 = vcmp.eq.s32.totalorder %v90, %v831
    %vm924 = vcmp.eq.s32.totalorder %v91, %v819
    %vm925 = vcmp.eq.s32.totalorder %v91, %v823
    %vm926 = vcmp.eq.s32.totalorder %v91, %v827
    %vm927 = vcmp.eq.s32.totalorder %v91, %v831
    %vm928 = vcmp.eq.s32.totalorder %v92, %v819
    %vm929 = vcmp.eq.s32.totalorder %v92, %v823
    %vm930 = vcmp.eq.s32.totalorder %v92, %v827
    %vm931 = vcmp.eq.s32.totalorder %v92, %v831
    %vm932 = vcmp.eq.s32.totalorder %v93, %v819
    %vm933 = vcmp.eq.s32.totalorder %v93, %v823
    %vm934 = vcmp.eq.s32.totalorder %v93, %v827
    %vm935 = vcmp.eq.s32.totalorder %v93, %v831
    %vm936 = vcmp.eq.s32.totalorder %v94, %v819
    %vm937 = vcmp.eq.s32.totalorder %v94, %v823
    %vm938 = vcmp.eq.s32.totalorder %v94, %v827
    %vm939 = vcmp.eq.s32.totalorder %v94, %v831
    %vm940 = vcmp.eq.s32.totalorder %v95, %v819
    %vm941 = vcmp.eq.s32.totalorder %v95, %v823
    %vm942 = vcmp.eq.s32.totalorder %v95, %v827
    %vm943 = vcmp.eq.s32.totalorder %v95, %v831
    %vm944 = vcmp.eq.s32.totalorder %v96, %v819
    %vm945 = vcmp.eq.s32.totalorder %v96, %v823
    %vm946 = vcmp.eq.s32.totalorder %v96, %v827
    %vm947 = vcmp.eq.s32.totalorder %v96, %v831
    %vm948 = vcmp.eq.s32.totalorder %v97, %v819
    %vm949 = vcmp.eq.s32.totalorder %v97, %v823
    %vm950 = vcmp.eq.s32.totalorder %v97, %v827
    %vm951 = vcmp.eq.s32.totalorder %v97, %v831
    %vm952 = vcmp.eq.s32.totalorder %v98, %v819
    %vm953 = vcmp.eq.s32.totalorder %v98, %v823
    %vm954 = vcmp.eq.s32.totalorder %v98, %v827
    %vm955 = vcmp.eq.s32.totalorder %v98, %v831
    %vm956 = vcmp.eq.s32.totalorder %v99, %v819
    %vm957 = vcmp.eq.s32.totalorder %v99, %v823
    %vm958 = vcmp.eq.s32.totalorder %v99, %v827
    %vm959 = vcmp.eq.s32.totalorder %v99, %v831
    %v960 = vmul.f32 %v50, %v51
    %v962 = vlaneseq
    %v963 = vshrl.u32 %v962, 7
    %v964 = vsub.s32 0, %v963
    %v965 = vrot.slane %v960, %v964
    %v966 = vlaneseq
    %v967 = vshrl.u32 %v966, 7
    %v968 = vsub.s32 1, %v967
    %v969 = vrot.slane %v960, %v968
    %v970 = vlaneseq
    %v971 = vshrl.u32 %v970, 7
    %v972 = vsub.s32 2, %v971
    %v973 = vrot.slane %v960, %v972
    %v974 = vlaneseq
    %v975 = vshrl.u32 %v974, 7
    %v976 = vsub.s32 3, %v975
    %v977 = vrot.slane %v960, %v976
    %v982 = vsel %vm832, %v965, 0.0
    %v983 = vsel %vm833, %v969, 0.0
    %v984 = vsel %vm834, %v973, 0.0
    %v985 = vsel %vm835, %v977, 0.0
    %v986 = vsel %vm836, %v965, 0.0
    %v987 = vsel %vm837, %v969, 0.0
    %v988 = vsel %vm838, %v973, 0.0
    %v989 = vsel %vm839, %v977, 0.0
    %v990 = vsel %vm840, %v965, 0.0
    %v991 = vsel %vm841, %v969, 0.0
    %v992 = vsel %vm842, %v973, 0.0
    %v993 = vsel %vm843, %v977, 0.0
    %v994 = vsel %vm844, %v965, 0.0
    %v995 = vsel %vm845, %v969, 0.0
    %v996 = vsel %vm846, %v973, 0.0
    %v997 = vsel %vm847, %v977, 0.0
    %v998 = vsel %vm848, %v965, 0.0
    %v999 = vsel %vm849, %v969, 0.0
    %v1000 = vsel %vm850, %v973, 0.0
    %v1001 = vsel %vm851, %v977, 0.0
    %v1002 = vsel %vm852, %v965, 0.0
    %v1003 = vsel %vm853, %v969, 0.0
    %v1004 = vsel %vm854, %v973, 0.0
    %v1005 = vsel %vm855, %v977, 0.0
    %v1006 = vsel %vm856, %v965, 0.0
    %v1007 = vsel %vm857, %v969, 0.0
    %v1008 = vsel %vm858, %v973, 0.0
    %v1009 = vsel %vm859, %v977, 0.0
    %v1010 = vsel %vm860, %v965, 0.0
    %v1011 = vsel %vm861, %v969, 0.0
    %v1012 = vsel %vm862, %v973, 0.0
    %v1013 = vsel %vm863, %v977, 0.0
    %v1014 = vsel %vm864, %v965, 0.0
    %v1015 = vsel %vm865, %v969, 0.0
    %v1016 = vsel %vm866, %v973, 0.0
    %v1017 = vsel %vm867, %v977, 0.0
    %v1018 = vsel %vm868, %v965, 0.0
    %v1019 = vsel %vm869, %v969, 0.0
    %v1020 = vsel %vm870, %v973, 0.0
    %v1021 = vsel %vm871, %v977, 0.0
    %v1022 = vsel %vm872, %v965, 0.0
    %v1023 = vsel %vm873, %v969, 0.0
    %v1024 = vsel %vm874, %v973, 0.0
    %v1025 = vsel %vm875, %v977, 0.0
    %v1026 = vsel %vm876, %v965, 0.0
    %v1027 = vsel %vm877, %v969, 0.0
    %v1028 = vsel %vm878, %v973, 0.0
    %v1029 = vsel %vm879, %v977, 0.0
    %v1030 = vsel %vm880, %v965, 0.0
    %v1031 = vsel %vm881, %v969, 0.0
    %v1032 = vsel %vm882, %v973, 0.0
    %v1033 = vsel %vm883, %v977, 0.0
    %v1034 = vsel %vm884, %v965, 0.0
    %v1035 = vsel %vm885, %v969, 0.0
    %v1036 = vsel %vm886, %v973, 0.0
    %v1037 = vsel %vm887, %v977, 0.0
    %v1038 = vsel %vm888, %v965, 0.0
    %v1039 = vsel %vm889, %v969, 0.0
    %v1040 = vsel %vm890, %v973, 0.0
    %v1041 = vsel %vm891, %v977, 0.0
    %v1042 = vsel %vm892, %v965, 0.0
    %v1043 = vsel %vm893, %v969, 0.0
    %v1044 = vsel %vm894, %v973, 0.0
    %v1045 = vsel %vm895, %v977, 0.0
    %v1046 = vsel %vm896, %v965, 0.0
    %v1047 = vsel %vm897, %v969, 0.0
    %v1048 = vsel %vm898, %v973, 0.0
    %v1049 = vsel %vm899, %v977, 0.0
    %v1050 = vsel %vm900, %v965, 0.0
    %v1051 = vsel %vm901, %v969, 0.0
    %v1052 = vsel %vm902, %v973, 0.0
    %v1053 = vsel %vm903, %v977, 0.0
    %v1054 = vsel %vm904, %v965, 0.0
    %v1055 = vsel %vm905, %v969, 0.0
    %v1056 = vsel %vm906, %v973, 0.0
    %v1057 = vsel %vm907, %v977, 0.0
    %v1058 = vsel %vm908, %v965, 0.0
    %v1059 = vsel %vm909, %v969, 0.0
    %v1060 = vsel %vm910, %v973, 0.0
    %v1061 = vsel %vm911, %v977, 0.0
    %v1062 = vsel %vm912, %v965, 0.0
    %v1063 = vsel %vm913, %v969, 0.0
    %v1064 = vsel %vm914, %v973, 0.0
    %v1065 = vsel %vm915, %v977, 0.0
    %v1066 = vsel %vm916, %v965, 0.0
    %v1067 = vsel %vm917, %v969, 0.0
    %v1068 = vsel %vm918, %v973, 0.0
    %v1069 = vsel %vm919, %v977, 0.0
    %v1070 = vsel %vm920, %v965, 0.0
    %v1071 = vsel %vm921, %v969, 0.0
    %v1072 = vsel %vm922, %v973, 0.0
    %v1073 = vsel %vm923, %v977, 0.0
    %v1074 = vsel %vm924, %v965, 0.0
    %v1075 = vsel %vm925, %v969, 0.0
    %v1076 = vsel %vm926, %v973, 0.0
    %v1077 = vsel %vm927, %v977, 0.0
    %v1078 = vsel %vm928, %v965, 0.0
    %v1079 = vsel %vm929, %v969, 0.0
    %v1080 = vsel %vm930, %v973, 0.0
    %v1081 = vsel %vm931, %v977, 0.0
    %v1082 = vsel %vm932, %v965, 0.0
    %v1083 = vsel %vm933, %v969, 0.0
    %v1084 = vsel %vm934, %v973, 0.0
    %v1085 = vsel %vm935, %v977, 0.0
    %v1086 = vsel %vm936, %v965, 0.0
    %v1087 = vsel %vm937, %v969, 0.0
    %v1088 = vsel %vm938, %v973, 0.0
    %v1089 = vsel %vm939, %v977, 0.0
    %v1090 = vsel %vm940, %v965, 0.0
    %v1091 = vsel %vm941, %v969, 0.0
    %v1092 = vsel %vm942, %v973, 0.0
    %v1093 = vsel %vm943, %v977, 0.0
    %v1094 = vsel %vm944, %v965, 0.0
    %v1095 = vsel %vm945, %v969, 0.0
    %v1096 = vsel %vm946, %v973, 0.0
    %v1097 = vsel %vm947, %v977, 0.0
    %v1098 = vsel %vm948, %v965, 0.0
    %v1099 = vsel %vm949, %v969, 0.0
    %v1100 = vsel %vm950, %v973, 0.0
    %v1101 = vsel %vm951, %v977, 0.0
    %v1102 = vsel %vm952, %v965, 0.0
    %v1103 = vsel %vm953, %v969, 0.0
    %v1104 = vsel %vm954, %v973, 0.0
    %v1105 = vsel %vm955, %v977, 0.0
    %v1106 = vsel %vm956, %v965, 0.0
    %v1107 = vsel %vm957, %v969, 0.0
    %v1108 = vsel %vm958, %v973, 0.0
    %v1109 = vsel %vm959, %v977, 0.0
    %v1110 = vadd.f32 %v688, %v982
    %v1111 = vadd.f32 %v689, %v983
    %v1112 = vadd.f32 %v690, %v984
    %v1113 = vadd.f32 %v691, %v985
    %v1114 = vadd.f32 %v692, %v986
    %v1115 = vadd.f32 %v693, %v987
    %v1116 = vadd.f32 %v694, %v988
    %v1117 = vadd.f32 %v695, %v989
    %v1118 = vadd.f32 %v696, %v990
    %v1119 = vadd.f32 %v697, %v991
    %v1120 = vadd.f32 %v698, %v992
    %v1121 = vadd.f32 %v699, %v993
    %v1122 = vadd.f32 %v700, %v994
    %v1123 = vadd.f32 %v701, %v995
    %v1124 = vadd.f32 %v702, %v996
    %v1125 = vadd.f32 %v703, %v997
    %v1126 = vadd.f32 %v704, %v998
    %v1127 = vadd.f32 %v705, %v999
    %v1128 = vadd.f32 %v706, %v1000
    %v1129 = vadd.f32 %v707, %v1001
    %v1130 = vadd.f32 %v708, %v1002
    %v1131 = vadd.f32 %v709, %v1003
    %v1132 = vadd.f32 %v710, %v1004
    %v1133 = vadd.f32 %v711, %v1005
    %v1134 = vadd.f32 %v712, %v1006
    %v1135 = vadd.f32 %v713, %v1007
    %v1136 = vadd.f32 %v714, %v1008
    %v1137 = vadd.f32 %v715, %v1009
    %v1138 = vadd.f32 %v716, %v1010
    %v1139 = vadd.f32 %v717, %v1011
    %v1140 = vadd.f32 %v718, %v1012
    %v1141 = vadd.f32 %v719, %v1013
    %v1142 = vadd.f32 %v720, %v1014
    %v1143 = vadd.f32 %v721, %v1015
    %v1144 = vadd.f32 %v722, %v1016
    %v1145 = vadd.f32 %v723, %v1017
    %v1146 = vadd.f32 %v724, %v1018
    %v1147 = vadd.f32 %v725, %v1019
    %v1148 = vadd.f32 %v726, %v1020
    %v1149 = vadd.f32 %v727, %v1021
    %v1150 = vadd.f32 %v728, %v1022
    %v1151 = vadd.f32 %v729, %v1023
    %v1152 = vadd.f32 %v730, %v1024
    %v1153 = vadd.f32 %v731, %v1025
    %v1154 = vadd.f32 %v732, %v1026
    %v1155 = vadd.f32 %v733, %v1027
    %v1156 = vadd.f32 %v734, %v1028
    %v1157 = vadd.f32 %v735, %v1029
    %v1158 = vadd.f32 %v736, %v1030
    %v1159 = vadd.f32 %v737, %v1031
    %v1160 = vadd.f32 %v738, %v1032
    %v1161 = vadd.f32 %v739, %v1033
    %v1162 = vadd.f32 %v740, %v1034
    %v1163 = vadd.f32 %v741, %v1035
    %v1164 = vadd.f32 %v742, %v1036
    %v1165 = vadd.f32 %v743, %v1037
    %v1166 = vadd.f32 %v744, %v1038
    %v1167 = vadd.f32 %v745, %v1039
    %v1168 = vadd.f32 %v746, %v1040
    %v1169 = vadd.f32 %v747, %v1041
    %v1170 = vadd.f32 %v748, %v1042
    %v1171 = vadd.f32 %v749, %v1043
    %v1172 = vadd.f32 %v750, %v1044
    %v1173 = vadd.f32 %v751, %v1045
    %v1174 = vadd.f32 %v752, %v1046
    %v1175 = vadd.f32 %v753, %v1047
    %v1176 = vadd.f32 %v754, %v1048
    %v1177 = vadd.f32 %v755, %v1049
    %v1178 = vadd.f32 %v756, %v1050
    %v1179 = vadd.f32 %v757, %v1051
    %v1180 = vadd.f32 %v758, %v1052
    %v1181 = vadd.f32 %v759, %v1053
    %v1182 = vadd.f32 %v760, %v1054
    %v1183 = vadd.f32 %v761, %v1055
    %v1184 = vadd.f32 %v762, %v1056
    %v1185 = vadd.f32 %v763, %v1057
    %v1186 = vadd.f32 %v764, %v1058
    %v1187 = vadd.f32 %v765, %v1059
    %v1188 = vadd.f32 %v766, %v1060
    %v1189 = vadd.f32 %v767, %v1061
    %v1190 = vadd.f32 %v768, %v1062
    %v1191 = vadd.f32 %v769, %v1063
    %v1192 = vadd.f32 %v770, %v1064
    %v1193 = vadd.f32 %v771, %v1065
    %v1194 = vadd.f32 %v772, %v1066
    %v1195 = vadd.f32 %v773, %v1067
    %v1196 = vadd.f32 %v774, %v1068
    %v1197 = vadd.f32 %v775, %v1069
    %v1198 = vadd.f32 %v776, %v1070
    %v1199 = vadd.f32 %v777, %v1071
    %v1200 = vadd.f32 %v778, %v1072
    %v1201 = vadd.f32 %v779, %v1073
    %v1202 = vadd.f32 %v780, %v1074
    %v1203 = vadd.f32 %v781, %v1075
    %v1204 = vadd.f32 %v782, %v1076
    %v1205 = vadd.f32 %v783, %v1077
    %v1206 = vadd.f32 %v784, %v1078
    %v1207 = vadd.f32 %v785, %v1079
    %v1208 = vadd.f32 %v786, %v1080
    %v1209 = vadd.f32 %v787, %v1081
    %v1210 = vadd.f32 %v788, %v1082
    %v1211 = vadd.f32 %v789, %v1083
    %v1212 = vadd.f32 %v790, %v1084
    %v1213 = vadd.f32 %v791, %v1085
    %v1214 = vadd.f32 %v792, %v1086
    %v1215 = vadd.f32 %v793, %v1087
    %v1216 = vadd.f32 %v794, %v1088
    %v1217 = vadd.f32 %v795, %v1089
    %v1218 = vadd.f32 %v796, %v1090
    %v1219 = vadd.f32 %v797, %v1091
    %v1220 = vadd.f32 %v798, %v1092
    %v1221 = vadd.f32 %v799, %v1093
    %v1222 = vadd.f32 %v800, %v1094
    %v1223 = vadd.f32 %v801, %v1095
    %v1224 = vadd.f32 %v802, %v1096
    %v1225 = vadd.f32 %v803, %v1097
    %v1226 = vadd.f32 %v804, %v1098
    %v1227 = vadd.f32 %v805, %v1099
    %v1228 = vadd.f32 %v806, %v1100
    %v1229 = vadd.f32 %v807, %v1101
    %v1230 = vadd.f32 %v808, %v1102
    %v1231 = vadd.f32 %v809, %v1103
    %v1232 = vadd.f32 %v810, %v1104
    %v1233 = vadd.f32 %v811, %v1105
    %v1234 = vadd.f32 %v812, %v1106
    %v1235 = vadd.f32 %v813, %v1107
    %v1236 = vadd.f32 %v814, %v1108
    %v1237 = vadd.f32 %v815, %v1109
    %v1238 = vlaneseq
    %v1239 = vshrl.u32 %v1238, 7
    %v1240 = vsub.s32 0, %v1239
    %v1241 = vrot.slane %v66, %v1240
    %v1242 = vlaneseq
    %v1243 = vshrl.u32 %v1242, 7
    %v1244 = vsub.s32 1, %v1243
    %v1245 = vrot.slane %v66, %v1244
    %v1246 = vlaneseq
    %v1247 = vshrl.u32 %v1246, 7
    %v1248 = vsub.s32 2, %v1247
    %v1249 = vrot.slane %v66, %v1248
    %v1250 = vlaneseq
    %v1251 = vshrl.u32 %v1250, 7
    %v1252 = vsub.s32 3, %v1251
    %v1253 = vrot.slane %v66, %v1252
    %vm1254 = vcmp.eq.s32.totalorder %v68, %v1241
    %vm1255 = vcmp.eq.s32.totalorder %v68, %v1245
    %vm1256 = vcmp.eq.s32.totalorder %v68, %v1249
    %vm1257 = vcmp.eq.s32.totalorder %v68, %v1253
    %vm1258 = vcmp.eq.s32.totalorder %v69, %v1241
    %vm1259 = vcmp.eq.s32.totalorder %v69, %v1245
    %vm1260 = vcmp.eq.s32.totalorder %v69, %v1249
    %vm1261 = vcmp.eq.s32.totalorder %v69, %v1253
    %vm1262 = vcmp.eq.s32.totalorder %v70, %v1241
    %vm1263 = vcmp.eq.s32.totalorder %v70, %v1245
    %vm1264 = vcmp.eq.s32.totalorder %v70, %v1249
    %vm1265 = vcmp.eq.s32.totalorder %v70, %v1253
    %vm1266 = vcmp.eq.s32.totalorder %v71, %v1241
    %vm1267 = vcmp.eq.s32.totalorder %v71, %v1245
    %vm1268 = vcmp.eq.s32.totalorder %v71, %v1249
    %vm1269 = vcmp.eq.s32.totalorder %v71, %v1253
    %vm1270 = vcmp.eq.s32.totalorder %v72, %v1241
    %vm1271 = vcmp.eq.s32.totalorder %v72, %v1245
    %vm1272 = vcmp.eq.s32.totalorder %v72, %v1249
    %vm1273 = vcmp.eq.s32.totalorder %v72, %v1253
    %vm1274 = vcmp.eq.s32.totalorder %v73, %v1241
    %vm1275 = vcmp.eq.s32.totalorder %v73, %v1245
    %vm1276 = vcmp.eq.s32.totalorder %v73, %v1249
    %vm1277 = vcmp.eq.s32.totalorder %v73, %v1253
    %vm1278 = vcmp.eq.s32.totalorder %v74, %v1241
    %vm1279 = vcmp.eq.s32.totalorder %v74, %v1245
    %vm1280 = vcmp.eq.s32.totalorder %v74, %v1249
    %vm1281 = vcmp.eq.s32.totalorder %v74, %v1253
    %vm1282 = vcmp.eq.s32.totalorder %v75, %v1241
    %vm1283 = vcmp.eq.s32.totalorder %v75, %v1245
    %vm1284 = vcmp.eq.s32.totalorder %v75, %v1249
    %vm1285 = vcmp.eq.s32.totalorder %v75, %v1253
    %vm1286 = vcmp.eq.s32.totalorder %v76, %v1241
    %vm1287 = vcmp.eq.s32.totalorder %v76, %v1245
    %vm1288 = vcmp.eq.s32.totalorder %v76, %v1249
    %vm1289 = vcmp.eq.s32.totalorder %v76, %v1253
    %vm1290 = vcmp.eq.s32.totalorder %v77, %v1241
    %vm1291 = vcmp.eq.s32.totalorder %v77, %v1245
    %vm1292 = vcmp.eq.s32.totalorder %v77, %v1249
    %vm1293 = vcmp.eq.s32.totalorder %v77, %v1253
    %vm1294 = vcmp.eq.s32.totalorder %v78, %v1241
    %vm1295 = vcmp.eq.s32.totalorder %v78, %v1245
    %vm1296 = vcmp.eq.s32.totalorder %v78, %v1249
    %vm1297 = vcmp.eq.s32.totalorder %v78, %v1253
    %vm1298 = vcmp.eq.s32.totalorder %v79, %v1241
    %vm1299 = vcmp.eq.s32.totalorder %v79, %v1245
    %vm1300 = vcmp.eq.s32.totalorder %v79, %v1249
    %vm1301 = vcmp.eq.s32.totalorder %v79, %v1253
    %vm1302 = vcmp.eq.s32.totalorder %v80, %v1241
    %vm1303 = vcmp.eq.s32.totalorder %v80, %v1245
    %vm1304 = vcmp.eq.s32.totalorder %v80, %v1249
    %vm1305 = vcmp.eq.s32.totalorder %v80, %v1253
    %vm1306 = vcmp.eq.s32.totalorder %v81, %v1241
    %vm1307 = vcmp.eq.s32.totalorder %v81, %v1245
    %vm1308 = vcmp.eq.s32.totalorder %v81, %v1249
    %vm1309 = vcmp.eq.s32.totalorder %v81, %v1253
    %vm1310 = vcmp.eq.s32.totalorder %v82, %v1241
    %vm1311 = vcmp.eq.s32.totalorder %v82, %v1245
    %vm1312 = vcmp.eq.s32.totalorder %v82, %v1249
    %vm1313 = vcmp.eq.s32.totalorder %v82, %v1253
    %vm1314 = vcmp.eq.s32.totalorder %v83, %v1241
    %vm1315 = vcmp.eq.s32.totalorder %v83, %v1245
    %vm1316 = vcmp.eq.s32.totalorder %v83, %v1249
    %vm1317 = vcmp.eq.s32.totalorder %v83, %v1253
    %vm1318 = vcmp.eq.s32.totalorder %v84, %v1241
    %vm1319 = vcmp.eq.s32.totalorder %v84, %v1245
    %vm1320 = vcmp.eq.s32.totalorder %v84, %v1249
    %vm1321 = vcmp.eq.s32.totalorder %v84, %v1253
    %vm1322 = vcmp.eq.s32.totalorder %v85, %v1241
    %vm1323 = vcmp.eq.s32.totalorder %v85, %v1245
    %vm1324 = vcmp.eq.s32.totalorder %v85, %v1249
    %vm1325 = vcmp.eq.s32.totalorder %v85, %v1253
    %vm1326 = vcmp.eq.s32.totalorder %v86, %v1241
    %vm1327 = vcmp.eq.s32.totalorder %v86, %v1245
    %vm1328 = vcmp.eq.s32.totalorder %v86, %v1249
    %vm1329 = vcmp.eq.s32.totalorder %v86, %v1253
    %vm1330 = vcmp.eq.s32.totalorder %v87, %v1241
    %vm1331 = vcmp.eq.s32.totalorder %v87, %v1245
    %vm1332 = vcmp.eq.s32.totalorder %v87, %v1249
    %vm1333 = vcmp.eq.s32.totalorder %v87, %v1253
    %vm1334 = vcmp.eq.s32.totalorder %v88, %v1241
    %vm1335 = vcmp.eq.s32.totalorder %v88, %v1245
    %vm1336 = vcmp.eq.s32.totalorder %v88, %v1249
    %vm1337 = vcmp.eq.s32.totalorder %v88, %v1253
    %vm1338 = vcmp.eq.s32.totalorder %v89, %v1241
    %vm1339 = vcmp.eq.s32.totalorder %v89, %v1245
    %vm1340 = vcmp.eq.s32.totalorder %v89, %v1249
    %vm1341 = vcmp.eq.s32.totalorder %v89, %v1253
    %vm1342 = vcmp.eq.s32.totalorder %v90, %v1241
    %vm1343 = vcmp.eq.s32.totalorder %v90, %v1245
    %vm1344 = vcmp.eq.s32.totalorder %v90, %v1249
    %vm1345 = vcmp.eq.s32.totalorder %v90, %v1253
    %vm1346 = vcmp.eq.s32.totalorder %v91, %v1241
    %vm1347 = vcmp.eq.s32.totalorder %v91, %v1245
    %vm1348 = vcmp.eq.s32.totalorder %v91, %v1249
    %vm1349 = vcmp.eq.s32.totalorder %v91, %v1253
    %vm1350 = vcmp.eq.s32.totalorder %v92, %v1241
    %vm1351 = vcmp.eq.s32.totalorder %v92, %v1245
    %vm1352 = vcmp.eq.s32.totalorder %v92, %v1249
    %vm1353 = vcmp.eq.s32.totalorder %v92, %v1253
    %vm1354 = vcmp.eq.s32.totalorder %v93, %v1241
    %vm1355 = vcmp.eq.s32.totalorder %v93, %v1245
    %vm1356 = vcmp.eq.s32.totalorder %v93, %v1249
    %vm1357 = vcmp.eq.s32.totalorder %v93, %v1253
    %vm1358 = vcmp.eq.s32.totalorder %v94, %v1241
    %vm1359 = vcmp.eq.s32.totalorder %v94, %v1245
    %vm1360 = vcmp.eq.s32.totalorder %v94, %v1249
    %vm1361 = vcmp.eq.s32.totalorder %v94, %v1253
    %vm1362 = vcmp.eq.s32.totalorder %v95, %v1241
    %vm1363 = vcmp.eq.s32.totalorder %v95, %v1245
    %vm1364 = vcmp.eq.s32.totalorder %v95, %v1249
    %vm1365 = vcmp.eq.s32.totalorder %v95, %v1253
    %vm1366 = vcmp.eq.s32.totalorder %v96, %v1241
    %vm1367 = vcmp.eq.s32.totalorder %v96, %v1245
    %vm1368 = vcmp.eq.s32.totalorder %v96, %v1249
    %vm1369 = vcmp.eq.s32.totalorder %v96, %v1253
    %vm1370 = vcmp.eq.s32.totalorder %v97, %v1241
    %vm1371 = vcmp.eq.s32.totalorder %v97, %v1245
    %vm1372 = vcmp.eq.s32.totalorder %v97, %v1249
    %vm1373 = vcmp.eq.s32.totalorder %v97, %v1253
    %vm1374 = vcmp.eq.s32.totalorder %v98, %v1241
    %vm1375 = vcmp.eq.s32.totalorder %v98, %v1245
    %vm1376 = vcmp.eq.s32.totalorder %v98, %v1249
    %vm1377 = vcmp.eq.s32.totalorder %v98, %v1253
    %vm1378 = vcmp.eq.s32.totalorder %v99, %v1241
    %vm1379 = vcmp.eq.s32.totalorder %v99, %v1245
    %vm1380 = vcmp.eq.s32.totalorder %v99, %v1249
    %vm1381 = vcmp.eq.s32.totalorder %v99, %v1253
    %v1382 = vmul.f32 %v50, %v49
    %v1384 = vlaneseq
    %v1385 = vshrl.u32 %v1384, 7
    %v1386 = vsub.s32 0, %v1385
    %v1387 = vrot.slane %v1382, %v1386
    %v1388 = vlaneseq
    %v1389 = vshrl.u32 %v1388, 7
    %v1390 = vsub.s32 1, %v1389
    %v1391 = vrot.slane %v1382, %v1390
    %v1392 = vlaneseq
    %v1393 = vshrl.u32 %v1392, 7
    %v1394 = vsub.s32 2, %v1393
    %v1395 = vrot.slane %v1382, %v1394
    %v1396 = vlaneseq
    %v1397 = vshrl.u32 %v1396, 7
    %v1398 = vsub.s32 3, %v1397
    %v1399 = vrot.slane %v1382, %v1398
    %v1404 = vsel %vm1254, %v1387, 0.0
    %v1405 = vsel %vm1255, %v1391, 0.0
    %v1406 = vsel %vm1256, %v1395, 0.0
    %v1407 = vsel %vm1257, %v1399, 0.0
    %v1408 = vsel %vm1258, %v1387, 0.0
    %v1409 = vsel %vm1259, %v1391, 0.0
    %v1410 = vsel %vm1260, %v1395, 0.0
    %v1411 = vsel %vm1261, %v1399, 0.0
    %v1412 = vsel %vm1262, %v1387, 0.0
    %v1413 = vsel %vm1263, %v1391, 0.0
    %v1414 = vsel %vm1264, %v1395, 0.0
    %v1415 = vsel %vm1265, %v1399, 0.0
    %v1416 = vsel %vm1266, %v1387, 0.0
    %v1417 = vsel %vm1267, %v1391, 0.0
    %v1418 = vsel %vm1268, %v1395, 0.0
    %v1419 = vsel %vm1269, %v1399, 0.0
    %v1420 = vsel %vm1270, %v1387, 0.0
    %v1421 = vsel %vm1271, %v1391, 0.0
    %v1422 = vsel %vm1272, %v1395, 0.0
    %v1423 = vsel %vm1273, %v1399, 0.0
    %v1424 = vsel %vm1274, %v1387, 0.0
    %v1425 = vsel %vm1275, %v1391, 0.0
    %v1426 = vsel %vm1276, %v1395, 0.0
    %v1427 = vsel %vm1277, %v1399, 0.0
    %v1428 = vsel %vm1278, %v1387, 0.0
    %v1429 = vsel %vm1279, %v1391, 0.0
    %v1430 = vsel %vm1280, %v1395, 0.0
    %v1431 = vsel %vm1281, %v1399, 0.0
    %v1432 = vsel %vm1282, %v1387, 0.0
    %v1433 = vsel %vm1283, %v1391, 0.0
    %v1434 = vsel %vm1284, %v1395, 0.0
    %v1435 = vsel %vm1285, %v1399, 0.0
    %v1436 = vsel %vm1286, %v1387, 0.0
    %v1437 = vsel %vm1287, %v1391, 0.0
    %v1438 = vsel %vm1288, %v1395, 0.0
    %v1439 = vsel %vm1289, %v1399, 0.0
    %v1440 = vsel %vm1290, %v1387, 0.0
    %v1441 = vsel %vm1291, %v1391, 0.0
    %v1442 = vsel %vm1292, %v1395, 0.0
    %v1443 = vsel %vm1293, %v1399, 0.0
    %v1444 = vsel %vm1294, %v1387, 0.0
    %v1445 = vsel %vm1295, %v1391, 0.0
    %v1446 = vsel %vm1296, %v1395, 0.0
    %v1447 = vsel %vm1297, %v1399, 0.0
    %v1448 = vsel %vm1298, %v1387, 0.0
    %v1449 = vsel %vm1299, %v1391, 0.0
    %v1450 = vsel %vm1300, %v1395, 0.0
    %v1451 = vsel %vm1301, %v1399, 0.0
    %v1452 = vsel %vm1302, %v1387, 0.0
    %v1453 = vsel %vm1303, %v1391, 0.0
    %v1454 = vsel %vm1304, %v1395, 0.0
    %v1455 = vsel %vm1305, %v1399, 0.0
    %v1456 = vsel %vm1306, %v1387, 0.0
    %v1457 = vsel %vm1307, %v1391, 0.0
    %v1458 = vsel %vm1308, %v1395, 0.0
    %v1459 = vsel %vm1309, %v1399, 0.0
    %v1460 = vsel %vm1310, %v1387, 0.0
    %v1461 = vsel %vm1311, %v1391, 0.0
    %v1462 = vsel %vm1312, %v1395, 0.0
    %v1463 = vsel %vm1313, %v1399, 0.0
    %v1464 = vsel %vm1314, %v1387, 0.0
    %v1465 = vsel %vm1315, %v1391, 0.0
    %v1466 = vsel %vm1316, %v1395, 0.0
    %v1467 = vsel %vm1317, %v1399, 0.0
    %v1468 = vsel %vm1318, %v1387, 0.0
    %v1469 = vsel %vm1319, %v1391, 0.0
    %v1470 = vsel %vm1320, %v1395, 0.0
    %v1471 = vsel %vm1321, %v1399, 0.0
    %v1472 = vsel %vm1322, %v1387, 0.0
    %v1473 = vsel %vm1323, %v1391, 0.0
    %v1474 = vsel %vm1324, %v1395, 0.0
    %v1475 = vsel %vm1325, %v1399, 0.0
    %v1476 = vsel %vm1326, %v1387, 0.0
    %v1477 = vsel %vm1327, %v1391, 0.0
    %v1478 = vsel %vm1328, %v1395, 0.0
    %v1479 = vsel %vm1329, %v1399, 0.0
    %v1480 = vsel %vm1330, %v1387, 0.0
    %v1481 = vsel %vm1331, %v1391, 0.0
    %v1482 = vsel %vm1332, %v1395, 0.0
    %v1483 = vsel %vm1333, %v1399, 0.0
    %v1484 = vsel %vm1334, %v1387, 0.0
    %v1485 = vsel %vm1335, %v1391, 0.0
    %v1486 = vsel %vm1336, %v1395, 0.0
    %v1487 = vsel %vm1337, %v1399, 0.0
    %v1488 = vsel %vm1338, %v1387, 0.0
    %v1489 = vsel %vm1339, %v1391, 0.0
    %v1490 = vsel %vm1340, %v1395, 0.0
    %v1491 = vsel %vm1341, %v1399, 0.0
    %v1492 = vsel %vm1342, %v1387, 0.0
    %v1493 = vsel %vm1343, %v1391, 0.0
    %v1494 = vsel %vm1344, %v1395, 0.0
    %v1495 = vsel %vm1345, %v1399, 0.0
    %v1496 = vsel %vm1346, %v1387, 0.0
    %v1497 = vsel %vm1347, %v1391, 0.0
    %v1498 = vsel %vm1348, %v1395, 0.0
    %v1499 = vsel %vm1349, %v1399, 0.0
    %v1500 = vsel %vm1350, %v1387, 0.0
    %v1501 = vsel %vm1351, %v1391, 0.0
    %v1502 = vsel %vm1352, %v1395, 0.0
    %v1503 = vsel %vm1353, %v1399, 0.0
    %v1504 = vsel %vm1354, %v1387, 0.0
    %v1505 = vsel %vm1355, %v1391, 0.0
    %v1506 = vsel %vm1356, %v1395, 0.0
    %v1507 = vsel %vm1357, %v1399, 0.0
    %v1508 = vsel %vm1358, %v1387, 0.0
    %v1509 = vsel %vm1359, %v1391, 0.0
    %v1510 = vsel %vm1360, %v1395, 0.0
    %v1511 = vsel %vm1361, %v1399, 0.0
    %v1512 = vsel %vm1362, %v1387, 0.0
    %v1513 = vsel %vm1363, %v1391, 0.0
    %v1514 = vsel %vm1364, %v1395, 0.0
    %v1515 = vsel %vm1365, %v1399, 0.0
    %v1516 = vsel %vm1366, %v1387, 0.0
    %v1517 = vsel %vm1367, %v1391, 0.0
    %v1518 = vsel %vm1368, %v1395, 0.0
    %v1519 = vsel %vm1369, %v1399, 0.0
    %v1520 = vsel %vm1370, %v1387, 0.0
    %v1521 = vsel %vm1371, %v1391, 0.0
    %v1522 = vsel %vm1372, %v1395, 0.0
    %v1523 = vsel %vm1373, %v1399, 0.0
    %v1524 = vsel %vm1374, %v1387, 0.0
    %v1525 = vsel %vm1375, %v1391, 0.0
    %v1526 = vsel %vm1376, %v1395, 0.0
    %v1527 = vsel %vm1377, %v1399, 0.0
    %v1528 = vsel %vm1378, %v1387, 0.0
    %v1529 = vsel %vm1379, %v1391, 0.0
    %v1530 = vsel %vm1380, %v1395, 0.0
    %v1531 = vsel %vm1381, %v1399, 0.0
    %v1532 = vadd.f32 %v1110, %v1404
    %v1533 = vadd.f32 %v1111, %v1405
    %v1534 = vadd.f32 %v1112, %v1406
    %v1535 = vadd.f32 %v1113, %v1407
    %v1536 = vadd.f32 %v1114, %v1408
    %v1537 = vadd.f32 %v1115, %v1409
    %v1538 = vadd.f32 %v1116, %v1410
    %v1539 = vadd.f32 %v1117, %v1411
    %v1540 = vadd.f32 %v1118, %v1412
    %v1541 = vadd.f32 %v1119, %v1413
    %v1542 = vadd.f32 %v1120, %v1414
    %v1543 = vadd.f32 %v1121, %v1415
    %v1544 = vadd.f32 %v1122, %v1416
    %v1545 = vadd.f32 %v1123, %v1417
    %v1546 = vadd.f32 %v1124, %v1418
    %v1547 = vadd.f32 %v1125, %v1419
    %v1548 = vadd.f32 %v1126, %v1420
    %v1549 = vadd.f32 %v1127, %v1421
    %v1550 = vadd.f32 %v1128, %v1422
    %v1551 = vadd.f32 %v1129, %v1423
    %v1552 = vadd.f32 %v1130, %v1424
    %v1553 = vadd.f32 %v1131, %v1425
    %v1554 = vadd.f32 %v1132, %v1426
    %v1555 = vadd.f32 %v1133, %v1427
    %v1556 = vadd.f32 %v1134, %v1428
    %v1557 = vadd.f32 %v1135, %v1429
    %v1558 = vadd.f32 %v1136, %v1430
    %v1559 = vadd.f32 %v1137, %v1431
    %v1560 = vadd.f32 %v1138, %v1432
    %v1561 = vadd.f32 %v1139, %v1433
    %v1562 = vadd.f32 %v1140, %v1434
    %v1563 = vadd.f32 %v1141, %v1435
    %v1564 = vadd.f32 %v1142, %v1436
    %v1565 = vadd.f32 %v1143, %v1437
    %v1566 = vadd.f32 %v1144, %v1438
    %v1567 = vadd.f32 %v1145, %v1439
    %v1568 = vadd.f32 %v1146, %v1440
    %v1569 = vadd.f32 %v1147, %v1441
    %v1570 = vadd.f32 %v1148, %v1442
    %v1571 = vadd.f32 %v1149, %v1443
    %v1572 = vadd.f32 %v1150, %v1444
    %v1573 = vadd.f32 %v1151, %v1445
    %v1574 = vadd.f32 %v1152, %v1446
    %v1575 = vadd.f32 %v1153, %v1447
    %v1576 = vadd.f32 %v1154, %v1448
    %v1577 = vadd.f32 %v1155, %v1449
    %v1578 = vadd.f32 %v1156, %v1450
    %v1579 = vadd.f32 %v1157, %v1451
    %v1580 = vadd.f32 %v1158, %v1452
    %v1581 = vadd.f32 %v1159, %v1453
    %v1582 = vadd.f32 %v1160, %v1454
    %v1583 = vadd.f32 %v1161, %v1455
    %v1584 = vadd.f32 %v1162, %v1456
    %v1585 = vadd.f32 %v1163, %v1457
    %v1586 = vadd.f32 %v1164, %v1458
    %v1587 = vadd.f32 %v1165, %v1459
    %v1588 = vadd.f32 %v1166, %v1460
    %v1589 = vadd.f32 %v1167, %v1461
    %v1590 = vadd.f32 %v1168, %v1462
    %v1591 = vadd.f32 %v1169, %v1463
    %v1592 = vadd.f32 %v1170, %v1464
    %v1593 = vadd.f32 %v1171, %v1465
    %v1594 = vadd.f32 %v1172, %v1466
    %v1595 = vadd.f32 %v1173, %v1467
    %v1596 = vadd.f32 %v1174, %v1468
    %v1597 = vadd.f32 %v1175, %v1469
    %v1598 = vadd.f32 %v1176, %v1470
    %v1599 = vadd.f32 %v1177, %v1471
    %v1600 = vadd.f32 %v1178, %v1472
    %v1601 = vadd.f32 %v1179, %v1473
    %v1602 = vadd.f32 %v1180, %v1474
    %v1603 = vadd.f32 %v1181, %v1475
    %v1604 = vadd.f32 %v1182, %v1476
    %v1605 = vadd.f32 %v1183, %v1477
    %v1606 = vadd.f32 %v1184, %v1478
    %v1607 = vadd.f32 %v1185, %v1479
    %v1608 = vadd.f32 %v1186, %v1480
    %v1609 = vadd.f32 %v1187, %v1481
    %v1610 = vadd.f32 %v1188, %v1482
    %v1611 = vadd.f32 %v1189, %v1483
    %v1612 = vadd.f32 %v1190, %v1484
    %v1613 = vadd.f32 %v1191, %v1485
    %v1614 = vadd.f32 %v1192, %v1486
    %v1615 = vadd.f32 %v1193, %v1487
    %v1616 = vadd.f32 %v1194, %v1488
    %v1617 = vadd.f32 %v1195, %v1489
    %v1618 = vadd.f32 %v1196, %v1490
    %v1619 = vadd.f32 %v1197, %v1491
    %v1620 = vadd.f32 %v1198, %v1492
    %v1621 = vadd.f32 %v1199, %v1493
    %v1622 = vadd.f32 %v1200, %v1494
    %v1623 = vadd.f32 %v1201, %v1495
    %v1624 = vadd.f32 %v1202, %v1496
    %v1625 = vadd.f32 %v1203, %v1497
    %v1626 = vadd.f32 %v1204, %v1498
    %v1627 = vadd.f32 %v1205, %v1499
    %v1628 = vadd.f32 %v1206, %v1500
    %v1629 = vadd.f32 %v1207, %v1501
    %v1630 = vadd.f32 %v1208, %v1502
    %v1631 = vadd.f32 %v1209, %v1503
    %v1632 = vadd.f32 %v1210, %v1504
    %v1633 = vadd.f32 %v1211, %v1505
    %v1634 = vadd.f32 %v1212, %v1506
    %v1635 = vadd.f32 %v1213, %v1507
    %v1636 = vadd.f32 %v1214, %v1508
    %v1637 = vadd.f32 %v1215, %v1509
    %v1638 = vadd.f32 %v1216, %v1510
    %v1639 = vadd.f32 %v1217, %v1511
    %v1640 = vadd.f32 %v1218, %v1512
    %v1641 = vadd.f32 %v1219, %v1513
    %v1642 = vadd.f32 %v1220, %v1514
    %v1643 = vadd.f32 %v1221, %v1515
    %v1644 = vadd.f32 %v1222, %v1516
    %v1645 = vadd.f32 %v1223, %v1517
    %v1646 = vadd.f32 %v1224, %v1518
    %v1647 = vadd.f32 %v1225, %v1519
    %v1648 = vadd.f32 %v1226, %v1520
    %v1649 = vadd.f32 %v1227, %v1521
    %v1650 = vadd.f32 %v1228, %v1522
    %v1651 = vadd.f32 %v1229, %v1523
    %v1652 = vadd.f32 %v1230, %v1524
    %v1653 = vadd.f32 %v1231, %v1525
    %v1654 = vadd.f32 %v1232, %v1526
    %v1655 = vadd.f32 %v1233, %v1527
    %v1656 = vadd.f32 %v1234, %v1528
    %v1657 = vadd.f32 %v1235, %v1529
    %v1658 = vadd.f32 %v1236, %v1530
    %v1659 = vadd.f32 %v1237, %v1531
    %v1660 = vmul.f32 %v36, 3.5
    %v1661 = vadd.f32 %v1660, 3.5
    %v1662 = vmax.f32 %v1661, 0.0
    %v1663 = vmin.f32 %v1662, 7.0
    %v1664 = vmul.f32 %v38, 3.5
    %v1665 = vadd.f32 %v1664, 3.5
    %v1666 = vmax.f32 %v1665, 0.0
    %v1667 = vmin.f32 %v1666, 7.0
    %v1668 = vfloor.f32 %v1663
    %v1669 = vfloor.f32 %v1667
    %v1670 = vsub.f32 %v1663, %v1668
    %v1671 = vsub.f32 %v1667, %v1669
    %v1672 = vsub.f32 1.0, %v1670
    %v1673 = vsub.f32 1.0, %v1671
    %v1674 = vcvt.f32.s32.to.zero.pseudo %v1668
    %v1675 = vcvt.f32.s32.to.zero.pseudo %v1669
    %v1676 = vadd.s32 %v1674, 1
    %vm1677 = vcmp.lt.s32.totalorder %v1676, 7
    %v1678 = vsel %vm1677, %v1676, 7
    %v1679 = vadd.s32 %v1675, 1
    %vm1680 = vcmp.lt.s32.totalorder %v1679, 7
    %v1681 = vsel %vm1680, %v1679, 7
    %v1682 = vmul.u32 %v1675, 8
    %v1683 = vadd.s32 %v1682, %v1674
    %v1684 = vadd.s32 %v1682, %v1678
    %v1685 = vmul.u32 %v1681, 8
    %v1686 = vadd.s32 %v1685, %v1674
    %v1687 = vadd.s32 %v1685, %v1678
    %v1688 = vlaneseq
    %v1689 = vshrl.u32 %v1688, 7
    %v1690 = vsub.s32 0, %v1689
    %v1691 = vrot.slane %v1683, %v1690
    %v1692 = vlaneseq
    %v1693 = vshrl.u32 %v1692, 7
    %v1694 = vsub.s32 1, %v1693
    %v1695 = vrot.slane %v1683, %v1694
    %v1696 = vlaneseq
    %v1697 = vshrl.u32 %v1696, 7
    %v1698 = vsub.s32 2, %v1697
    %v1699 = vrot.slane %v1683, %v1698
    %v1700 = vlaneseq
    %v1701 = vshrl.u32 %v1700, 7
    %v1702 = vsub.s32 3, %v1701
    %v1703 = vrot.slane %v1683, %v1702
    %vm1704 = vcmp.eq.s32.totalorder %v68, %v1691
    %vm1705 = vcmp.eq.s32.totalorder %v68, %v1695
    %vm1706 = vcmp.eq.s32.totalorder %v68, %v1699
    %vm1707 = vcmp.eq.s32.totalorder %v68, %v1703
    %vm1708 = vcmp.eq.s32.totalorder %v69, %v1691
    %vm1709 = vcmp.eq.s32.totalorder %v69, %v1695
    %vm1710 = vcmp.eq.s32.totalorder %v69, %v1699
    %vm1711 = vcmp.eq.s32.totalorder %v69, %v1703
    %vm1712 = vcmp.eq.s32.totalorder %v70, %v1691
    %vm1713 = vcmp.eq.s32.totalorder %v70, %v1695
    %vm1714 = vcmp.eq.s32.totalorder %v70, %v1699
    %vm1715 = vcmp.eq.s32.totalorder %v70, %v1703
    %vm1716 = vcmp.eq.s32.totalorder %v71, %v1691
    %vm1717 = vcmp.eq.s32.totalorder %v71, %v1695
    %vm1718 = vcmp.eq.s32.totalorder %v71, %v1699
    %vm1719 = vcmp.eq.s32.totalorder %v71, %v1703
    %vm1720 = vcmp.eq.s32.totalorder %v72, %v1691
    %vm1721 = vcmp.eq.s32.totalorder %v72, %v1695
    %vm1722 = vcmp.eq.s32.totalorder %v72, %v1699
    %vm1723 = vcmp.eq.s32.totalorder %v72, %v1703
    %vm1724 = vcmp.eq.s32.totalorder %v73, %v1691
    %vm1725 = vcmp.eq.s32.totalorder %v73, %v1695
    %vm1726 = vcmp.eq.s32.totalorder %v73, %v1699
    %vm1727 = vcmp.eq.s32.totalorder %v73, %v1703
    %vm1728 = vcmp.eq.s32.totalorder %v74, %v1691
    %vm1729 = vcmp.eq.s32.totalorder %v74, %v1695
    %vm1730 = vcmp.eq.s32.totalorder %v74, %v1699
    %vm1731 = vcmp.eq.s32.totalorder %v74, %v1703
    %vm1732 = vcmp.eq.s32.totalorder %v75, %v1691
    %vm1733 = vcmp.eq.s32.totalorder %v75, %v1695
    %vm1734 = vcmp.eq.s32.totalorder %v75, %v1699
    %vm1735 = vcmp.eq.s32.totalorder %v75, %v1703
    %v1736 = vmul.f32 %v1673, %v1672
    %v1738 = vlaneseq
    %v1739 = vshrl.u32 %v1738, 7
    %v1740 = vsub.s32 0, %v1739
    %v1741 = vrot.slane %v1736, %v1740
    %v1742 = vlaneseq
    %v1743 = vshrl.u32 %v1742, 7
    %v1744 = vsub.s32 1, %v1743
    %v1745 = vrot.slane %v1736, %v1744
    %v1746 = vlaneseq
    %v1747 = vshrl.u32 %v1746, 7
    %v1748 = vsub.s32 2, %v1747
    %v1749 = vrot.slane %v1736, %v1748
    %v1750 = vlaneseq
    %v1751 = vshrl.u32 %v1750, 7
    %v1752 = vsub.s32 3, %v1751
    %v1753 = vrot.slane %v1736, %v1752
    %v1758 = vsel %vm1704, %v1741, 0.0
    %v1759 = vsel %vm1705, %v1745, 0.0
    %v1760 = vsel %vm1706, %v1749, 0.0
    %v1761 = vsel %vm1707, %v1753, 0.0
    %v1762 = vsel %vm1708, %v1741, 0.0
    %v1763 = vsel %vm1709, %v1745, 0.0
    %v1764 = vsel %vm1710, %v1749, 0.0
    %v1765 = vsel %vm1711, %v1753, 0.0
    %v1766 = vsel %vm1712, %v1741, 0.0
    %v1767 = vsel %vm1713, %v1745, 0.0
    %v1768 = vsel %vm1714, %v1749, 0.0
    %v1769 = vsel %vm1715, %v1753, 0.0
    %v1770 = vsel %vm1716, %v1741, 0.0
    %v1771 = vsel %vm1717, %v1745, 0.0
    %v1772 = vsel %vm1718, %v1749, 0.0
    %v1773 = vsel %vm1719, %v1753, 0.0
    %v1774 = vsel %vm1720, %v1741, 0.0
    %v1775 = vsel %vm1721, %v1745, 0.0
    %v1776 = vsel %vm1722, %v1749, 0.0
    %v1777 = vsel %vm1723, %v1753, 0.0
    %v1778 = vsel %vm1724, %v1741, 0.0
    %v1779 = vsel %vm1725, %v1745, 0.0
    %v1780 = vsel %vm1726, %v1749, 0.0
    %v1781 = vsel %vm1727, %v1753, 0.0
    %v1782 = vsel %vm1728, %v1741, 0.0
    %v1783 = vsel %vm1729, %v1745, 0.0
    %v1784 = vsel %vm1730, %v1749, 0.0
    %v1785 = vsel %vm1731, %v1753, 0.0
    %v1786 = vsel %vm1732, %v1741, 0.0
    %v1787 = vsel %vm1733, %v1745, 0.0
    %v1788 = vsel %vm1734, %v1749, 0.0
    %v1789 = vsel %vm1735, %v1753, 0.0
    %v1790 = vlaneseq
    %v1791 = vshrl.u32 %v1790, 7
    %v1792 = vsub.s32 0, %v1791
    %v1793 = vrot.slane %v1684, %v1792
    %v1794 = vlaneseq
    %v1795 = vshrl.u32 %v1794, 7
    %v1796 = vsub.s32 1, %v1795
    %v1797 = vrot.slane %v1684, %v1796
    %v1798 = vlaneseq
    %v1799 = vshrl.u32 %v1798, 7
    %v1800 = vsub.s32 2, %v1799
    %v1801 = vrot.slane %v1684, %v1800
    %v1802 = vlaneseq
    %v1803 = vshrl.u32 %v1802, 7
    %v1804 = vsub.s32 3, %v1803
    %v1805 = vrot.slane %v1684, %v1804
    %vm1806 = vcmp.eq.s32.totalorder %v68, %v1793
    %vm1807 = vcmp.eq.s32.totalorder %v68, %v1797
    %vm1808 = vcmp.eq.s32.totalorder %v68, %v1801
    %vm1809 = vcmp.eq.s32.totalorder %v68, %v1805
    %vm1810 = vcmp.eq.s32.totalorder %v69, %v1793
    %vm1811 = vcmp.eq.s32.totalorder %v69, %v1797
    %vm1812 = vcmp.eq.s32.totalorder %v69, %v1801
    %vm1813 = vcmp.eq.s32.totalorder %v69, %v1805
    %vm1814 = vcmp.eq.s32.totalorder %v70, %v1793
    %vm1815 = vcmp.eq.s32.totalorder %v70, %v1797
    %vm1816 = vcmp.eq.s32.totalorder %v70, %v1801
    %vm1817 = vcmp.eq.s32.totalorder %v70, %v1805
    %vm1818 = vcmp.eq.s32.totalorder %v71, %v1793
    %vm1819 = vcmp.eq.s32.totalorder %v71, %v1797
    %vm1820 = vcmp.eq.s32.totalorder %v71, %v1801
    %vm1821 = vcmp.eq.s32.totalorder %v71, %v1805
    %vm1822 = vcmp.eq.s32.totalorder %v72, %v1793
    %vm1823 = vcmp.eq.s32.totalorder %v72, %v1797
    %vm1824 = vcmp.eq.s32.totalorder %v72, %v1801
    %vm1825 = vcmp.eq.s32.totalorder %v72, %v1805
    %vm1826 = vcmp.eq.s32.totalorder %v73, %v1793
    %vm1827 = vcmp.eq.s32.totalorder %v73, %v1797
    %vm1828 = vcmp.eq.s32.totalorder %v73, %v1801
    %vm1829 = vcmp.eq.s32.totalorder %v73, %v1805
    %vm1830 = vcmp.eq.s32.totalorder %v74, %v1793
    %vm1831 = vcmp.eq.s32.totalorder %v74, %v1797
    %vm1832 = vcmp.eq.s32.totalorder %v74, %v1801
    %vm1833 = vcmp.eq.s32.totalorder %v74, %v1805
    %vm1834 = vcmp.eq.s32.totalorder %v75, %v1793
    %vm1835 = vcmp.eq.s32.totalorder %v75, %v1797
    %vm1836 = vcmp.eq.s32.totalorder %v75, %v1801
    %vm1837 = vcmp.eq.s32.totalorder %v75, %v1805
    %v1838 = vmul.f32 %v1673, %v1670
    %v1840 = vlaneseq
    %v1841 = vshrl.u32 %v1840, 7
    %v1842 = vsub.s32 0, %v1841
    %v1843 = vrot.slane %v1838, %v1842
    %v1844 = vlaneseq
    %v1845 = vshrl.u32 %v1844, 7
    %v1846 = vsub.s32 1, %v1845
    %v1847 = vrot.slane %v1838, %v1846
    %v1848 = vlaneseq
    %v1849 = vshrl.u32 %v1848, 7
    %v1850 = vsub.s32 2, %v1849
    %v1851 = vrot.slane %v1838, %v1850
    %v1852 = vlaneseq
    %v1853 = vshrl.u32 %v1852, 7
    %v1854 = vsub.s32 3, %v1853
    %v1855 = vrot.slane %v1838, %v1854
    %v1860 = vsel %vm1806, %v1843, 0.0
    %v1861 = vsel %vm1807, %v1847, 0.0
    %v1862 = vsel %vm1808, %v1851, 0.0
    %v1863 = vsel %vm1809, %v1855, 0.0
    %v1864 = vsel %vm1810, %v1843, 0.0
    %v1865 = vsel %vm1811, %v1847, 0.0
    %v1866 = vsel %vm1812, %v1851, 0.0
    %v1867 = vsel %vm1813, %v1855, 0.0
    %v1868 = vsel %vm1814, %v1843, 0.0
    %v1869 = vsel %vm1815, %v1847, 0.0
    %v1870 = vsel %vm1816, %v1851, 0.0
    %v1871 = vsel %vm1817, %v1855, 0.0
    %v1872 = vsel %vm1818, %v1843, 0.0
    %v1873 = vsel %vm1819, %v1847, 0.0
    %v1874 = vsel %vm1820, %v1851, 0.0
    %v1875 = vsel %vm1821, %v1855, 0.0
    %v1876 = vsel %vm1822, %v1843, 0.0
    %v1877 = vsel %vm1823, %v1847, 0.0
    %v1878 = vsel %vm1824, %v1851, 0.0
    %v1879 = vsel %vm1825, %v1855, 0.0
    %v1880 = vsel %vm1826, %v1843, 0.0
    %v1881 = vsel %vm1827, %v1847, 0.0
    %v1882 = vsel %vm1828, %v1851, 0.0
    %v1883 = vsel %vm1829, %v1855, 0.0
    %v1884 = vsel %vm1830, %v1843, 0.0
    %v1885 = vsel %vm1831, %v1847, 0.0
    %v1886 = vsel %vm1832, %v1851, 0.0
    %v1887 = vsel %vm1833, %v1855, 0.0
    %v1888 = vsel %vm1834, %v1843, 0.0
    %v1889 = vsel %vm1835, %v1847, 0.0
    %v1890 = vsel %vm1836, %v1851, 0.0
    %v1891 = vsel %vm1837, %v1855, 0.0
    %v1892 = vadd.f32 %v1758, %v1860
    %v1893 = vadd.f32 %v1759, %v1861
    %v1894 = vadd.f32 %v1760, %v1862
    %v1895 = vadd.f32 %v1761, %v1863
    %v1896 = vadd.f32 %v1762, %v1864
    %v1897 = vadd.f32 %v1763, %v1865
    %v1898 = vadd.f32 %v1764, %v1866
    %v1899 = vadd.f32 %v1765, %v1867
    %v1900 = vadd.f32 %v1766, %v1868
    %v1901 = vadd.f32 %v1767, %v1869
    %v1902 = vadd.f32 %v1768, %v1870
    %v1903 = vadd.f32 %v1769, %v1871
    %v1904 = vadd.f32 %v1770, %v1872
    %v1905 = vadd.f32 %v1771, %v1873
    %v1906 = vadd.f32 %v1772, %v1874
    %v1907 = vadd.f32 %v1773, %v1875
    %v1908 = vadd.f32 %v1774, %v1876
    %v1909 = vadd.f32 %v1775, %v1877
    %v1910 = vadd.f32 %v1776, %v1878
    %v1911 = vadd.f32 %v1777, %v1879
    %v1912 = vadd.f32 %v1778, %v1880
    %v1913 = vadd.f32 %v1779, %v1881
    %v1914 = vadd.f32 %v1780, %v1882
    %v1915 = vadd.f32 %v1781, %v1883
    %v1916 = vadd.f32 %v1782, %v1884
    %v1917 = vadd.f32 %v1783, %v1885
    %v1918 = vadd.f32 %v1784, %v1886
    %v1919 = vadd.f32 %v1785, %v1887
    %v1920 = vadd.f32 %v1786, %v1888
    %v1921 = vadd.f32 %v1787, %v1889
    %v1922 = vadd.f32 %v1788, %v1890
    %v1923 = vadd.f32 %v1789, %v1891
    %v1924 = vlaneseq
    %v1925 = vshrl.u32 %v1924, 7
    %v1926 = vsub.s32 0, %v1925
    %v1927 = vrot.slane %v1686, %v1926
    %v1928 = vlaneseq
    %v1929 = vshrl.u32 %v1928, 7
    %v1930 = vsub.s32 1, %v1929
    %v1931 = vrot.slane %v1686, %v1930
    %v1932 = vlaneseq
    %v1933 = vshrl.u32 %v1932, 7
    %v1934 = vsub.s32 2, %v1933
    %v1935 = vrot.slane %v1686, %v1934
    %v1936 = vlaneseq
    %v1937 = vshrl.u32 %v1936, 7
    %v1938 = vsub.s32 3, %v1937
    %v1939 = vrot.slane %v1686, %v1938
    %vm1940 = vcmp.eq.s32.totalorder %v68, %v1927
    %vm1941 = vcmp.eq.s32.totalorder %v68, %v1931
    %vm1942 = vcmp.eq.s32.totalorder %v68, %v1935
    %vm1943 = vcmp.eq.s32.totalorder %v68, %v1939
    %vm1944 = vcmp.eq.s32.totalorder %v69, %v1927
    %vm1945 = vcmp.eq.s32.totalorder %v69, %v1931
    %vm1946 = vcmp.eq.s32.totalorder %v69, %v1935
    %vm1947 = vcmp.eq.s32.totalorder %v69, %v1939
    %vm1948 = vcmp.eq.s32.totalorder %v70, %v1927
    %vm1949 = vcmp.eq.s32.totalorder %v70, %v1931
    %vm1950 = vcmp.eq.s32.totalorder %v70, %v1935
    %vm1951 = vcmp.eq.s32.totalorder %v70, %v1939
    %vm1952 = vcmp.eq.s32.totalorder %v71, %v1927
    %vm1953 = vcmp.eq.s32.totalorder %v71, %v1931
    %vm1954 = vcmp.eq.s32.totalorder %v71, %v1935
    %vm1955 = vcmp.eq.s32.totalorder %v71, %v1939
    %vm1956 = vcmp.eq.s32.totalorder %v72, %v1927
    %vm1957 = vcmp.eq.s32.totalorder %v72, %v1931
    %vm1958 = vcmp.eq.s32.totalorder %v72, %v1935
    %vm1959 = vcmp.eq.s32.totalorder %v72, %v1939
    %vm1960 = vcmp.eq.s32.totalorder %v73, %v1927
    %vm1961 = vcmp.eq.s32.totalorder %v73, %v1931
    %vm1962 = vcmp.eq.s32.totalorder %v73, %v1935
    %vm1963 = vcmp.eq.s32.totalorder %v73, %v1939
    %vm1964 = vcmp.eq.s32.totalorder %v74, %v1927
    %vm1965 = vcmp.eq.s32.totalorder %v74, %v1931
    %vm1966 = vcmp.eq.s32.totalorder %v74, %v1935
    %vm1967 = vcmp.eq.s32.totalorder %v74, %v1939
    %vm1968 = vcmp.eq.s32.totalorder %v75, %v1927
    %vm1969 = vcmp.eq.s32.totalorder %v75, %v1931
    %vm1970 = vcmp.eq.s32.totalorder %v75, %v1935
    %vm1971 = vcmp.eq.s32.totalorder %v75, %v1939
    %v1972 = vmul.f32 %v1671, %v1672
    %v1974 = vlaneseq
    %v1975 = vshrl.u32 %v1974, 7
    %v1976 = vsub.s32 0, %v1975
    %v1977 = vrot.slane %v1972, %v1976
    %v1978 = vlaneseq
    %v1979 = vshrl.u32 %v1978, 7
    %v1980 = vsub.s32 1, %v1979
    %v1981 = vrot.slane %v1972, %v1980
    %v1982 = vlaneseq
    %v1983 = vshrl.u32 %v1982, 7
    %v1984 = vsub.s32 2, %v1983
    %v1985 = vrot.slane %v1972, %v1984
    %v1986 = vlaneseq
    %v1987 = vshrl.u32 %v1986, 7
    %v1988 = vsub.s32 3, %v1987
    %v1989 = vrot.slane %v1972, %v1988
    %v1994 = vsel %vm1940, %v1977, 0.0
    %v1995 = vsel %vm1941, %v1981, 0.0
    %v1996 = vsel %vm1942, %v1985, 0.0
    %v1997 = vsel %vm1943, %v1989, 0.0
    %v1998 = vsel %vm1944, %v1977, 0.0
    %v1999 = vsel %vm1945, %v1981, 0.0
    %v2000 = vsel %vm1946, %v1985, 0.0
    %v2001 = vsel %vm1947, %v1989, 0.0
    %v2002 = vsel %vm1948, %v1977, 0.0
    %v2003 = vsel %vm1949, %v1981, 0.0
    %v2004 = vsel %vm1950, %v1985, 0.0
    %v2005 = vsel %vm1951, %v1989, 0.0
    %v2006 = vsel %vm1952, %v1977, 0.0
    %v2007 = vsel %vm1953, %v1981, 0.0
    %v2008 = vsel %vm1954, %v1985, 0.0
    %v2009 = vsel %vm1955, %v1989, 0.0
    %v2010 = vsel %vm1956, %v1977, 0.0
    %v2011 = vsel %vm1957, %v1981, 0.0
    %v2012 = vsel %vm1958, %v1985, 0.0
    %v2013 = vsel %vm1959, %v1989, 0.0
    %v2014 = vsel %vm1960, %v1977, 0.0
    %v2015 = vsel %vm1961, %v1981, 0.0
    %v2016 = vsel %vm1962, %v1985, 0.0
    %v2017 = vsel %vm1963, %v1989, 0.0
    %v2018 = vsel %vm1964, %v1977, 0.0
    %v2019 = vsel %vm1965, %v1981, 0.0
    %v2020 = vsel %vm1966, %v1985, 0.0
    %v2021 = vsel %vm1967, %v1989, 0.0
    %v2022 = vsel %vm1968, %v1977, 0.0
    %v2023 = vsel %vm1969, %v1981, 0.0
    %v2024 = vsel %vm1970, %v1985, 0.0
    %v2025 = vsel %vm1971, %v1989, 0.0
    %v2026 = vadd.f32 %v1892, %v1994
    %v2027 = vadd.f32 %v1893, %v1995
    %v2028 = vadd.f32 %v1894, %v1996
    %v2029 = vadd.f32 %v1895, %v1997
    %v2030 = vadd.f32 %v1896, %v1998
    %v2031 = vadd.f32 %v1897, %v1999
    %v2032 = vadd.f32 %v1898, %v2000
    %v2033 = vadd.f32 %v1899, %v2001
    %v2034 = vadd.f32 %v1900, %v2002
    %v2035 = vadd.f32 %v1901, %v2003
    %v2036 = vadd.f32 %v1902, %v2004
    %v2037 = vadd.f32 %v1903, %v2005
    %v2038 = vadd.f32 %v1904, %v2006
    %v2039 = vadd.f32 %v1905, %v2007
    %v2040 = vadd.f32 %v1906, %v2008
    %v2041 = vadd.f32 %v1907, %v2009
    %v2042 = vadd.f32 %v1908, %v2010
    %v2043 = vadd.f32 %v1909, %v2011
    %v2044 = vadd.f32 %v1910, %v2012
    %v2045 = vadd.f32 %v1911, %v2013
    %v2046 = vadd.f32 %v1912, %v2014
    %v2047 = vadd.f32 %v1913, %v2015
    %v2048 = vadd.f32 %v1914, %v2016
    %v2049 = vadd.f32 %v1915, %v2017
    %v2050 = vadd.f32 %v1916, %v2018
    %v2051 = vadd.f32 %v1917, %v2019
    %v2052 = vadd.f32 %v1918, %v2020
    %v2053 = vadd.f32 %v1919, %v2021
    %v2054 = vadd.f32 %v1920, %v2022
    %v2055 = vadd.f32 %v1921, %v2023
    %v2056 = vadd.f32 %v1922, %v2024
    %v2057 = vadd.f32 %v1923, %v2025
    %v2058 = vlaneseq
    %v2059 = vshrl.u32 %v2058, 7
    %v2060 = vsub.s32 0, %v2059
    %v2061 = vrot.slane %v1687, %v2060
    %v2062 = vlaneseq
    %v2063 = vshrl.u32 %v2062, 7
    %v2064 = vsub.s32 1, %v2063
    %v2065 = vrot.slane %v1687, %v2064
    %v2066 = vlaneseq
    %v2067 = vshrl.u32 %v2066, 7
    %v2068 = vsub.s32 2, %v2067
    %v2069 = vrot.slane %v1687, %v2068
    %v2070 = vlaneseq
    %v2071 = vshrl.u32 %v2070, 7
    %v2072 = vsub.s32 3, %v2071
    %v2073 = vrot.slane %v1687, %v2072
    %vm2074 = vcmp.eq.s32.totalorder %v68, %v2061
    %vm2075 = vcmp.eq.s32.totalorder %v68, %v2065
    %vm2076 = vcmp.eq.s32.totalorder %v68, %v2069
    %vm2077 = vcmp.eq.s32.totalorder %v68, %v2073
    %vm2078 = vcmp.eq.s32.totalorder %v69, %v2061
    %vm2079 = vcmp.eq.s32.totalorder %v69, %v2065
    %vm2080 = vcmp.eq.s32.totalorder %v69, %v2069
    %vm2081 = vcmp.eq.s32.totalorder %v69, %v2073
    %vm2082 = vcmp.eq.s32.totalorder %v70, %v2061
    %vm2083 = vcmp.eq.s32.totalorder %v70, %v2065
    %vm2084 = vcmp.eq.s32.totalorder %v70, %v2069
    %vm2085 = vcmp.eq.s32.totalorder %v70, %v2073
    %vm2086 = vcmp.eq.s32.totalorder %v71, %v2061
    %vm2087 = vcmp.eq.s32.totalorder %v71, %v2065
    %vm2088 = vcmp.eq.s32.totalorder %v71, %v2069
    %vm2089 = vcmp.eq.s32.totalorder %v71, %v2073
    %vm2090 = vcmp.eq.s32.totalorder %v72, %v2061
    %vm2091 = vcmp.eq.s32.totalorder %v72, %v2065
    %vm2092 = vcmp.eq.s32.totalorder %v72, %v2069
    %vm2093 = vcmp.eq.s32.totalorder %v72, %v2073
    %vm2094 = vcmp.eq.s32.totalorder %v73, %v2061
    %vm2095 = vcmp.eq.s32.totalorder %v73, %v2065
    %vm2096 = vcmp.eq.s32.totalorder %v73, %v2069
    %vm2097 = vcmp.eq.s32.totalorder %v73, %v2073
    %vm2098 = vcmp.eq.s32.totalorder %v74, %v2061
    %vm2099 = vcmp.eq.s32.totalorder %v74, %v2065
    %vm2100 = vcmp.eq.s32.totalorder %v74, %v2069
    %vm2101 = vcmp.eq.s32.totalorder %v74, %v2073
    %vm2102 = vcmp.eq.s32.totalorder %v75, %v2061
    %vm2103 = vcmp.eq.s32.totalorder %v75, %v2065
    %vm2104 = vcmp.eq.s32.totalorder %v75, %v2069
    %vm2105 = vcmp.eq.s32.totalorder %v75, %v2073
    %v2106 = vmul.f32 %v1671, %v1670
    %v2108 = vlaneseq
    %v2109 = vshrl.u32 %v2108, 7
    %v2110 = vsub.s32 0, %v2109
    %v2111 = vrot.slane %v2106, %v2110
    %v2112 = vlaneseq
    %v2113 = vshrl.u32 %v2112, 7
    %v2114 = vsub.s32 1, %v2113
    %v2115 = vrot.slane %v2106, %v2114
    %v2116 = vlaneseq
    %v2117 = vshrl.u32 %v2116, 7
    %v2118 = vsub.s32 2, %v2117
    %v2119 = vrot.slane %v2106, %v2118
    %v2120 = vlaneseq
    %v2121 = vshrl.u32 %v2120, 7
    %v2122 = vsub.s32 3, %v2121
    %v2123 = vrot.slane %v2106, %v2122
    %v2128 = vsel %vm2074, %v2111, 0.0
    %v2129 = vsel %vm2075, %v2115, 0.0
    %v2130 = vsel %vm2076, %v2119, 0.0
    %v2131 = vsel %vm2077, %v2123, 0.0
    %v2132 = vsel %vm2078, %v2111, 0.0
    %v2133 = vsel %vm2079, %v2115, 0.0
    %v2134 = vsel %vm2080, %v2119, 0.0
    %v2135 = vsel %vm2081, %v2123, 0.0
    %v2136 = vsel %vm2082, %v2111, 0.0
    %v2137 = vsel %vm2083, %v2115, 0.0
    %v2138 = vsel %vm2084, %v2119, 0.0
    %v2139 = vsel %vm2085, %v2123, 0.0
    %v2140 = vsel %vm2086, %v2111, 0.0
    %v2141 = vsel %vm2087, %v2115, 0.0
    %v2142 = vsel %vm2088, %v2119, 0.0
    %v2143 = vsel %vm2089, %v2123, 0.0
    %v2144 = vsel %vm2090, %v2111, 0.0
    %v2145 = vsel %vm2091, %v2115, 0.0
    %v2146 = vsel %vm2092, %v2119, 0.0
    %v2147 = vsel %vm2093, %v2123, 0.0
    %v2148 = vsel %vm2094, %v2111, 0.0
    %v2149 = vsel %vm2095, %v2115, 0.0
    %v2150 = vsel %vm2096, %v2119, 0.0
    %v2151 = vsel %vm2097, %v2123, 0.0
    %v2152 = vsel %vm2098, %v2111, 0.0
    %v2153 = vsel %vm2099, %v2115, 0.0
    %v2154 = vsel %vm2100, %v2119, 0.0
    %v2155 = vsel %vm2101, %v2123, 0.0
    %v2156 = vsel %vm2102, %v2111, 0.0
    %v2157 = vsel %vm2103, %v2115, 0.0
    %v2158 = vsel %vm2104, %v2119, 0.0
    %v2159 = vsel %vm2105, %v2123, 0.0
    %v2160 = vadd.f32 %v2026, %v2128
    %v2161 = vadd.f32 %v2027, %v2129
    %v2162 = vadd.f32 %v2028, %v2130
    %v2163 = vadd.f32 %v2029, %v2131
    %v2164 = vadd.f32 %v2030, %v2132
    %v2165 = vadd.f32 %v2031, %v2133
    %v2166 = vadd.f32 %v2032, %v2134
    %v2167 = vadd.f32 %v2033, %v2135
    %v2168 = vadd.f32 %v2034, %v2136
    %v2169 = vadd.f32 %v2035, %v2137
    %v2170 = vadd.f32 %v2036, %v2138
    %v2171 = vadd.f32 %v2037, %v2139
    %v2172 = vadd.f32 %v2038, %v2140
    %v2173 = vadd.f32 %v2039, %v2141
    %v2174 = vadd.f32 %v2040, %v2142
    %v2175 = vadd.f32 %v2041, %v2143
    %v2176 = vadd.f32 %v2042, %v2144
    %v2177 = vadd.f32 %v2043, %v2145
    %v2178 = vadd.f32 %v2044, %v2146
    %v2179 = vadd.f32 %v2045, %v2147
    %v2180 = vadd.f32 %v2046, %v2148
    %v2181 = vadd.f32 %v2047, %v2149
    %v2182 = vadd.f32 %v2048, %v2150
    %v2183 = vadd.f32 %v2049, %v2151
    %v2184 = vadd.f32 %v2050, %v2152
    %v2185 = vadd.f32 %v2051, %v2153
    %v2186 = vadd.f32 %v2052, %v2154
    %v2187 = vadd.f32 %v2053, %v2155
    %v2188 = vadd.f32 %v2054, %v2156
    %v2189 = vadd.f32 %v2055, %v2157
    %v2190 = vadd.f32 %v2056, %v2158
    %v2191 = vadd.f32 %v2057, %v2159
    %v2192 = vmul.f32 %v36, 1.5
    %v2193 = vadd.f32 %v2192, 1.5
    %v2194 = vmax.f32 %v2193, 0.0
    %v2195 = vmin.f32 %v2194, 3.0
    %v2196 = vmul.f32 %v38, 1.5
    %v2197 = vadd.f32 %v2196, 1.5
    %v2198 = vmax.f32 %v2197, 0.0
    %v2199 = vmin.f32 %v2198, 3.0
    %v2200 = vfloor.f32 %v2195
    %v2201 = vfloor.f32 %v2199
    %v2202 = vsub.f32 %v2195, %v2200
    %v2203 = vsub.f32 %v2199, %v2201
    %v2204 = vsub.f32 1.0, %v2202
    %v2205 = vsub.f32 1.0, %v2203
    %v2206 = vcvt.f32.s32.to.zero.pseudo %v2200
    %v2207 = vcvt.f32.s32.to.zero.pseudo %v2201
    %v2208 = vadd.s32 %v2206, 1
    %vm2209 = vcmp.lt.s32.totalorder %v2208, 3
    %v2210 = vsel %vm2209, %v2208, 3
    %v2211 = vadd.s32 %v2207, 1
    %vm2212 = vcmp.lt.s32.totalorder %v2211, 3
    %v2213 = vsel %vm2212, %v2211, 3
    %v2214 = vmul.u32 %v2207, 4
    %v2215 = vadd.s32 %v2214, %v2206
    %v2216 = vadd.s32 %v2214, %v2210
    %v2217 = vmul.u32 %v2213, 4
    %v2218 = vadd.s32 %v2217, %v2206
    %v2219 = vadd.s32 %v2217, %v2210
    %v2220 = vlaneseq
    %v2221 = vshrl.u32 %v2220, 7
    %v2222 = vsub.s32 0, %v2221
    %v2223 = vrot.slane %v2215, %v2222
    %v2224 = vlaneseq
    %v2225 = vshrl.u32 %v2224, 7
    %v2226 = vsub.s32 1, %v2225
    %v2227 = vrot.slane %v2215, %v2226
    %v2228 = vlaneseq
    %v2229 = vshrl.u32 %v2228, 7
    %v2230 = vsub.s32 2, %v2229
    %v2231 = vrot.slane %v2215, %v2230
    %v2232 = vlaneseq
    %v2233 = vshrl.u32 %v2232, 7
    %v2234 = vsub.s32 3, %v2233
    %v2235 = vrot.slane %v2215, %v2234
    %vm2236 = vcmp.eq.s32.totalorder %v68, %v2223
    %vm2237 = vcmp.eq.s32.totalorder %v68, %v2227
    %vm2238 = vcmp.eq.s32.totalorder %v68, %v2231
    %vm2239 = vcmp.eq.s32.totalorder %v68, %v2235
    %vm2240 = vcmp.eq.s32.totalorder %v69, %v2223
    %vm2241 = vcmp.eq.s32.totalorder %v69, %v2227
    %vm2242 = vcmp.eq.s32.totalorder %v69, %v2231
    %vm2243 = vcmp.eq.s32.totalorder %v69, %v2235
    %v2244 = vmul.f32 %v2205, %v2204
    %v2246 = vlaneseq
    %v2247 = vshrl.u32 %v2246, 7
    %v2248 = vsub.s32 0, %v2247
    %v2249 = vrot.slane %v2244, %v2248
    %v2250 = vlaneseq
    %v2251 = vshrl.u32 %v2250, 7
    %v2252 = vsub.s32 1, %v2251
    %v2253 = vrot.slane %v2244, %v2252
    %v2254 = vlaneseq
    %v2255 = vshrl.u32 %v2254, 7
    %v2256 = vsub.s32 2, %v2255
    %v2257 = vrot.slane %v2244, %v2256
    %v2258 = vlaneseq
    %v2259 = vshrl.u32 %v2258, 7
    %v2260 = vsub.s32 3, %v2259
    %v2261 = vrot.slane %v2244, %v2260
    %v2266 = vsel %vm2236, %v2249, 0.0
    %v2267 = vsel %vm2237, %v2253, 0.0
    %v2268 = vsel %vm2238, %v2257, 0.0
    %v2269 = vsel %vm2239, %v2261, 0.0
    %v2270 = vsel %vm2240, %v2249, 0.0
    %v2271 = vsel %vm2241, %v2253, 0.0
    %v2272 = vsel %vm2242, %v2257, 0.0
    %v2273 = vsel %vm2243, %v2261, 0.0
    %v2274 = vlaneseq
    %v2275 = vshrl.u32 %v2274, 7
    %v2276 = vsub.s32 0, %v2275
    %v2277 = vrot.slane %v2216, %v2276
    %v2278 = vlaneseq
    %v2279 = vshrl.u32 %v2278, 7
    %v2280 = vsub.s32 1, %v2279
    %v2281 = vrot.slane %v2216, %v2280
    %v2282 = vlaneseq
    %v2283 = vshrl.u32 %v2282, 7
    %v2284 = vsub.s32 2, %v2283
    %v2285 = vrot.slane %v2216, %v2284
    %v2286 = vlaneseq
    %v2287 = vshrl.u32 %v2286, 7
    %v2288 = vsub.s32 3, %v2287
    %v2289 = vrot.slane %v2216, %v2288
    %vm2290 = vcmp.eq.s32.totalorder %v68, %v2277
    %vm2291 = vcmp.eq.s32.totalorder %v68, %v2281
    %vm2292 = vcmp.eq.s32.totalorder %v68, %v2285
    %vm2293 = vcmp.eq.s32.totalorder %v68, %v2289
    %vm2294 = vcmp.eq.s32.totalorder %v69, %v2277
    %vm2295 = vcmp.eq.s32.totalorder %v69, %v2281
    %vm2296 = vcmp.eq.s32.totalorder %v69, %v2285
    %vm2297 = vcmp.eq.s32.totalorder %v69, %v2289
    %v2298 = vmul.f32 %v2205, %v2202
    %v2300 = vlaneseq
    %v2301 = vshrl.u32 %v2300, 7
    %v2302 = vsub.s32 0, %v2301
    %v2303 = vrot.slane %v2298, %v2302
    %v2304 = vlaneseq
    %v2305 = vshrl.u32 %v2304, 7
    %v2306 = vsub.s32 1, %v2305
    %v2307 = vrot.slane %v2298, %v2306
    %v2308 = vlaneseq
    %v2309 = vshrl.u32 %v2308, 7
    %v2310 = vsub.s32 2, %v2309
    %v2311 = vrot.slane %v2298, %v2310
    %v2312 = vlaneseq
    %v2313 = vshrl.u32 %v2312, 7
    %v2314 = vsub.s32 3, %v2313
    %v2315 = vrot.slane %v2298, %v2314
    %v2320 = vsel %vm2290, %v2303, 0.0
    %v2321 = vsel %vm2291, %v2307, 0.0
    %v2322 = vsel %vm2292, %v2311, 0.0
    %v2323 = vsel %vm2293, %v2315, 0.0
    %v2324 = vsel %vm2294, %v2303, 0.0
    %v2325 = vsel %vm2295, %v2307, 0.0
    %v2326 = vsel %vm2296, %v2311, 0.0
    %v2327 = vsel %vm2297, %v2315, 0.0
    %v2328 = vadd.f32 %v2266, %v2320
    %v2329 = vadd.f32 %v2267, %v2321
    %v2330 = vadd.f32 %v2268, %v2322
    %v2331 = vadd.f32 %v2269, %v2323
    %v2332 = vadd.f32 %v2270, %v2324
    %v2333 = vadd.f32 %v2271, %v2325
    %v2334 = vadd.f32 %v2272, %v2326
    %v2335 = vadd.f32 %v2273, %v2327
    %v2336 = vlaneseq
    %v2337 = vshrl.u32 %v2336, 7
    %v2338 = vsub.s32 0, %v2337
    %v2339 = vrot.slane %v2218, %v2338
    %v2340 = vlaneseq
    %v2341 = vshrl.u32 %v2340, 7
    %v2342 = vsub.s32 1, %v2341
    %v2343 = vrot.slane %v2218, %v2342
    %v2344 = vlaneseq
    %v2345 = vshrl.u32 %v2344, 7
    %v2346 = vsub.s32 2, %v2345
    %v2347 = vrot.slane %v2218, %v2346
    %v2348 = vlaneseq
    %v2349 = vshrl.u32 %v2348, 7
    %v2350 = vsub.s32 3, %v2349
    %v2351 = vrot.slane %v2218, %v2350
    %vm2352 = vcmp.eq.s32.totalorder %v68, %v2339
    %vm2353 = vcmp.eq.s32.totalorder %v68, %v2343
    %vm2354 = vcmp.eq.s32.totalorder %v68, %v2347
    %vm2355 = vcmp.eq.s32.totalorder %v68, %v2351
    %vm2356 = vcmp.eq.s32.totalorder %v69, %v2339
    %vm2357 = vcmp.eq.s32.totalorder %v69, %v2343
    %vm2358 = vcmp.eq.s32.totalorder %v69, %v2347
    %vm2359 = vcmp.eq.s32.totalorder %v69, %v2351
    %v2360 = vmul.f32 %v2203, %v2204
    %v2362 = vlaneseq
    %v2363 = vshrl.u32 %v2362, 7
    %v2364 = vsub.s32 0, %v2363
    %v2365 = vrot.slane %v2360, %v2364
    %v2366 = vlaneseq
    %v2367 = vshrl.u32 %v2366, 7
    %v2368 = vsub.s32 1, %v2367
    %v2369 = vrot.slane %v2360, %v2368
    %v2370 = vlaneseq
    %v2371 = vshrl.u32 %v2370, 7
    %v2372 = vsub.s32 2, %v2371
    %v2373 = vrot.slane %v2360, %v2372
    %v2374 = vlaneseq
    %v2375 = vshrl.u32 %v2374, 7
    %v2376 = vsub.s32 3, %v2375
    %v2377 = vrot.slane %v2360, %v2376
    %v2382 = vsel %vm2352, %v2365, 0.0
    %v2383 = vsel %vm2353, %v2369, 0.0
    %v2384 = vsel %vm2354, %v2373, 0.0
    %v2385 = vsel %vm2355, %v2377, 0.0
    %v2386 = vsel %vm2356, %v2365, 0.0
    %v2387 = vsel %vm2357, %v2369, 0.0
    %v2388 = vsel %vm2358, %v2373, 0.0
    %v2389 = vsel %vm2359, %v2377, 0.0
    %v2390 = vadd.f32 %v2328, %v2382
    %v2391 = vadd.f32 %v2329, %v2383
    %v2392 = vadd.f32 %v2330, %v2384
    %v2393 = vadd.f32 %v2331, %v2385
    %v2394 = vadd.f32 %v2332, %v2386
    %v2395 = vadd.f32 %v2333, %v2387
    %v2396 = vadd.f32 %v2334, %v2388
    %v2397 = vadd.f32 %v2335, %v2389
    %v2398 = vlaneseq
    %v2399 = vshrl.u32 %v2398, 7
    %v2400 = vsub.s32 0, %v2399
    %v2401 = vrot.slane %v2219, %v2400
    %v2402 = vlaneseq
    %v2403 = vshrl.u32 %v2402, 7
    %v2404 = vsub.s32 1, %v2403
    %v2405 = vrot.slane %v2219, %v2404
    %v2406 = vlaneseq
    %v2407 = vshrl.u32 %v2406, 7
    %v2408 = vsub.s32 2, %v2407
    %v2409 = vrot.slane %v2219, %v2408
    %v2410 = vlaneseq
    %v2411 = vshrl.u32 %v2410, 7
    %v2412 = vsub.s32 3, %v2411
    %v2413 = vrot.slane %v2219, %v2412
    %vm2414 = vcmp.eq.s32.totalorder %v68, %v2401
    %vm2415 = vcmp.eq.s32.totalorder %v68, %v2405
    %vm2416 = vcmp.eq.s32.totalorder %v68, %v2409
    %vm2417 = vcmp.eq.s32.totalorder %v68, %v2413
    %vm2418 = vcmp.eq.s32.totalorder %v69, %v2401
    %vm2419 = vcmp.eq.s32.totalorder %v69, %v2405
    %vm2420 = vcmp.eq.s32.totalorder %v69, %v2409
    %vm2421 = vcmp.eq.s32.totalorder %v69, %v2413
    %v2422 = vmul.f32 %v2203, %v2202
    %v2424 = vlaneseq
    %v2425 = vshrl.u32 %v2424, 7
    %v2426 = vsub.s32 0, %v2425
    %v2427 = vrot.slane %v2422, %v2426
    %v2428 = vlaneseq
    %v2429 = vshrl.u32 %v2428, 7
    %v2430 = vsub.s32 1, %v2429
    %v2431 = vrot.slane %v2422, %v2430
    %v2432 = vlaneseq
    %v2433 = vshrl.u32 %v2432, 7
    %v2434 = vsub.s32 2, %v2433
    %v2435 = vrot.slane %v2422, %v2434
    %v2436 = vlaneseq
    %v2437 = vshrl.u32 %v2436, 7
    %v2438 = vsub.s32 3, %v2437
    %v2439 = vrot.slane %v2422, %v2438
    %v2444 = vsel %vm2414, %v2427, 0.0
    %v2445 = vsel %vm2415, %v2431, 0.0
    %v2446 = vsel %vm2416, %v2435, 0.0
    %v2447 = vsel %vm2417, %v2439, 0.0
    %v2448 = vsel %vm2418, %v2427, 0.0
    %v2449 = vsel %vm2419, %v2431, 0.0
    %v2450 = vsel %vm2420, %v2435, 0.0
    %v2451 = vsel %vm2421, %v2439, 0.0
    %v2452 = vadd.f32 %v2390, %v2444
    %v2453 = vadd.f32 %v2391, %v2445
    %v2454 = vadd.f32 %v2392, %v2446
    %v2455 = vadd.f32 %v2393, %v2447
    %v2456 = vadd.f32 %v2394, %v2448
    %v2457 = vadd.f32 %v2395, %v2449
    %v2458 = vadd.f32 %v2396, %v2450
    %v2459 = vadd.f32 %v2397, %v2451
    %v2460 = vmul.f32 %v36, 0.5
    %v2461 = vadd.f32 %v2460, 0.5
    %v2462 = vmax.f32 %v2461, 0.0
    %v2463 = vmin.f32 %v2462, 1.0
    %v2464 = vmul.f32 %v38, 0.5
    %v2465 = vadd.f32 %v2464, 0.5
    %v2466 = vmax.f32 %v2465, 0.0
    %v2467 = vmin.f32 %v2466, 1.0
    %v2468 = vfloor.f32 %v2463
    %v2469 = vfloor.f32 %v2467
    %v2470 = vsub.f32 %v2463, %v2468
    %v2471 = vsub.f32 %v2467, %v2469
    %v2472 = vsub.f32 1.0, %v2470
    %v2473 = vsub.f32 1.0, %v2471
    %v2474 = vcvt.f32.s32.to.zero.pseudo %v2468
    %v2475 = vcvt.f32.s32.to.zero.pseudo %v2469
    %v2476 = vadd.s32 %v2474, 1
    %vm2477 = vcmp.lt.s32.totalorder %v2476, 1
    %v2478 = vsel %vm2477, %v2476, 1
    %v2479 = vadd.s32 %v2475, 1
    %vm2480 = vcmp.lt.s32.totalorder %v2479, 1
    %v2481 = vsel %vm2480, %v2479, 1
    %v2482 = vmul.u32 %v2475, 2
    %v2483 = vadd.s32 %v2482, %v2474
    %v2484 = vadd.s32 %v2482, %v2478
    %v2485 = vmul.u32 %v2481, 2
    %v2486 = vadd.s32 %v2485, %v2474
    %v2487 = vadd.s32 %v2485, %v2478
    %v2488 = vlaneseq
    %v2489 = vshrl.u32 %v2488, 7
    %v2490 = vsub.s32 0, %v2489
    %v2491 = vrot.slane %v2483, %v2490
    %v2492 = vlaneseq
    %v2493 = vshrl.u32 %v2492, 7
    %v2494 = vsub.s32 1, %v2493
    %v2495 = vrot.slane %v2483, %v2494
    %v2496 = vlaneseq
    %v2497 = vshrl.u32 %v2496, 7
    %v2498 = vsub.s32 2, %v2497
    %v2499 = vrot.slane %v2483, %v2498
    %v2500 = vlaneseq
    %v2501 = vshrl.u32 %v2500, 7
    %v2502 = vsub.s32 3, %v2501
    %v2503 = vrot.slane %v2483, %v2502
    %vm2504 = vcmp.eq.s32.totalorder %v68, %v2491
    %vm2505 = vcmp.eq.s32.totalorder %v68, %v2495
    %vm2506 = vcmp.eq.s32.totalorder %v68, %v2499
    %vm2507 = vcmp.eq.s32.totalorder %v68, %v2503
    %v2508 = vmul.f32 %v2473, %v2472
    %v2510 = vlaneseq
    %v2511 = vshrl.u32 %v2510, 7
    %v2512 = vsub.s32 0, %v2511
    %v2513 = vrot.slane %v2508, %v2512
    %v2514 = vlaneseq
    %v2515 = vshrl.u32 %v2514, 7
    %v2516 = vsub.s32 1, %v2515
    %v2517 = vrot.slane %v2508, %v2516
    %v2518 = vlaneseq
    %v2519 = vshrl.u32 %v2518, 7
    %v2520 = vsub.s32 2, %v2519
    %v2521 = vrot.slane %v2508, %v2520
    %v2522 = vlaneseq
    %v2523 = vshrl.u32 %v2522, 7
    %v2524 = vsub.s32 3, %v2523
    %v2525 = vrot.slane %v2508, %v2524
    %v2530 = vsel %vm2504, %v2513, 0.0
    %v2531 = vsel %vm2505, %v2517, 0.0
    %v2532 = vsel %vm2506, %v2521, 0.0
    %v2533 = vsel %vm2507, %v2525, 0.0
    %v2534 = vlaneseq
    %v2535 = vshrl.u32 %v2534, 7
    %v2536 = vsub.s32 0, %v2535
    %v2537 = vrot.slane %v2484, %v2536
    %v2538 = vlaneseq
    %v2539 = vshrl.u32 %v2538, 7
    %v2540 = vsub.s32 1, %v2539
    %v2541 = vrot.slane %v2484, %v2540
    %v2542 = vlaneseq
    %v2543 = vshrl.u32 %v2542, 7
    %v2544 = vsub.s32 2, %v2543
    %v2545 = vrot.slane %v2484, %v2544
    %v2546 = vlaneseq
    %v2547 = vshrl.u32 %v2546, 7
    %v2548 = vsub.s32 3, %v2547
    %v2549 = vrot.slane %v2484, %v2548
    %vm2550 = vcmp.eq.s32.totalorder %v68, %v2537
    %vm2551 = vcmp.eq.s32.totalorder %v68, %v2541
    %vm2552 = vcmp.eq.s32.totalorder %v68, %v2545
    %vm2553 = vcmp.eq.s32.totalorder %v68, %v2549
    %v2554 = vmul.f32 %v2473, %v2470
    %v2556 = vlaneseq
    %v2557 = vshrl.u32 %v2556, 7
    %v2558 = vsub.s32 0, %v2557
    %v2559 = vrot.slane %v2554, %v2558
    %v2560 = vlaneseq
    %v2561 = vshrl.u32 %v2560, 7
    %v2562 = vsub.s32 1, %v2561
    %v2563 = vrot.slane %v2554, %v2562
    %v2564 = vlaneseq
    %v2565 = vshrl.u32 %v2564, 7
    %v2566 = vsub.s32 2, %v2565
    %v2567 = vrot.slane %v2554, %v2566
    %v2568 = vlaneseq
    %v2569 = vshrl.u32 %v2568, 7
    %v2570 = vsub.s32 3, %v2569
    %v2571 = vrot.slane %v2554, %v2570
    %v2576 = vsel %vm2550, %v2559, 0.0
    %v2577 = vsel %vm2551, %v2563, 0.0
    %v2578 = vsel %vm2552, %v2567, 0.0
    %v2579 = vsel %vm2553, %v2571, 0.0
    %v2580 = vadd.f32 %v2530, %v2576
    %v2581 = vadd.f32 %v2531, %v2577
    %v2582 = vadd.f32 %v2532, %v2578
    %v2583 = vadd.f32 %v2533, %v2579
    %v2584 = vlaneseq
    %v2585 = vshrl.u32 %v2584, 7
    %v2586 = vsub.s32 0, %v2585
    %v2587 = vrot.slane %v2486, %v2586
    %v2588 = vlaneseq
    %v2589 = vshrl.u32 %v2588, 7
    %v2590 = vsub.s32 1, %v2589
    %v2591 = vrot.slane %v2486, %v2590
    %v2592 = vlaneseq
    %v2593 = vshrl.u32 %v2592, 7
    %v2594 = vsub.s32 2, %v2593
    %v2595 = vrot.slane %v2486, %v2594
    %v2596 = vlaneseq
    %v2597 = vshrl.u32 %v2596, 7
    %v2598 = vsub.s32 3, %v2597
    %v2599 = vrot.slane %v2486, %v2598
    %vm2600 = vcmp.eq.s32.totalorder %v68, %v2587
    %vm2601 = vcmp.eq.s32.totalorder %v68, %v2591
    %vm2602 = vcmp.eq.s32.totalorder %v68, %v2595
    %vm2603 = vcmp.eq.s32.totalorder %v68, %v2599
    %v2604 = vmul.f32 %v2471, %v2472
    %v2606 = vlaneseq
    %v2607 = vshrl.u32 %v2606, 7
    %v2608 = vsub.s32 0, %v2607
    %v2609 = vrot.slane %v2604, %v2608
    %v2610 = vlaneseq
    %v2611 = vshrl.u32 %v2610, 7
    %v2612 = vsub.s32 1, %v2611
    %v2613 = vrot.slane %v2604, %v2612
    %v2614 = vlaneseq
    %v2615 = vshrl.u32 %v2614, 7
    %v2616 = vsub.s32 2, %v2615
    %v2617 = vrot.slane %v2604, %v2616
    %v2618 = vlaneseq
    %v2619 = vshrl.u32 %v2618, 7
    %v2620 = vsub.s32 3, %v2619
    %v2621 = vrot.slane %v2604, %v2620
    %v2626 = vsel %vm2600, %v2609, 0.0
    %v2627 = vsel %vm2601, %v2613, 0.0
    %v2628 = vsel %vm2602, %v2617, 0.0
    %v2629 = vsel %vm2603, %v2621, 0.0
    %v2630 = vadd.f32 %v2580, %v2626
    %v2631 = vadd.f32 %v2581, %v2627
    %v2632 = vadd.f32 %v2582, %v2628
    %v2633 = vadd.f32 %v2583, %v2629
    %v2634 = vlaneseq
    %v2635 = vshrl.u32 %v2634, 7
    %v2636 = vsub.s32 0, %v2635
    %v2637 = vrot.slane %v2487, %v2636
    %v2638 = vlaneseq
    %v2639 = vshrl.u32 %v2638, 7
    %v2640 = vsub.s32 1, %v2639
    %v2641 = vrot.slane %v2487, %v2640
    %v2642 = vlaneseq
    %v2643 = vshrl.u32 %v2642, 7
    %v2644 = vsub.s32 2, %v2643
    %v2645 = vrot.slane %v2487, %v2644
    %v2646 = vlaneseq
    %v2647 = vshrl.u32 %v2646, 7
    %v2648 = vsub.s32 3, %v2647
    %v2649 = vrot.slane %v2487, %v2648
    %vm2650 = vcmp.eq.s32.totalorder %v68, %v2637
    %vm2651 = vcmp.eq.s32.totalorder %v68, %v2641
    %vm2652 = vcmp.eq.s32.totalorder %v68, %v2645
    %vm2653 = vcmp.eq.s32.totalorder %v68, %v2649
    %v2654 = vmul.f32 %v2471, %v2470
    %v2656 = vlaneseq
    %v2657 = vshrl.u32 %v2656, 7
    %v2658 = vsub.s32 0, %v2657
    %v2659 = vrot.slane %v2654, %v2658
    %v2660 = vlaneseq
    %v2661 = vshrl.u32 %v2660, 7
    %v2662 = vsub.s32 1, %v2661
    %v2663 = vrot.slane %v2654, %v2662
    %v2664 = vlaneseq
    %v2665 = vshrl.u32 %v2664, 7
    %v2666 = vsub.s32 2, %v2665
    %v2667 = vrot.slane %v2654, %v2666
    %v2668 = vlaneseq
    %v2669 = vshrl.u32 %v2668, 7
    %v2670 = vsub.s32 3, %v2669
    %v2671 = vrot.slane %v2654, %v2670
    %v2676 = vsel %vm2650, %v2659, 0.0
    %v2677 = vsel %vm2651, %v2663, 0.0
    %v2678 = vsel %vm2652, %v2667, 0.0
    %v2679 = vsel %vm2653, %v2671, 0.0
    %v2680 = vadd.f32 %v2630, %v2676
    %v2681 = vadd.f32 %v2631, %v2677
    %v2682 = vadd.f32 %v2632, %v2678
    %v2683 = vadd.f32 %v2633, %v2679
    %v2684 = vld [vmem:[#allocation2] sm:$0xff]
    %v2685 = vld [vmem:[#allocation2 + $0x8] sm:$0xff]
    %v2686 = vld [vmem:[#allocation2 + $0x10] sm:$0xff]
    %vm2687 = vcmask 719872
    %v2689 = vsel %vm2687, %v2686, 0
    %2691 = vmatprep.subr.mxu0 %v1533
    %2692 = vmatpush1.msra.mxu0 %v1532
    %2693 = vmatprep.subr.mxu0 %v1537
    %2694 = vmatpush1.msra.mxu0 %v1536
    %2695 = vmatprep.subr.mxu0 %v1541
    %2696 = vmatpush1.msra.mxu0 %v1540
    %2697 = vmatprep.subr.mxu0 %v1545
    %2698 = vmatpush1.msra.mxu0 %v1544
    %2699 = vmatprep.subr.mxu0 %v1549
    %2700 = vmatpush1.msra.mxu0 %v1548
    %2701 = vmatprep.subr.mxu0 %v1553
    %2702 = vmatpush1.msra.mxu0 %v1552
    %2703 = vmatprep.subr.mxu0 %v1557
    %2704 = vmatpush1.msra.mxu0 %v1556
    %2705 = vmatprep.subr.mxu0 %v1561
    %2706 = vmatpush1.msra.mxu0 %v1560
    %2707 = vmatprep.subr.mxu0 %v1565
    %2708 = vmatpush1.msra.mxu0 %v1564
    %2709 = vmatprep.subr.mxu0 %v1569
    %2710 = vmatpush1.msra.mxu0 %v1568
    %2711 = vmatprep.subr.mxu0 %v1573
    %2712 = vmatpush1.msra.mxu0 %v1572
    %2713 = vmatprep.subr.mxu0 %v1577
    %2714 = vmatpush1.msra.mxu0 %v1576
    %2715 = vmatprep.subr.mxu0 %v1581
    %2716 = vmatpush1.msra.mxu0 %v1580
    %2717 = vmatprep.subr.mxu0 %v1585
    %2718 = vmatpush1.msra.mxu0 %v1584
    %2719 = vmatprep.subr.mxu0 %v1589
    %2720 = vmatpush1.msra.mxu0 %v1588
    %2721 = vmatprep.subr.mxu0 %v1593
    %2722 = vmatpush1.msra.mxu0 %v1592
    %2723 = vmatprep.subr.mxu0 %v1597
    %2724 = vmatpush1.msra.mxu0 %v1596
    %2725 = vmatprep.subr.mxu0 %v1601
    %2726 = vmatpush1.msra.mxu0 %v1600
    %2727 = vmatprep.subr.mxu0 %v1605
    %2728 = vmatpush1.msra.mxu0 %v1604
    %2729 = vmatprep.subr.mxu0 %v1609
    %2730 = vmatpush1.msra.mxu0 %v1608
    %2731 = vmatprep.subr.mxu0 %v1613
    %2732 = vmatpush1.msra.mxu0 %v1612
    %2733 = vmatprep.subr.mxu0 %v1617
    %2734 = vmatpush1.msra.mxu0 %v1616
    %2735 = vmatprep.subr.mxu0 %v1621
    %2736 = vmatpush1.msra.mxu0 %v1620
    %2737 = vmatprep.subr.mxu0 %v1625
    %2738 = vmatpush1.msra.mxu0 %v1624
    %2739 = vmatprep.subr.mxu0 %v1629
    %2740 = vmatpush1.msra.mxu0 %v1628
    %2741 = vmatprep.subr.mxu0 %v1633
    %2742 = vmatpush1.msra.mxu0 %v1632
    %2743 = vmatprep.subr.mxu0 %v1637
    %2744 = vmatpush1.msra.mxu0 %v1636
    %2745 = vmatprep.subr.mxu0 %v1641
    %2746 = vmatpush1.msra.mxu0 %v1640
    %2747 = vmatprep.subr.mxu0 %v1645
    %2748 = vmatpush1.msra.mxu0 %v1644
    %2749 = vmatprep.subr.mxu0 %v1649
    %2750 = vmatpush1.msra.mxu0 %v1648
    %2751 = vmatprep.subr.mxu0 %v1653
    %2752 = vmatpush1.msra.mxu0 %v1652
    %2753 = vmatprep.subr.mxu0 %v1657
    %2754 = vmatpush1.msra.mxu0 %v1656
    %2755 = vmatprep.mubr.f32.mxu0 %v2685
    %2756 = vmatmul.mubr.f32.gmra.mrb[0].mxu0 %v2684
    %v2757 = vpop.f32.mrb[0].mxu0
    %v2758 = vadd.f32 0.0, %v2757
    %v2759 = vpop.f32.mrb[0].mxu0
    %v2760 = vadd.f32 0.0, %v2759
    %2761 = vdwg.mxu0
    %2762 = vmatprep.subr.mxu0 %v2161
    %2763 = vmatpush1.msra.mxu0 %v2160
    %2764 = vmatprep.subr.mxu0 %v2165
    %2765 = vmatpush1.msra.mxu0 %v2164
    %2766 = vmatprep.subr.mxu0 %v2169
    %2767 = vmatpush1.msra.mxu0 %v2168
    %2768 = vmatprep.subr.mxu0 %v2173
    %2769 = vmatpush1.msra.mxu0 %v2172
    %2770 = vmatprep.subr.mxu0 %v2177
    %2771 = vmatpush1.msra.mxu0 %v2176
    %2772 = vmatprep.subr.mxu0 %v2181
    %2773 = vmatpush1.msra.mxu0 %v2180
    %2774 = vmatprep.subr.mxu0 %v2185
    %2775 = vmatpush1.msra.mxu0 %v2184
    %2776 = vmatprep.subr.mxu0 %v2189
    %2777 = vmatpush1.msra.mxu0 %v2188
    %2778 = vmatprep.subr.mxu0 %v2453
    %2779 = vmatpush1.msra.mxu0 %v2452
    %2780 = vmatprep.subr.mxu0 %v2457
    %2781 = vmatpush1.msra.mxu0 %v2456
    %2782 = vmatprep.subr.mxu0 %v2681
    %2783 = vmatpush1.msra.mxu0 %v2680
    %2784 = vmatprep.subr.mxu0 0.0
    %2785 = vmatpush1.msra.mxu0 0.0
    %2786 = vmatprep.subr.mxu0 0.0
    %2787 = vmatpush1.msra.mxu0 0.0
    %2788 = vmatprep.subr.mxu0 0.0
    %2789 = vmatpush1.msra.mxu0 0.0
    %2790 = vmatprep.subr.mxu0 0.0
    %2791 = vmatpush1.msra.mxu0 0.0
    %2792 = vmatprep.subr.mxu0 0.0
    %2793 = vmatpush1.msra.mxu0 0.0
    %2794 = vmatprep.subr.mxu0 0.0
    %2795 = vmatpush1.msra.mxu0 0.0
    %2796 = vmatprep.subr.mxu0 0.0
    %2797 = vmatpush1.msra.mxu0 0.0
    %2798 = vmatprep.subr.mxu0 0.0
    %2799 = vmatpush1.msra.mxu0 0.0
    %2800 = vmatprep.subr.mxu0 0.0
    %2801 = vmatpush1.msra.mxu0 0.0
    %2802 = vmatprep.subr.mxu0 0.0
    %2803 = vmatpush1.msra.mxu0 0.0
    %2804 = vmatprep.subr.mxu0 0.0
    %2805 = vmatpush1.msra.mxu0 0.0
    %2806 = vmatprep.subr.mxu0 0.0
    %2807 = vmatpush1.msra.mxu0 0.0
    %2808 = vmatprep.subr.mxu0 0.0
    %2809 = vmatpush1.msra.mxu0 0.0
    %2810 = vmatprep.subr.mxu0 0.0
    %2811 = vmatpush1.msra.mxu0 0.0
    %2812 = vmatprep.subr.mxu0 0.0
    %2813 = vmatpush1.msra.mxu0 0.0
    %2814 = vmatprep.subr.mxu0 0.0
    %2815 = vmatpush1.msra.mxu0 0.0
    %2816 = vmatprep.subr.mxu0 0.0
    %2817 = vmatpush1.msra.mxu0 0.0
    %2818 = vmatprep.subr.mxu0 0.0
    %2819 = vmatpush1.msra.mxu0 0.0
    %2820 = vmatprep.subr.mxu0 0.0
    %2821 = vmatpush1.msra.mxu0 0.0
    %2822 = vmatprep.subr.mxu0 0.0
    %2823 = vmatpush1.msra.mxu0 0.0
    %2824 = vmatprep.subr.mxu0 0.0
    %2825 = vmatpush1.msra.mxu0 0.0
    %2826 = vmatprep.mubr.f32.mxu0 0.0
    %2827 = vmatmul.mubr.f32.gmra.mrb[0].mxu0 %v2689
    %v2828 = vpop.f32.mrb[0].mxu0
    %v2829 = vadd.f32 %v2758, %v2828
    %v2830 = vpop.f32.mrb[0].mxu0
    %v2831 = vadd.f32 %v2760, %v2830
    %2832 = vdwg.mxu0
    %2833 = vmatprep.subr.mxu0 %v1535
    %2834 = vmatpush1.msra.mxu0 %v1534
    %2835 = vmatprep.subr.mxu0 %v1539
    %2836 = vmatpush1.msra.mxu0 %v1538
    %2837 = vmatprep.subr.mxu0 %v1543
    %2838 = vmatpush1.msra.mxu0 %v1542
    %2839 = vmatprep.subr.mxu0 %v1547
    %2840 = vmatpush1.msra.mxu0 %v1546
    %2841 = vmatprep.subr.mxu0 %v1551
    %2842 = vmatpush1.msra.mxu0 %v1550
    %2843 = vmatprep.subr.mxu0 %v1555
    %2844 = vmatpush1.msra.mxu0 %v1554
    %2845 = vmatprep.subr.mxu0 %v1559
    %2846 = vmatpush1.msra.mxu0 %v1558
    %2847 = vmatprep.subr.mxu0 %v1563
    %2848 = vmatpush1.msra.mxu0 %v1562
    %2849 = vmatprep.subr.mxu0 %v1567
    %2850 = vmatpush1.msra.mxu0 %v1566
    %2851 = vmatprep.subr.mxu0 %v1571
    %2852 = vmatpush1.msra.mxu0 %v1570
    %2853 = vmatprep.subr.mxu0 %v1575
    %2854 = vmatpush1.msra.mxu0 %v1574
    %2855 = vmatprep.subr.mxu0 %v1579
    %2856 = vmatpush1.msra.mxu0 %v1578
    %2857 = vmatprep.subr.mxu0 %v1583
    %2858 = vmatpush1.msra.mxu0 %v1582
    %2859 = vmatprep.subr.mxu0 %v1587
    %2860 = vmatpush1.msra.mxu0 %v1586
    %2861 = vmatprep.subr.mxu0 %v1591
    %2862 = vmatpush1.msra.mxu0 %v1590
    %2863 = vmatprep.subr.mxu0 %v1595
    %2864 = vmatpush1.msra.mxu0 %v1594
    %2865 = vmatprep.subr.mxu0 %v1599
    %2866 = vmatpush1.msra.mxu0 %v1598
    %2867 = vmatprep.subr.mxu0 %v1603
    %2868 = vmatpush1.msra.mxu0 %v1602
    %2869 = vmatprep.subr.mxu0 %v1607
    %2870 = vmatpush1.msra.mxu0 %v1606
    %2871 = vmatprep.subr.mxu0 %v1611
    %2872 = vmatpush1.msra.mxu0 %v1610
    %2873 = vmatprep.subr.mxu0 %v1615
    %2874 = vmatpush1.msra.mxu0 %v1614
    %2875 = vmatprep.subr.mxu0 %v1619
    %2876 = vmatpush1.msra.mxu0 %v1618
    %2877 = vmatprep.subr.mxu0 %v1623
    %2878 = vmatpush1.msra.mxu0 %v1622
    %2879 = vmatprep.subr.mxu0 %v1627
    %2880 = vmatpush1.msra.mxu0 %v1626
    %2881 = vmatprep.subr.mxu0 %v1631
    %2882 = vmatpush1.msra.mxu0 %v1630
    %2883 = vmatprep.subr.mxu0 %v1635
    %2884 = vmatpush1.msra.mxu0 %v1634
    %2885 = vmatprep.subr.mxu0 %v1639
    %2886 = vmatpush1.msra.mxu0 %v1638
    %2887 = vmatprep.subr.mxu0 %v1643
    %2888 = vmatpush1.msra.mxu0 %v1642
    %2889 = vmatprep.subr.mxu0 %v1647
    %2890 = vmatpush1.msra.mxu0 %v1646
    %2891 = vmatprep.subr.mxu0 %v1651
    %2892 = vmatpush1.msra.mxu0 %v1650
    %2893 = vmatprep.subr.mxu0 %v1655
    %2894 = vmatpush1.msra.mxu0 %v1654
    %2895 = vmatprep.subr.mxu0 %v1659
    %2896 = vmatpush1.msra.mxu0 %v1658
    %2897 = vmatprep.mubr.f32.mxu0 %v2685
    %2898 = vmatmul.mubr.f32.gmra.mrb[0].mxu0 %v2684
    %v2899 = vpop.f32.mrb[0].mxu0
    %v2900 = vadd.f32 0.0, %v2899
    %v2901 = vpop.f32.mrb[0].mxu0
    %v2902 = vadd.f32 0.0, %v2901
    %2903 = vdwg.mxu0
    %2904 = vmatprep.subr.mxu0 %v2163
    %2905 = vmatpush1.msra.mxu0 %v2162
    %2906 = vmatprep.subr.mxu0 %v2167
    %2907 = vmatpush1.msra.mxu0 %v2166
    %2908 = vmatprep.subr.mxu0 %v2171
    %2909 = vmatpush1.msra.mxu0 %v2170
    %2910 = vmatprep.subr.mxu0 %v2175
    %2911 = vmatpush1.msra.mxu0 %v2174
    %2912 = vmatprep.subr.mxu0 %v2179
    %2913 = vmatpush1.msra.mxu0 %v2178
    %2914 = vmatprep.subr.mxu0 %v2183
    %2915 = vmatpush1.msra.mxu0 %v2182
    %2916 = vmatprep.subr.mxu0 %v2187
    %2917 = vmatpush1.msra.mxu0 %v2186
    %2918 = vmatprep.subr.mxu0 %v2191
    %2919 = vmatpush1.msra.mxu0 %v2190
    %2920 = vmatprep.subr.mxu0 %v2455
    %2921 = vmatpush1.msra.mxu0 %v2454
    %2922 = vmatprep.subr.mxu0 %v2459
    %2923 = vmatpush1.msra.mxu0 %v2458
    %2924 = vmatprep.subr.mxu0 %v2683
    %2925 = vmatpush1.msra.mxu0 %v2682
    %2926 = vmatprep.subr.mxu0 0.0
    %2927 = vmatpush1.msra.mxu0 0.0
    %2928 = vmatprep.subr.mxu0 0.0
    %2929 = vmatpush1.msra.mxu0 0.0
    %2930 = vmatprep.subr.mxu0 0.0
    %2931 = vmatpush1.msra.mxu0 0.0
    %2932 = vmatprep.subr.mxu0 0.0
    %2933 = vmatpush1.msra.mxu0 0.0
    %2934 = vmatprep.subr.mxu0 0.0
    %2935 = vmatpush1.msra.mxu0 0.0
    %2936 = vmatprep.subr.mxu0 0.0
    %2937 = vmatpush1.msra.mxu0 0.0
    %2938 = vmatprep.subr.mxu0 0.0
    %2939 = vmatpush1.msra.mxu0 0.0
    %2940 = vmatprep.subr.mxu0 0.0
    %2941 = vmatpush1.msra.mxu0 0.0
    %2942 = vmatprep.subr.mxu0 0.0
    %2943 = vmatpush1.msra.mxu0 0.0
    %2944 = vmatprep.subr.mxu0 0.0
    %2945 = vmatpush1.msra.mxu0 0.0
    %2946 = vmatprep.subr.mxu0 0.0
    %2947 = vmatpush1.msra.mxu0 0.0
    %2948 = vmatprep.subr.mxu0 0.0
    %2949 = vmatpush1.msra.mxu0 0.0
    %2950 = vmatprep.subr.mxu0 0.0
    %2951 = vmatpush1.msra.mxu0 0.0
    %2952 = vmatprep.subr.mxu0 0.0
    %2953 = vmatpush1.msra.mxu0 0.0
    %2954 = vmatprep.subr.mxu0 0.0
    %2955 = vmatpush1.msra.mxu0 0.0
    %2956 = vmatprep.subr.mxu0 0.0
    %2957 = vmatpush1.msra.mxu0 0.0
    %2958 = vmatprep.subr.mxu0 0.0
    %2959 = vmatpush1.msra.mxu0 0.0
    %2960 = vmatprep.subr.mxu0 0.0
    %2961 = vmatpush1.msra.mxu0 0.0
    %2962 = vmatprep.subr.mxu0 0.0
    %2963 = vmatpush1.msra.mxu0 0.0
    %2964 = vmatprep.subr.mxu0 0.0
    %2965 = vmatpush1.msra.mxu0 0.0
    %2966 = vmatprep.subr.mxu0 0.0
    %2967 = vmatpush1.msra.mxu0 0.0
    %2968 = vmatprep.mubr.f32.mxu0 0.0
    %2969 = vmatmul.mubr.f32.gmra.mrb[0].mxu0 %v2689
    %v2970 = vpop.f32.mrb[0].mxu0
    %v2971 = vadd.f32 %v2900, %v2970
    %v2972 = vpop.f32.mrb[0].mxu0
    %v2973 = vadd.f32 %v2902, %v2972
    %2974 = vdwg.mxu0
    %2975 = vst [vmem:[#allocation7] sm:$0xff] %v2829
    %2976 = vst [vmem:[#allocation7 + $0x8] sm:$0xff] %v2831
    %2977 = vst [vmem:[#allocation7 + $0x10] sm:$0xff] %v2971
    %2978 = vst [vmem:[#allocation7 + $0x18] sm:$0xff] %v2973
    // Predicated region
    $region18: #{tpu_custom_call.1} parent=1 // pred_check
      _
    $region19: #{tpu_custom_call.1} parent=1 // pred_check_branch
      %2980 = sbr.rel (0) target = $region21
    $region20: #{tpu_custom_call.1} parent=1 // pred_region
      %s2982 = ssub.s32 512, 512
      %2983 = vsyncadd [#allocation4], %s2982
      %s2985 = sshll.u32 [#allocation7], 4
      %s2986 = int_to_ptr.vmem [resolvable:$true] %s2985
      %2988 = dma.vmem_to_hbm [thread:$0]  %s2986, 512, %s2, [#allocation4]
    $region21: #{tpu_custom_call.1} parent=1 // pred_fallthru
      _
    // Predicated region
    $region22: #{tpu_custom_call.1} parent=1 // pred_check
      _
    $region23: #{tpu_custom_call.1} parent=1 // pred_check_branch
      %2990 = sbr.rel (0) target = $region25
    $region24: #{tpu_custom_call.1} parent=1 // pred_region
      %2991 = dma.done [#allocation4], 512
    $region25: #{tpu_custom_call.1} parent=1 // pred_fallthru
      _
    %2992 = vsyncpa [#allocation3], 1
    %2993 = vsyncpa [#allocation6], 1
    %2994 = vsyncpa [#allocation4], 1

</llo_original>
